<compile_context>
chip_gen: v7x
topology: tpu7x:2x2x1
jax: 0.10.0
libtpu: 0.0.40
codegen_flags: <defaults>
</compile_context>

<pallas_src>
import jax
import jax.numpy as jnp
import numpy as np
from jax.experimental import pallas as pl
from jax.experimental.pallas import tpu as pltpu

HIDDEN = 256   # hidden_size (matches the PyTorch script)
VOCAB = 16     # input_size (vocabulary)
SEQ_LEN = 8    # number of encoder steps processed by one kernel launch


def encoder_gru_kernel(tok_ref, emb_ref, h0_ref, wih_ref, whh_ref,
                       bih_ref, bhh_ref, out_ref):
    """Runs the full S-step GRU recurrence in one kernel invocation.

    tok_ref : SMEM (S,)     int32 -- scalar-prefetched token ids
    emb_ref : VMEM (V, H)   f32   -- embedding table (resident)
    h0_ref  : VMEM (1, H)   f32   -- initial hidden state
    wih_ref : VMEM (H, 3H)  bf16  -- W_ih^T (input->gates)
    whh_ref : VMEM (H, 3H)  bf16  -- W_hh^T (hidden->gates)
    bih_ref : VMEM (1, 3H)  f32   -- b_ih
    bhh_ref : VMEM (1, 3H)  f32   -- b_hh
    out_ref : VMEM (S, H)   f32   -- per-step GRU outputs
    """
    V, H = emb_ref.shape
    S = out_ref.shape[0]

    # --- Embedding gather: all S rows once, off the sequential critical path.
    rows = []
    for i in range(S):
        tok = tok_ref[i]                                   # SMEM scalar read
        tok = jnp.minimum(jnp.maximum(tok, 0), V - 1)      # clamp: no OOB VMEM read
        rows.append(emb_ref[pl.ds(tok, 1), :])             # (1, H) dynamic row slice
    x = jnp.concatenate(rows, axis=0)                      # (S, H) f32

    # --- Input projection for ALL steps in one M=S matmul; fold b_ih here.
    gi_all = jnp.dot(x.astype(jnp.bfloat16), wih_ref[...],
                     preferred_element_type=jnp.float32) + bih_ref[...]  # (S, 3H) f32

    w_hh = whh_ref[...]                                    # (H, 3H) bf16, loaded once
    b_hh = bhh_ref[...]                                    # (1, 3H) f32, loaded once

    # --- Sequential recurrence, fully unrolled (S small & static).
    h = h0_ref[...]                                        # (1, H) f32
    outs = []
    for t in range(S):
        gi = gi_all[t:t + 1, :]                            # (1, 3H) static slice
        gh = jnp.dot(h.astype(jnp.bfloat16), w_hh,
                     preferred_element_type=jnp.float32) + b_hh
        r = jax.nn.sigmoid(gi[:, :H] + gh[:, :H])
        z = jax.nn.sigmoid(gi[:, H:2 * H] + gh[:, H:2 * H])
        n = jnp.tanh(gi[:, 2 * H:] + r * gh[:, 2 * H:])    # r*(W_hn h + b_hn)
        h = (1.0 - z) * n + z * h
        outs.append(h)

    # --- One unmasked full-tile (S, H) store (S=8 fills a sublane tile).
    out_ref[...] = jnp.concatenate(outs, axis=0)


def encoder_rnn_forward(tokens, hidden0, packed_params):
    """Applies EncoderRNN.forward over a token sequence in one kernel launch.

    tokens : (S,) int32 word indices
    hidden0: (1, 1, H) f32 initial hidden (EncoderRNN.initHidden())
    returns (outputs, hidden_new): outputs (S, 1, H) — the per-step GRU
    output — and the final hidden (1, 1, H) (== last output for 1-layer GRU).
    """
    emb, w_ih_t, w_hh_t, b_ih, b_hh = packed_params
    V, H = emb.shape
    S = int(tokens.shape[0])

    tok = jnp.asarray(tokens, dtype=jnp.int32).reshape((S,))
    h0 = hidden0.reshape(1, H).astype(jnp.float32)

    grid_spec = pltpu.PrefetchScalarGridSpec(
        num_scalar_prefetch=1,
        grid=(1,),                                              # single invocation
        in_specs=[
            pl.BlockSpec((V, H), lambda i, toks: (0, 0)),       # emb table (resident)
            pl.BlockSpec((1, H), lambda i, toks: (0, 0)),       # h0
            pl.BlockSpec((H, 3 * H), lambda i, toks: (0, 0)),   # W_ih^T bf16
            pl.BlockSpec((H, 3 * H), lambda i, toks: (0, 0)),   # W_hh^T bf16
            pl.BlockSpec((1, 3 * H), lambda i, toks: (0, 0)),   # b_ih
            pl.BlockSpec((1, 3 * H), lambda i, toks: (0, 0)),   # b_hh
        ],
        out_specs=pl.BlockSpec((S, H), lambda i, toks: (0, 0)), # full output block
    )

    outputs = pl.pallas_call(
        encoder_gru_kernel,
        out_shape=jax.ShapeDtypeStruct((S, H), jnp.float32),
        grid_spec=grid_spec,
        compiler_params=pltpu.CompilerParams(
            dimension_semantics=("arbitrary",)),
    )(tok, emb, h0, w_ih_t, w_hh_t, b_ih, b_hh)

    return outputs.reshape(S, 1, H), outputs[-1].reshape(1, 1, H)


def init_params(key, vocab, hidden):
    """Parameter init with shapes matching nn.Embedding + nn.GRU."""
    k_emb, k_wih, k_whh, k_bih, k_bhh = jax.random.split(key, 5)
    bound = 1.0 / np.sqrt(hidden)
    emb = jax.random.normal(k_emb, (vocab, hidden), dtype=jnp.float32)
    # torch stores weight_ih_l0 as (3H, H); keep it pre-transposed to (H, 3H).
    w_ih_t = jax.random.uniform(k_wih, (hidden, 3 * hidden), jnp.float32, -bound, bound)
    w_hh_t = jax.random.uniform(k_whh, (hidden, 3 * hidden), jnp.float32, -bound, bound)
    b_ih = jax.random.uniform(k_bih, (1, 3 * hidden), jnp.float32, -bound, bound)
    b_hh = jax.random.uniform(k_bhh, (1, 3 * hidden), jnp.float32, -bound, bound)
    return emb, w_ih_t, w_hh_t, b_ih, b_hh


def pack_params(params):
    """Casts weights to bf16 (MXU-native); embedding/biases stay f32."""
    emb, w_ih_t, w_hh_t, b_ih, b_hh = params
    return (emb.astype(jnp.float32),
            w_ih_t.astype(jnp.bfloat16),
            w_hh_t.astype(jnp.bfloat16),
            b_ih.astype(jnp.float32),
            b_hh.astype(jnp.float32))


def reference_forward(tokens, hidden0, params):
    """Pure-JAX reference of the same math (bf16 weights, f32 gate math)."""
    emb, w_ih_t, w_hh_t, b_ih, b_hh = params
    H = emb.shape[1]
    w_ih_bf = w_ih_t.astype(jnp.bfloat16)
    w_hh_bf = w_hh_t.astype(jnp.bfloat16)
    h = hidden0.reshape(1, H).astype(jnp.float32)
    outs = []
    for tok in np.asarray(tokens):
        x = emb[int(tok)][None, :]
        gi = jnp.dot(x.astype(jnp.bfloat16), w_ih_bf,
                     preferred_element_type=jnp.float32) + b_ih
        gh = jnp.dot(h.astype(jnp.bfloat16), w_hh_bf,
                     preferred_element_type=jnp.float32) + b_hh
        r = jax.nn.sigmoid(gi[:, :H] + gh[:, :H])
        z = jax.nn.sigmoid(gi[:, H:2 * H] + gh[:, H:2 * H])
        n = jnp.tanh(gi[:, 2 * H:] + r * gh[:, 2 * H:])
        h = (1.0 - z) * n + z * h
        outs.append(h)
    outputs = jnp.stack(outs, axis=0)            # (S, 1, H)
    return outputs, h.reshape(1, 1, H)


if __name__ == "__main__":
    key = jax.random.PRNGKey(0)
    k_params, k_tok = jax.random.split(key)

    params = init_params(k_params, VOCAB, HIDDEN)
    packed = pack_params(params)

    tokens = jax.random.randint(k_tok, (SEQ_LEN,), 0, VOCAB, dtype=jnp.int32)
    hidden0 = jnp.zeros((1, 1, HIDDEN), dtype=jnp.float32)   # EncoderRNN.initHidden()

    outs, hidden_final = encoder_rnn_forward(tokens, hidden0, packed)
    outs = jax.block_until_ready(outs)
    hidden_final = jax.block_until_ready(hidden_final)

    ref_outs, ref_hidden = reference_forward(tokens, hidden0, params)
    np.testing.assert_allclose(np.asarray(outs), np.asarray(ref_outs),
                               rtol=2e-3, atol=2e-3)
    np.testing.assert_allclose(np.asarray(hidden_final), np.asarray(ref_hidden),
                               rtol=2e-3, atol=2e-3)

    print("KERNEL_OK")
</pallas_src>

<mosaic_0001>
module attributes {stable_mosaic.version = 11 : i64} {
  func.func @encoder_gru_kernel(%arg0: i32, %arg1: memref<8xi32, #tpu.memory_space<smem>>, %arg2: memref<16x256xf32, #tpu.memory_space<vmem>>, %arg3: memref<1x256xf32, #tpu.memory_space<vmem>>, %arg4: memref<256x768xbf16, #tpu.memory_space<vmem>>, %arg5: memref<256x768xbf16, #tpu.memory_space<vmem>>, %arg6: memref<1x768xf32, #tpu.memory_space<vmem>>, %arg7: memref<1x768xf32, #tpu.memory_space<vmem>>, %arg8: memref<8x256xf32, #tpu.memory_space<vmem>>) attributes {dimension_semantics = [#tpu.dimension_semantics<arbitrary>], iteration_bounds = array<i64: 1>, scalar_prefetch = 1 : i64, scratch_operands = 0 : i64, tpu.core_type = #tpu.core_type<tc>, window_params = [{pipeline_mode = #tpu.pipeline_mode<synchronous>, transform_indices = @transform_0, window_bounds = array<i64: 16, 256>}, {pipeline_mode = #tpu.pipeline_mode<synchronous>, transform_indices = @transform_1, window_bounds = array<i64: 1, 256>}, {pipeline_mode = #tpu.pipeline_mode<synchronous>, transform_indices = @transform_2, window_bounds = array<i64: 256, 768>}, {pipeline_mode = #tpu.pipeline_mode<synchronous>, transform_indices = @transform_3, window_bounds = array<i64: 256, 768>}, {pipeline_mode = #tpu.pipeline_mode<synchronous>, transform_indices = @transform_4, window_bounds = array<i64: 1, 768>}, {pipeline_mode = #tpu.pipeline_mode<synchronous>, transform_indices = @transform_5, window_bounds = array<i64: 1, 768>}, {pipeline_mode = #tpu.pipeline_mode<synchronous>, transform_indices = @transform_6, window_bounds = array<i64: 8, 256>}]} {
    %c0 = arith.constant 0 : index
    %0 = memref.load %arg1[%c0] : memref<8xi32, #tpu.memory_space<smem>>
    %c0_i32 = arith.constant 0 : i32
    %1 = arith.maxsi %0, %c0_i32 : i32
    %c15_i32 = arith.constant 15 : i32
    %2 = arith.minsi %1, %c15_i32 : i32
    %3 = arith.index_cast %2 : i32 to index
    %c0_0 = arith.constant 0 : index
    %4 = vector.load %arg2[%3, %c0_0] : memref<16x256xf32, #tpu.memory_space<vmem>>, vector<1x256xf32>
    %c1 = arith.constant 1 : index
    %5 = memref.load %arg1[%c1] : memref<8xi32, #tpu.memory_space<smem>>
    %c0_i32_1 = arith.constant 0 : i32
    %6 = arith.maxsi %5, %c0_i32_1 : i32
    %c15_i32_2 = arith.constant 15 : i32
    %7 = arith.minsi %6, %c15_i32_2 : i32
    %8 = arith.index_cast %7 : i32 to index
    %c0_3 = arith.constant 0 : index
    %9 = vector.load %arg2[%8, %c0_3] : memref<16x256xf32, #tpu.memory_space<vmem>>, vector<1x256xf32>
    %c2 = arith.constant 2 : index
    %10 = memref.load %arg1[%c2] : memref<8xi32, #tpu.memory_space<smem>>
    %c0_i32_4 = arith.constant 0 : i32
    %11 = arith.maxsi %10, %c0_i32_4 : i32
    %c15_i32_5 = arith.constant 15 : i32
    %12 = arith.minsi %11, %c15_i32_5 : i32
    %13 = arith.index_cast %12 : i32 to index
    %c0_6 = arith.constant 0 : index
    %14 = vector.load %arg2[%13, %c0_6] : memref<16x256xf32, #tpu.memory_space<vmem>>, vector<1x256xf32>
    %c3 = arith.constant 3 : index
    %15 = memref.load %arg1[%c3] : memref<8xi32, #tpu.memory_space<smem>>
    %c0_i32_7 = arith.constant 0 : i32
    %16 = arith.maxsi %15, %c0_i32_7 : i32
    %c15_i32_8 = arith.constant 15 : i32
    %17 = arith.minsi %16, %c15_i32_8 : i32
    %18 = arith.index_cast %17 : i32 to index
    %c0_9 = arith.constant 0 : index
    %19 = vector.load %arg2[%18, %c0_9] : memref<16x256xf32, #tpu.memory_space<vmem>>, vector<1x256xf32>
    %c4 = arith.constant 4 : index
    %20 = memref.load %arg1[%c4] : memref<8xi32, #tpu.memory_space<smem>>
    %c0_i32_10 = arith.constant 0 : i32
    %21 = arith.maxsi %20, %c0_i32_10 : i32
    %c15_i32_11 = arith.constant 15 : i32
    %22 = arith.minsi %21, %c15_i32_11 : i32
    %23 = arith.index_cast %22 : i32 to index
    %c0_12 = arith.constant 0 : index
    %24 = vector.load %arg2[%23, %c0_12] : memref<16x256xf32, #tpu.memory_space<vmem>>, vector<1x256xf32>
    %c5 = arith.constant 5 : index
    %25 = memref.load %arg1[%c5] : memref<8xi32, #tpu.memory_space<smem>>
    %c0_i32_13 = arith.constant 0 : i32
    %26 = arith.maxsi %25, %c0_i32_13 : i32
    %c15_i32_14 = arith.constant 15 : i32
    %27 = arith.minsi %26, %c15_i32_14 : i32
    %28 = arith.index_cast %27 : i32 to index
    %c0_15 = arith.constant 0 : index
    %29 = vector.load %arg2[%28, %c0_15] : memref<16x256xf32, #tpu.memory_space<vmem>>, vector<1x256xf32>
    %c6 = arith.constant 6 : index
    %30 = memref.load %arg1[%c6] : memref<8xi32, #tpu.memory_space<smem>>
    %c0_i32_16 = arith.constant 0 : i32
    %31 = arith.maxsi %30, %c0_i32_16 : i32
    %c15_i32_17 = arith.constant 15 : i32
    %32 = arith.minsi %31, %c15_i32_17 : i32
    %33 = arith.index_cast %32 : i32 to index
    %c0_18 = arith.constant 0 : index
    %34 = vector.load %arg2[%33, %c0_18] : memref<16x256xf32, #tpu.memory_space<vmem>>, vector<1x256xf32>
    %c7 = arith.constant 7 : index
    %35 = memref.load %arg1[%c7] : memref<8xi32, #tpu.memory_space<smem>>
    %c0_i32_19 = arith.constant 0 : i32
    %36 = arith.maxsi %35, %c0_i32_19 : i32
    %c15_i32_20 = arith.constant 15 : i32
    %37 = arith.minsi %36, %c15_i32_20 : i32
    %38 = arith.index_cast %37 : i32 to index
    %c0_21 = arith.constant 0 : index
    %39 = vector.load %arg2[%38, %c0_21] : memref<16x256xf32, #tpu.memory_space<vmem>>, vector<1x256xf32>
    %40 = tpu.concatenate %4, %9, %14, %19, %24, %29, %34, %39 in 0 : vector<1x256xf32>, vector<1x256xf32>, vector<1x256xf32>, vector<1x256xf32>, vector<1x256xf32>, vector<1x256xf32>, vector<1x256xf32>, vector<1x256xf32> -> vector<8x256xf32>
    %41 = arith.truncf %40 : vector<8x256xf32> to vector<8x256xbf16>
    %c0_22 = arith.constant 0 : index
    %c0_23 = arith.constant 0 : index
    %42 = vector.load %arg4[%c0_22, %c0_23] : memref<256x768xbf16, #tpu.memory_space<vmem>>, vector<256x768xbf16>
    %cst = arith.constant dense<0.000000e+00> : vector<8x768xf32>
    %43 = tpu.matmul %41, %42, %cst {dimension_numbers = #tpu.dot_dimension_numbers<[1], [0], [0], [1], [0, 0, 1, 1], [], []>} : vector<8x256xbf16>, vector<256x768xbf16>, vector<8x768xf32> -> vector<8x768xf32>
    %c0_24 = arith.constant 0 : index
    %c0_25 = arith.constant 0 : index
    %44 = vector.load %arg6[%c0_24, %c0_25] : memref<1x768xf32, #tpu.memory_space<vmem>>, vector<1x768xf32>
    %45 = vector.broadcast %44 : vector<1x768xf32> to vector<8x768xf32>
    %46 = arith.addf %43, %45 : vector<8x768xf32>
    %c0_26 = arith.constant 0 : index
    %c0_27 = arith.constant 0 : index
    %47 = vector.load %arg5[%c0_26, %c0_27] : memref<256x768xbf16, #tpu.memory_space<vmem>>, vector<256x768xbf16>
    %c0_28 = arith.constant 0 : index
    %c0_29 = arith.constant 0 : index
    %48 = vector.load %arg7[%c0_28, %c0_29] : memref<1x768xf32, #tpu.memory_space<vmem>>, vector<1x768xf32>
    %c0_30 = arith.constant 0 : index
    %c0_31 = arith.constant 0 : index
    %49 = vector.load %arg3[%c0_30, %c0_31] : memref<1x256xf32, #tpu.memory_space<vmem>>, vector<1x256xf32>
    %50 = vector.extract_strided_slice %46 {offsets = [0, 0], sizes = [1, 768], strides = [1, 1]} : vector<8x768xf32> to vector<1x768xf32>
    %51 = arith.truncf %49 : vector<1x256xf32> to vector<1x256xbf16>
    %cst_32 = arith.constant dense<0.000000e+00> : vector<1x768xf32>
    %52 = tpu.matmul %51, %47, %cst_32 {dimension_numbers = #tpu.dot_dimension_numbers<[1], [0], [0], [1], [0, 0, 1, 1], [], []>} : vector<1x256xbf16>, vector<256x768xbf16>, vector<1x768xf32> -> vector<1x768xf32>
    %53 = arith.addf %52, %48 : vector<1x768xf32>
    %54 = vector.extract_strided_slice %50 {offsets = [0, 0], sizes = [1, 256], strides = [1, 1]} : vector<1x768xf32> to vector<1x256xf32>
    %55 = vector.extract_strided_slice %53 {offsets = [0, 0], sizes = [1, 256], strides = [1, 1]} : vector<1x768xf32> to vector<1x256xf32>
    %56 = arith.addf %54, %55 : vector<1x256xf32>
    %57 = arith.negf %56 : vector<1x256xf32>
    %58 = math.exp %57 : vector<1x256xf32>
    %cst_33 = arith.constant 1.000000e+00 : f32
    %59 = vector.broadcast %cst_33 : f32 to vector<1x256xf32>
    %60 = arith.addf %59, %58 : vector<1x256xf32>
    %61 = arith.divf %59, %60 : vector<1x256xf32>
    %62 = vector.extract_strided_slice %50 {offsets = [0, 256], sizes = [1, 256], strides = [1, 1]} : vector<1x768xf32> to vector<1x256xf32>
    %63 = vector.extract_strided_slice %53 {offsets = [0, 256], sizes = [1, 256], strides = [1, 1]} : vector<1x768xf32> to vector<1x256xf32>
    %64 = arith.addf %62, %63 : vector<1x256xf32>
    %65 = arith.negf %64 : vector<1x256xf32>
    %66 = math.exp %65 : vector<1x256xf32>
    %cst_34 = arith.constant 1.000000e+00 : f32
    %67 = vector.broadcast %cst_34 : f32 to vector<1x256xf32>
    %68 = arith.addf %67, %66 : vector<1x256xf32>
    %69 = arith.divf %67, %68 : vector<1x256xf32>
    %70 = vector.extract_strided_slice %50 {offsets = [0, 512], sizes = [1, 256], strides = [1, 1]} : vector<1x768xf32> to vector<1x256xf32>
    %71 = vector.extract_strided_slice %53 {offsets = [0, 512], sizes = [1, 256], strides = [1, 1]} : vector<1x768xf32> to vector<1x256xf32>
    %72 = arith.mulf %61, %71 : vector<1x256xf32>
    %73 = arith.addf %70, %72 : vector<1x256xf32>
    %74 = math.tanh %73 : vector<1x256xf32>
    %cst_35 = arith.constant 1.000000e+00 : f32
    %75 = vector.broadcast %cst_35 : f32 to vector<1x256xf32>
    %76 = arith.subf %75, %69 : vector<1x256xf32>
    %77 = arith.mulf %76, %74 : vector<1x256xf32>
    %78 = arith.mulf %69, %49 : vector<1x256xf32>
    %79 = arith.addf %77, %78 : vector<1x256xf32>
    %80 = vector.extract_strided_slice %46 {offsets = [1, 0], sizes = [1, 768], strides = [1, 1]} : vector<8x768xf32> to vector<1x768xf32>
    %81 = arith.truncf %79 : vector<1x256xf32> to vector<1x256xbf16>
    %cst_36 = arith.constant dense<0.000000e+00> : vector<1x768xf32>
    %82 = tpu.matmul %81, %47, %cst_36 {dimension_numbers = #tpu.dot_dimension_numbers<[1], [0], [0], [1], [0, 0, 1, 1], [], []>} : vector<1x256xbf16>, vector<256x768xbf16>, vector<1x768xf32> -> vector<1x768xf32>
    %83 = arith.addf %82, %48 : vector<1x768xf32>
    %84 = vector.extract_strided_slice %80 {offsets = [0, 0], sizes = [1, 256], strides = [1, 1]} : vector<1x768xf32> to vector<1x256xf32>
    %85 = vector.extract_strided_slice %83 {offsets = [0, 0], sizes = [1, 256], strides = [1, 1]} : vector<1x768xf32> to vector<1x256xf32>
    %86 = arith.addf %84, %85 : vector<1x256xf32>
    %87 = arith.negf %86 : vector<1x256xf32>
    %88 = math.exp %87 : vector<1x256xf32>
    %cst_37 = arith.constant 1.000000e+00 : f32
    %89 = vector.broadcast %cst_37 : f32 to vector<1x256xf32>
    %90 = arith.addf %89, %88 : vector<1x256xf32>
    %91 = arith.divf %89, %90 : vector<1x256xf32>
    %92 = vector.extract_strided_slice %80 {offsets = [0, 256], sizes = [1, 256], strides = [1, 1]} : vector<1x768xf32> to vector<1x256xf32>
    %93 = vector.extract_strided_slice %83 {offsets = [0, 256], sizes = [1, 256], strides = [1, 1]} : vector<1x768xf32> to vector<1x256xf32>
    %94 = arith.addf %92, %93 : vector<1x256xf32>
    %95 = arith.negf %94 : vector<1x256xf32>
    %96 = math.exp %95 : vector<1x256xf32>
    %cst_38 = arith.constant 1.000000e+00 : f32
    %97 = vector.broadcast %cst_38 : f32 to vector<1x256xf32>
    %98 = arith.addf %97, %96 : vector<1x256xf32>
    %99 = arith.divf %97, %98 : vector<1x256xf32>
    %100 = vector.extract_strided_slice %80 {offsets = [0, 512], sizes = [1, 256], strides = [1, 1]} : vector<1x768xf32> to vector<1x256xf32>
    %101 = vector.extract_strided_slice %83 {offsets = [0, 512], sizes = [1, 256], strides = [1, 1]} : vector<1x768xf32> to vector<1x256xf32>
    %102 = arith.mulf %91, %101 : vector<1x256xf32>
    %103 = arith.addf %100, %102 : vector<1x256xf32>
    %104 = math.tanh %103 : vector<1x256xf32>
    %cst_39 = arith.constant 1.000000e+00 : f32
    %105 = vector.broadcast %cst_39 : f32 to vector<1x256xf32>
    %106 = arith.subf %105, %99 : vector<1x256xf32>
    %107 = arith.mulf %106, %104 : vector<1x256xf32>
    %108 = arith.mulf %99, %79 : vector<1x256xf32>
    %109 = arith.addf %107, %108 : vector<1x256xf32>
    %110 = vector.extract_strided_slice %46 {offsets = [2, 0], sizes = [1, 768], strides = [1, 1]} : vector<8x768xf32> to vector<1x768xf32>
    %111 = arith.truncf %109 : vector<1x256xf32> to vector<1x256xbf16>
    %cst_40 = arith.constant dense<0.000000e+00> : vector<1x768xf32>
    %112 = tpu.matmul %111, %47, %cst_40 {dimension_numbers = #tpu.dot_dimension_numbers<[1], [0], [0], [1], [0, 0, 1, 1], [], []>} : vector<1x256xbf16>, vector<256x768xbf16>, vector<1x768xf32> -> vector<1x768xf32>
    %113 = arith.addf %112, %48 : vector<1x768xf32>
    %114 = vector.extract_strided_slice %110 {offsets = [0, 0], sizes = [1, 256], strides = [1, 1]} : vector<1x768xf32> to vector<1x256xf32>
    %115 = vector.extract_strided_slice %113 {offsets = [0, 0], sizes = [1, 256], strides = [1, 1]} : vector<1x768xf32> to vector<1x256xf32>
    %116 = arith.addf %114, %115 : vector<1x256xf32>
    %117 = arith.negf %116 : vector<1x256xf32>
    %118 = math.exp %117 : vector<1x256xf32>
    %cst_41 = arith.constant 1.000000e+00 : f32
    %119 = vector.broadcast %cst_41 : f32 to vector<1x256xf32>
    %120 = arith.addf %119, %118 : vector<1x256xf32>
    %121 = arith.divf %119, %120 : vector<1x256xf32>
    %122 = vector.extract_strided_slice %110 {offsets = [0, 256], sizes = [1, 256], strides = [1, 1]} : vector<1x768xf32> to vector<1x256xf32>
    %123 = vector.extract_strided_slice %113 {offsets = [0, 256], sizes = [1, 256], strides = [1, 1]} : vector<1x768xf32> to vector<1x256xf32>
    %124 = arith.addf %122, %123 : vector<1x256xf32>
    %125 = arith.negf %124 : vector<1x256xf32>
    %126 = math.exp %125 : vector<1x256xf32>
    %cst_42 = arith.constant 1.000000e+00 : f32
    %127 = vector.broadcast %cst_42 : f32 to vector<1x256xf32>
    %128 = arith.addf %127, %126 : vector<1x256xf32>
    %129 = arith.divf %127, %128 : vector<1x256xf32>
    %130 = vector.extract_strided_slice %110 {offsets = [0, 512], sizes = [1, 256], strides = [1, 1]} : vector<1x768xf32> to vector<1x256xf32>
    %131 = vector.extract_strided_slice %113 {offsets = [0, 512], sizes = [1, 256], strides = [1, 1]} : vector<1x768xf32> to vector<1x256xf32>
    %132 = arith.mulf %121, %131 : vector<1x256xf32>
    %133 = arith.addf %130, %132 : vector<1x256xf32>
    %134 = math.tanh %133 : vector<1x256xf32>
    %cst_43 = arith.constant 1.000000e+00 : f32
    %135 = vector.broadcast %cst_43 : f32 to vector<1x256xf32>
    %136 = arith.subf %135, %129 : vector<1x256xf32>
    %137 = arith.mulf %136, %134 : vector<1x256xf32>
    %138 = arith.mulf %129, %109 : vector<1x256xf32>
    %139 = arith.addf %137, %138 : vector<1x256xf32>
    %140 = vector.extract_strided_slice %46 {offsets = [3, 0], sizes = [1, 768], strides = [1, 1]} : vector<8x768xf32> to vector<1x768xf32>
    %141 = arith.truncf %139 : vector<1x256xf32> to vector<1x256xbf16>
    %cst_44 = arith.constant dense<0.000000e+00> : vector<1x768xf32>
    %142 = tpu.matmul %141, %47, %cst_44 {dimension_numbers = #tpu.dot_dimension_numbers<[1], [0], [0], [1], [0, 0, 1, 1], [], []>} : vector<1x256xbf16>, vector<256x768xbf16>, vector<1x768xf32> -> vector<1x768xf32>
    %143 = arith.addf %142, %48 : vector<1x768xf32>
    %144 = vector.extract_strided_slice %140 {offsets = [0, 0], sizes = [1, 256], strides = [1, 1]} : vector<1x768xf32> to vector<1x256xf32>
    %145 = vector.extract_strided_slice %143 {offsets = [0, 0], sizes = [1, 256], strides = [1, 1]} : vector<1x768xf32> to vector<1x256xf32>
    %146 = arith.addf %144, %145 : vector<1x256xf32>
    %147 = arith.negf %146 : vector<1x256xf32>
    %148 = math.exp %147 : vector<1x256xf32>
    %cst_45 = arith.constant 1.000000e+00 : f32
    %149 = vector.broadcast %cst_45 : f32 to vector<1x256xf32>
    %150 = arith.addf %149, %148 : vector<1x256xf32>
    %151 = arith.divf %149, %150 : vector<1x256xf32>
    %152 = vector.extract_strided_slice %140 {offsets = [0, 256], sizes = [1, 256], strides = [1, 1]} : vector<1x768xf32> to vector<1x256xf32>
    %153 = vector.extract_strided_slice %143 {offsets = [0, 256], sizes = [1, 256], strides = [1, 1]} : vector<1x768xf32> to vector<1x256xf32>
    %154 = arith.addf %152, %153 : vector<1x256xf32>
    %155 = arith.negf %154 : vector<1x256xf32>
    %156 = math.exp %155 : vector<1x256xf32>
    %cst_46 = arith.constant 1.000000e+00 : f32
    %157 = vector.broadcast %cst_46 : f32 to vector<1x256xf32>
    %158 = arith.addf %157, %156 : vector<1x256xf32>
    %159 = arith.divf %157, %158 : vector<1x256xf32>
    %160 = vector.extract_strided_slice %140 {offsets = [0, 512], sizes = [1, 256], strides = [1, 1]} : vector<1x768xf32> to vector<1x256xf32>
    %161 = vector.extract_strided_slice %143 {offsets = [0, 512], sizes = [1, 256], strides = [1, 1]} : vector<1x768xf32> to vector<1x256xf32>
    %162 = arith.mulf %151, %161 : vector<1x256xf32>
    %163 = arith.addf %160, %162 : vector<1x256xf32>
    %164 = math.tanh %163 : vector<1x256xf32>
    %cst_47 = arith.constant 1.000000e+00 : f32
    %165 = vector.broadcast %cst_47 : f32 to vector<1x256xf32>
    %166 = arith.subf %165, %159 : vector<1x256xf32>
    %167 = arith.mulf %166, %164 : vector<1x256xf32>
    %168 = arith.mulf %159, %139 : vector<1x256xf32>
    %169 = arith.addf %167, %168 : vector<1x256xf32>
    %170 = vector.extract_strided_slice %46 {offsets = [4, 0], sizes = [1, 768], strides = [1, 1]} : vector<8x768xf32> to vector<1x768xf32>
    %171 = arith.truncf %169 : vector<1x256xf32> to vector<1x256xbf16>
    %cst_48 = arith.constant dense<0.000000e+00> : vector<1x768xf32>
    %172 = tpu.matmul %171, %47, %cst_48 {dimension_numbers = #tpu.dot_dimension_numbers<[1], [0], [0], [1], [0, 0, 1, 1], [], []>} : vector<1x256xbf16>, vector<256x768xbf16>, vector<1x768xf32> -> vector<1x768xf32>
    %173 = arith.addf %172, %48 : vector<1x768xf32>
    %174 = vector.extract_strided_slice %170 {offsets = [0, 0], sizes = [1, 256], strides = [1, 1]} : vector<1x768xf32> to vector<1x256xf32>
    %175 = vector.extract_strided_slice %173 {offsets = [0, 0], sizes = [1, 256], strides = [1, 1]} : vector<1x768xf32> to vector<1x256xf32>
    %176 = arith.addf %174, %175 : vector<1x256xf32>
    %177 = arith.negf %176 : vector<1x256xf32>
    %178 = math.exp %177 : vector<1x256xf32>
    %cst_49 = arith.constant 1.000000e+00 : f32
    %179 = vector.broadcast %cst_49 : f32 to vector<1x256xf32>
    %180 = arith.addf %179, %178 : vector<1x256xf32>
    %181 = arith.divf %179, %180 : vector<1x256xf32>
    %182 = vector.extract_strided_slice %170 {offsets = [0, 256], sizes = [1, 256], strides = [1, 1]} : vector<1x768xf32> to vector<1x256xf32>
    %183 = vector.extract_strided_slice %173 {offsets = [0, 256], sizes = [1, 256], strides = [1, 1]} : vector<1x768xf32> to vector<1x256xf32>
    %184 = arith.addf %182, %183 : vector<1x256xf32>
    %185 = arith.negf %184 : vector<1x256xf32>
    %186 = math.exp %185 : vector<1x256xf32>
    %cst_50 = arith.constant 1.000000e+00 : f32
    %187 = vector.broadcast %cst_50 : f32 to vector<1x256xf32>
    %188 = arith.addf %187, %186 : vector<1x256xf32>
    %189 = arith.divf %187, %188 : vector<1x256xf32>
    %190 = vector.extract_strided_slice %170 {offsets = [0, 512], sizes = [1, 256], strides = [1, 1]} : vector<1x768xf32> to vector<1x256xf32>
    %191 = vector.extract_strided_slice %173 {offsets = [0, 512], sizes = [1, 256], strides = [1, 1]} : vector<1x768xf32> to vector<1x256xf32>
    %192 = arith.mulf %181, %191 : vector<1x256xf32>
    %193 = arith.addf %190, %192 : vector<1x256xf32>
    %194 = math.tanh %193 : vector<1x256xf32>
    %cst_51 = arith.constant 1.000000e+00 : f32
    %195 = vector.broadcast %cst_51 : f32 to vector<1x256xf32>
    %196 = arith.subf %195, %189 : vector<1x256xf32>
    %197 = arith.mulf %196, %194 : vector<1x256xf32>
    %198 = arith.mulf %189, %169 : vector<1x256xf32>
    %199 = arith.addf %197, %198 : vector<1x256xf32>
    %200 = vector.extract_strided_slice %46 {offsets = [5, 0], sizes = [1, 768], strides = [1, 1]} : vector<8x768xf32> to vector<1x768xf32>
    %201 = arith.truncf %199 : vector<1x256xf32> to vector<1x256xbf16>
    %cst_52 = arith.constant dense<0.000000e+00> : vector<1x768xf32>
    %202 = tpu.matmul %201, %47, %cst_52 {dimension_numbers = #tpu.dot_dimension_numbers<[1], [0], [0], [1], [0, 0, 1, 1], [], []>} : vector<1x256xbf16>, vector<256x768xbf16>, vector<1x768xf32> -> vector<1x768xf32>
    %203 = arith.addf %202, %48 : vector<1x768xf32>
    %204 = vector.extract_strided_slice %200 {offsets = [0, 0], sizes = [1, 256], strides = [1, 1]} : vector<1x768xf32> to vector<1x256xf32>
    %205 = vector.extract_strided_slice %203 {offsets = [0, 0], sizes = [1, 256], strides = [1, 1]} : vector<1x768xf32> to vector<1x256xf32>
    %206 = arith.addf %204, %205 : vector<1x256xf32>
    %207 = arith.negf %206 : vector<1x256xf32>
    %208 = math.exp %207 : vector<1x256xf32>
    %cst_53 = arith.constant 1.000000e+00 : f32
    %209 = vector.broadcast %cst_53 : f32 to vector<1x256xf32>
    %210 = arith.addf %209, %208 : vector<1x256xf32>
    %211 = arith.divf %209, %210 : vector<1x256xf32>
    %212 = vector.extract_strided_slice %200 {offsets = [0, 256], sizes = [1, 256], strides = [1, 1]} : vector<1x768xf32> to vector<1x256xf32>
    %213 = vector.extract_strided_slice %203 {offsets = [0, 256], sizes = [1, 256], strides = [1, 1]} : vector<1x768xf32> to vector<1x256xf32>
    %214 = arith.addf %212, %213 : vector<1x256xf32>
    %215 = arith.negf %214 : vector<1x256xf32>
    %216 = math.exp %215 : vector<1x256xf32>
    %cst_54 = arith.constant 1.000000e+00 : f32
    %217 = vector.broadcast %cst_54 : f32 to vector<1x256xf32>
    %218 = arith.addf %217, %216 : vector<1x256xf32>
    %219 = arith.divf %217, %218 : vector<1x256xf32>
    %220 = vector.extract_strided_slice %200 {offsets = [0, 512], sizes = [1, 256], strides = [1, 1]} : vector<1x768xf32> to vector<1x256xf32>
    %221 = vector.extract_strided_slice %203 {offsets = [0, 512], sizes = [1, 256], strides = [1, 1]} : vector<1x768xf32> to vector<1x256xf32>
    %222 = arith.mulf %211, %221 : vector<1x256xf32>
    %223 = arith.addf %220, %222 : vector<1x256xf32>
    %224 = math.tanh %223 : vector<1x256xf32>
    %cst_55 = arith.constant 1.000000e+00 : f32
    %225 = vector.broadcast %cst_55 : f32 to vector<1x256xf32>
    %226 = arith.subf %225, %219 : vector<1x256xf32>
    %227 = arith.mulf %226, %224 : vector<1x256xf32>
    %228 = arith.mulf %219, %199 : vector<1x256xf32>
    %229 = arith.addf %227, %228 : vector<1x256xf32>
    %230 = vector.extract_strided_slice %46 {offsets = [6, 0], sizes = [1, 768], strides = [1, 1]} : vector<8x768xf32> to vector<1x768xf32>
    %231 = arith.truncf %229 : vector<1x256xf32> to vector<1x256xbf16>
    %cst_56 = arith.constant dense<0.000000e+00> : vector<1x768xf32>
    %232 = tpu.matmul %231, %47, %cst_56 {dimension_numbers = #tpu.dot_dimension_numbers<[1], [0], [0], [1], [0, 0, 1, 1], [], []>} : vector<1x256xbf16>, vector<256x768xbf16>, vector<1x768xf32> -> vector<1x768xf32>
    %233 = arith.addf %232, %48 : vector<1x768xf32>
    %234 = vector.extract_strided_slice %230 {offsets = [0, 0], sizes = [1, 256], strides = [1, 1]} : vector<1x768xf32> to vector<1x256xf32>
    %235 = vector.extract_strided_slice %233 {offsets = [0, 0], sizes = [1, 256], strides = [1, 1]} : vector<1x768xf32> to vector<1x256xf32>
    %236 = arith.addf %234, %235 : vector<1x256xf32>
    %237 = arith.negf %236 : vector<1x256xf32>
    %238 = math.exp %237 : vector<1x256xf32>
    %cst_57 = arith.constant 1.000000e+00 : f32
    %239 = vector.broadcast %cst_57 : f32 to vector<1x256xf32>
    %240 = arith.addf %239, %238 : vector<1x256xf32>
    %241 = arith.divf %239, %240 : vector<1x256xf32>
    %242 = vector.extract_strided_slice %230 {offsets = [0, 256], sizes = [1, 256], strides = [1, 1]} : vector<1x768xf32> to vector<1x256xf32>
    %243 = vector.extract_strided_slice %233 {offsets = [0, 256], sizes = [1, 256], strides = [1, 1]} : vector<1x768xf32> to vector<1x256xf32>
    %244 = arith.addf %242, %243 : vector<1x256xf32>
    %245 = arith.negf %244 : vector<1x256xf32>
    %246 = math.exp %245 : vector<1x256xf32>
    %cst_58 = arith.constant 1.000000e+00 : f32
    %247 = vector.broadcast %cst_58 : f32 to vector<1x256xf32>
    %248 = arith.addf %247, %246 : vector<1x256xf32>
    %249 = arith.divf %247, %248 : vector<1x256xf32>
    %250 = vector.extract_strided_slice %230 {offsets = [0, 512], sizes = [1, 256], strides = [1, 1]} : vector<1x768xf32> to vector<1x256xf32>
    %251 = vector.extract_strided_slice %233 {offsets = [0, 512], sizes = [1, 256], strides = [1, 1]} : vector<1x768xf32> to vector<1x256xf32>
    %252 = arith.mulf %241, %251 : vector<1x256xf32>
    %253 = arith.addf %250, %252 : vector<1x256xf32>
    %254 = math.tanh %253 : vector<1x256xf32>
    %cst_59 = arith.constant 1.000000e+00 : f32
    %255 = vector.broadcast %cst_59 : f32 to vector<1x256xf32>
    %256 = arith.subf %255, %249 : vector<1x256xf32>
    %257 = arith.mulf %256, %254 : vector<1x256xf32>
    %258 = arith.mulf %249, %229 : vector<1x256xf32>
    %259 = arith.addf %257, %258 : vector<1x256xf32>
    %260 = vector.extract_strided_slice %46 {offsets = [7, 0], sizes = [1, 768], strides = [1, 1]} : vector<8x768xf32> to vector<1x768xf32>
    %261 = arith.truncf %259 : vector<1x256xf32> to vector<1x256xbf16>
    %cst_60 = arith.constant dense<0.000000e+00> : vector<1x768xf32>
    %262 = tpu.matmul %261, %47, %cst_60 {dimension_numbers = #tpu.dot_dimension_numbers<[1], [0], [0], [1], [0, 0, 1, 1], [], []>} : vector<1x256xbf16>, vector<256x768xbf16>, vector<1x768xf32> -> vector<1x768xf32>
    %263 = arith.addf %262, %48 : vector<1x768xf32>
    %264 = vector.extract_strided_slice %260 {offsets = [0, 0], sizes = [1, 256], strides = [1, 1]} : vector<1x768xf32> to vector<1x256xf32>
    %265 = vector.extract_strided_slice %263 {offsets = [0, 0], sizes = [1, 256], strides = [1, 1]} : vector<1x768xf32> to vector<1x256xf32>
    %266 = arith.addf %264, %265 : vector<1x256xf32>
    %267 = arith.negf %266 : vector<1x256xf32>
    %268 = math.exp %267 : vector<1x256xf32>
    %cst_61 = arith.constant 1.000000e+00 : f32
    %269 = vector.broadcast %cst_61 : f32 to vector<1x256xf32>
    %270 = arith.addf %269, %268 : vector<1x256xf32>
    %271 = arith.divf %269, %270 : vector<1x256xf32>
    %272 = vector.extract_strided_slice %260 {offsets = [0, 256], sizes = [1, 256], strides = [1, 1]} : vector<1x768xf32> to vector<1x256xf32>
    %273 = vector.extract_strided_slice %263 {offsets = [0, 256], sizes = [1, 256], strides = [1, 1]} : vector<1x768xf32> to vector<1x256xf32>
    %274 = arith.addf %272, %273 : vector<1x256xf32>
    %275 = arith.negf %274 : vector<1x256xf32>
    %276 = math.exp %275 : vector<1x256xf32>
    %cst_62 = arith.constant 1.000000e+00 : f32
    %277 = vector.broadcast %cst_62 : f32 to vector<1x256xf32>
    %278 = arith.addf %277, %276 : vector<1x256xf32>
    %279 = arith.divf %277, %278 : vector<1x256xf32>
    %280 = vector.extract_strided_slice %260 {offsets = [0, 512], sizes = [1, 256], strides = [1, 1]} : vector<1x768xf32> to vector<1x256xf32>
    %281 = vector.extract_strided_slice %263 {offsets = [0, 512], sizes = [1, 256], strides = [1, 1]} : vector<1x768xf32> to vector<1x256xf32>
    %282 = arith.mulf %271, %281 : vector<1x256xf32>
    %283 = arith.addf %280, %282 : vector<1x256xf32>
    %284 = math.tanh %283 : vector<1x256xf32>
    %cst_63 = arith.constant 1.000000e+00 : f32
    %285 = vector.broadcast %cst_63 : f32 to vector<1x256xf32>
    %286 = arith.subf %285, %279 : vector<1x256xf32>
    %287 = arith.mulf %286, %284 : vector<1x256xf32>
    %288 = arith.mulf %279, %259 : vector<1x256xf32>
    %289 = arith.addf %287, %288 : vector<1x256xf32>
    %290 = tpu.concatenate %79, %109, %139, %169, %199, %229, %259, %289 in 0 : vector<1x256xf32>, vector<1x256xf32>, vector<1x256xf32>, vector<1x256xf32>, vector<1x256xf32>, vector<1x256xf32>, vector<1x256xf32>, vector<1x256xf32> -> vector<8x256xf32>
    %c0_64 = arith.constant 0 : index
    %c0_65 = arith.constant 0 : index
    %291 = vector.load %arg8[%c0_64, %c0_65] : memref<8x256xf32, #tpu.memory_space<vmem>>, vector<8x256xf32>
    tpu.vector_store %arg8[%c0_64, %c0_65], %290 {strides = array<i32>} : memref<8x256xf32, #tpu.memory_space<vmem>>, vector<8x256xf32>,
    return
  }
  func.func @transform_0(%arg0: i32, %arg1: memref<8xi32, #tpu.memory_space<smem>>) -> (i32, i32) {
    %c0_i32 = arith.constant 0 : i32
    %c0_i32_0 = arith.constant 0 : i32
    %c0_i32_1 = arith.constant 0 : i32
    return %c0_i32, %c0_i32_0 : i32, i32
  }
  func.func @transform_1(%arg0: i32, %arg1: memref<8xi32, #tpu.memory_space<smem>>) -> (i32, i32) {
    %c0_i32 = arith.constant 0 : i32
    %c0_i32_0 = arith.constant 0 : i32
    %c0_i32_1 = arith.constant 0 : i32
    return %c0_i32, %c0_i32_0 : i32, i32
  }
  func.func @transform_2(%arg0: i32, %arg1: memref<8xi32, #tpu.memory_space<smem>>) -> (i32, i32) {
    %c0_i32 = arith.constant 0 : i32
    %c0_i32_0 = arith.constant 0 : i32
    %c0_i32_1 = arith.constant 0 : i32
    return %c0_i32, %c0_i32_0 : i32, i32
  }
  func.func @transform_3(%arg0: i32, %arg1: memref<8xi32, #tpu.memory_space<smem>>) -> (i32, i32) {
    %c0_i32 = arith.constant 0 : i32
    %c0_i32_0 = arith.constant 0 : i32
    %c0_i32_1 = arith.constant 0 : i32
    return %c0_i32, %c0_i32_0 : i32, i32
  }
  func.func @transform_4(%arg0: i32, %arg1: memref<8xi32, #tpu.memory_space<smem>>) -> (i32, i32) {
    %c0_i32 = arith.constant 0 : i32
    %c0_i32_0 = arith.constant 0 : i32
    %c0_i32_1 = arith.constant 0 : i32
    return %c0_i32, %c0_i32_0 : i32, i32
  }
  func.func @transform_5(%arg0: i32, %arg1: memref<8xi32, #tpu.memory_space<smem>>) -> (i32, i32) {
    %c0_i32 = arith.constant 0 : i32
    %c0_i32_0 = arith.constant 0 : i32
    %c0_i32_1 = arith.constant 0 : i32
    return %c0_i32, %c0_i32_0 : i32, i32
  }
  func.func @transform_6(%arg0: i32, %arg1: memref<8xi32, #tpu.memory_space<smem>>) -> (i32, i32) {
    %c0_i32 = arith.constant 0 : i32
    %c0_i32_0 = arith.constant 0 : i32
    %c0_i32_1 = arith.constant 0 : i32
    return %c0_i32, %c0_i32_0 : i32, i32
  }
}

</mosaic_0001>

<llo_original>
// kernel: tpu_custom_call.1
$region0: #{tpu_custom_call.1}
  #allocation0 [shape = 'u32[]', space=smem, size = 0x4, offset = 0x4, fixed_abs, tag = 'smem constant byte address 0x4 - core index']
  #allocation1 [shape = 'u32[144,128]{1,0:T(1,128)}', space=vmem, size = 0x12000, scoped, tag = 'internal scratch']
  #allocation2 [shape = 's32[1]{0}', space=sflag, size = 0x4, scoped, tag = 'scoped memory for tpu_custom_call.1']
  #allocation3 [shape = 'u8[512]{0}', space=smem, size = 0x200, scoped, tag = 'prefetched SMEM operand 0']
  %s0 = inlined_call_operand.hbm [shape: s32[8], index: 0, kind: input, shape index: {}]
  %s1 = inlined_call_operand.hbm [shape: f32[16,256], index: 1, kind: input, shape index: {}]
  %s2 = inlined_call_operand.vmem [shape: f32[1,256], index: 2, kind: input, shape index: {}]
  %s3 = inlined_call_operand.hbm [shape: bf16[256,768], index: 3, kind: input, shape index: {}]
  %s4 = inlined_call_operand.hbm [shape: bf16[256,768], index: 4, kind: input, shape index: {}]
  %s5 = inlined_call_operand.vmem [shape: f32[1,768], index: 5, kind: input, shape index: {}]
  %s6 = inlined_call_operand.vmem [shape: f32[1,768], index: 6, kind: input, shape index: {}]
  %s7 = inlined_call_operand.hbm [shape: f32[8,256], index: 7, kind: output, shape index: {}]
  %s8 = sld [smem:[#allocation0]]
  $region46: #{tpu_custom_call.1} parent=0
    _
  %s10 = ssub.s32 1, %s8
  %s11 = scalar_select 0, %s10, %s8
  %13 = dma.hbm_to_smem %s0, 16, [#allocation3], [#allocation2]
  %14 = dma.done [#allocation2], 16
  %15 = sfence
  $region1: #{tpu_custom_call.1} parent=0
    #allocation4 [shape = 'u8[16384]{0}', space=vmem, size = 0x4000, scoped, tag = 'input window, operand 1, single buffered']
    #allocation5 [shape = 's32[1]{0}', space=sflag, size = 0x4, scoped, tag = 'scoped memory for tpu_custom_call.1']
    #allocation6 [shape = 's32[1]{0}', space=sflag, size = 0x4, scoped, tag = 'scoped memory for tpu_custom_call.1']
    #allocation7 [shape = 'u8[393216]{0}', space=vmem, size = 0x60000, scoped, tag = 'input window, operand 3, single buffered']
    #allocation8 [shape = 's32[1]{0}', space=sflag, size = 0x4, scoped, tag = 'scoped memory for tpu_custom_call.1']
    #allocation9 [shape = 'u8[393216]{0}', space=vmem, size = 0x60000, scoped, tag = 'input window, operand 4, single buffered']
    #allocation10 [shape = 'u8[8192]{0}', space=vmem, size = 0x2000, scoped, tag = 'output window, operand 0, single buffered']
    %16 = vsyncpa [#allocation5], 0
    %17 = vsyncpa [#allocation8], 0
    %18 = vsyncpa [#allocation6], 0
    // Predicated region
    $region2: #{tpu_custom_call.1} parent=1 // pred_check
      _
    $region3: #{tpu_custom_call.1} parent=1 // pred_check_branch
      %20 = sbr.rel (0) target = $region5
    $region4: #{tpu_custom_call.1} parent=1 // pred_region
      %s22 = ssub.s32 512, 512
      %23 = vsyncadd [#allocation5], %s22
      %s24 = sshll.u32 [#allocation4], 4
      %s25 = int_to_ptr.vmem [resolvable:$true] %s24
      %30 = dma.hbm_to_vmem [thread:$0]  %s1, 512, %s25, [#allocation5], 256, 256, 16
    $region5: #{tpu_custom_call.1} parent=1 // pred_fallthru
      _
    // Predicated region
    $region6: #{tpu_custom_call.1} parent=1 // pred_check
      _
    $region7: #{tpu_custom_call.1} parent=1 // pred_check_branch
      %32 = sbr.rel (0) target = $region9
    $region8: #{tpu_custom_call.1} parent=1 // pred_region
      _
    $region9: #{tpu_custom_call.1} parent=1 // pred_fallthru
      _
    // Predicated region
    $region10: #{tpu_custom_call.1} parent=1 // pred_check
      _
    $region11: #{tpu_custom_call.1} parent=1 // pred_check_branch
      %34 = sbr.rel (0) target = $region13
    $region12: #{tpu_custom_call.1} parent=1 // pred_region
      %s36 = ssub.s32 12288, 12288
      %37 = vsyncadd [#allocation8], %s36
      %s38 = sshll.u32 [#allocation7], 4
      %s39 = int_to_ptr.vmem [resolvable:$true] %s38
      %44 = dma.hbm_to_vmem [thread:$0]  %s3, 12288, %s39, [#allocation8], 384, 384, 24
    $region13: #{tpu_custom_call.1} parent=1 // pred_fallthru
      _
    // Predicated region
    $region14: #{tpu_custom_call.1} parent=1 // pred_check
      _
    $region15: #{tpu_custom_call.1} parent=1 // pred_check_branch
      %46 = sbr.rel (0) target = $region17
    $region16: #{tpu_custom_call.1} parent=1 // pred_region
      %s48 = ssub.s32 12288, 12288
      %49 = vsyncadd [#allocation8], %s48
      %s50 = sshll.u32 [#allocation9], 4
      %s51 = int_to_ptr.vmem [resolvable:$true] %s50
      %56 = dma.hbm_to_vmem [thread:$0]  %s4, 12288, %s51, [#allocation8], 384, 384, 24
    $region17: #{tpu_custom_call.1} parent=1 // pred_fallthru
      _
    // Predicated region
    $region18: #{tpu_custom_call.1} parent=1 // pred_check
      _
    $region19: #{tpu_custom_call.1} parent=1 // pred_check_branch
      %58 = sbr.rel (0) target = $region21
    $region20: #{tpu_custom_call.1} parent=1 // pred_region
      _
    $region21: #{tpu_custom_call.1} parent=1 // pred_fallthru
      _
    // Predicated region
    $region22: #{tpu_custom_call.1} parent=1 // pred_check
      _
    $region23: #{tpu_custom_call.1} parent=1 // pred_check_branch
      %60 = sbr.rel (0) target = $region25
    $region24: #{tpu_custom_call.1} parent=1 // pred_region
      _
    $region25: #{tpu_custom_call.1} parent=1 // pred_fallthru
      _
    // Predicated region
    $region26: #{tpu_custom_call.1} parent=1 // pred_check
      _
    $region27: #{tpu_custom_call.1} parent=1 // pred_check_branch
      %62 = sbr.rel (0) target = $region29
    $region28: #{tpu_custom_call.1} parent=1 // pred_region
      %63 = dma.done [#allocation5], 512
    $region29: #{tpu_custom_call.1} parent=1 // pred_fallthru
      _
    // Predicated region
    $region30: #{tpu_custom_call.1} parent=1 // pred_check
      _
    $region31: #{tpu_custom_call.1} parent=1 // pred_check_branch
      %65 = sbr.rel (0) target = $region33
    $region32: #{tpu_custom_call.1} parent=1 // pred_region
      %66 = dma.done [#allocation8], 12288
    $region33: #{tpu_custom_call.1} parent=1 // pred_fallthru
      _
    // Predicated region
    $region34: #{tpu_custom_call.1} parent=1 // pred_check
      _
    $region35: #{tpu_custom_call.1} parent=1 // pred_check_branch
      %68 = sbr.rel (0) target = $region37
    $region36: #{tpu_custom_call.1} parent=1 // pred_region
      %69 = dma.done [#allocation8], 12288
    $region37: #{tpu_custom_call.1} parent=1 // pred_fallthru
      _
    %s70 = sld [smem:[#allocation3]]
    %p71 = scmp.gt.s32.totalorder %s70, 0
    %s72 = scalar_select %p71, %s70, 0
    %p73 = scmp.lt.s32.totalorder %s72, 15
    %s74 = scalar_select %p73, %s72, 15
    %s75 = sshra.s32 %s74, 3
    %s76 = sand.u32 %s74, 7
    %s77 = sshra.s32 %s74, 3
    %s78 = sand.u32 %s74, 7
    %s79 = smul.u32 %s75, 2
    %s80 = smul.u32 %s79, 8
    %s81 = sadd.s32 %s80, %s78
    %s82 = scalar_lea.vmem [#allocation4], %s81
    %v83 = vld [vmem:[%s82] ss:$8 sm:$0x3]
    %s84 = sld [smem:[#allocation3 + $0x1]]
    %p85 = scmp.gt.s32.totalorder %s84, 0
    %s86 = scalar_select %p85, %s84, 0
    %p87 = scmp.lt.s32.totalorder %s86, 15
    %s88 = scalar_select %p87, %s86, 15
    %s89 = sshra.s32 %s88, 3
    %s90 = sand.u32 %s88, 7
    %s91 = sshra.s32 %s88, 3
    %s92 = sand.u32 %s88, 7
    %s93 = smul.u32 %s89, 2
    %s94 = smul.u32 %s93, 8
    %s95 = sadd.s32 %s94, %s92
    %s96 = scalar_lea.vmem [#allocation4], %s95
    %v97 = vld [vmem:[%s96] ss:$8 sm:$0x3]
    %s98 = sld [smem:[#allocation3 + $0x2]]
    %p99 = scmp.gt.s32.totalorder %s98, 0
    %s100 = scalar_select %p99, %s98, 0
    %p101 = scmp.lt.s32.totalorder %s100, 15
    %s102 = scalar_select %p101, %s100, 15
    %s103 = sshra.s32 %s102, 3
    %s104 = sand.u32 %s102, 7
    %s105 = sshra.s32 %s102, 3
    %s106 = sand.u32 %s102, 7
    %s107 = smul.u32 %s103, 2
    %s108 = smul.u32 %s107, 8
    %s109 = sadd.s32 %s108, %s106
    %s110 = scalar_lea.vmem [#allocation4], %s109
    %v111 = vld [vmem:[%s110] ss:$8 sm:$0x3]
    %s112 = sld [smem:[#allocation3 + $0x3]]
    %p113 = scmp.gt.s32.totalorder %s112, 0
    %s114 = scalar_select %p113, %s112, 0
    %p115 = scmp.lt.s32.totalorder %s114, 15
    %s116 = scalar_select %p115, %s114, 15
    %s117 = sshra.s32 %s116, 3
    %s118 = sand.u32 %s116, 7
    %s119 = sshra.s32 %s116, 3
    %s120 = sand.u32 %s116, 7
    %s121 = smul.u32 %s117, 2
    %s122 = smul.u32 %s121, 8
    %s123 = sadd.s32 %s122, %s120
    %s124 = scalar_lea.vmem [#allocation4], %s123
    %v125 = vld [vmem:[%s124] ss:$8 sm:$0x3]
    %s126 = sld [smem:[#allocation3 + $0x4]]
    %p127 = scmp.gt.s32.totalorder %s126, 0
    %s128 = scalar_select %p127, %s126, 0
    %p129 = scmp.lt.s32.totalorder %s128, 15
    %s130 = scalar_select %p129, %s128, 15
    %s131 = sshra.s32 %s130, 3
    %s132 = sand.u32 %s130, 7
    %s133 = sshra.s32 %s130, 3
    %s134 = sand.u32 %s130, 7
    %s135 = smul.u32 %s131, 2
    %s136 = smul.u32 %s135, 8
    %s137 = sadd.s32 %s136, %s134
    %s138 = scalar_lea.vmem [#allocation4], %s137
    %v139 = vld [vmem:[%s138] ss:$8 sm:$0x3]
    %s140 = sld [smem:[#allocation3 + $0x5]]
    %p141 = scmp.gt.s32.totalorder %s140, 0
    %s142 = scalar_select %p141, %s140, 0
    %p143 = scmp.lt.s32.totalorder %s142, 15
    %s144 = scalar_select %p143, %s142, 15
    %s145 = sshra.s32 %s144, 3
    %s146 = sand.u32 %s144, 7
    %s147 = sshra.s32 %s144, 3
    %s148 = sand.u32 %s144, 7
    %s149 = smul.u32 %s145, 2
    %s150 = smul.u32 %s149, 8
    %s151 = sadd.s32 %s150, %s148
    %s152 = scalar_lea.vmem [#allocation4], %s151
    %v153 = vld [vmem:[%s152] ss:$8 sm:$0x3]
    %s154 = sld [smem:[#allocation3 + $0x6]]
    %p155 = scmp.gt.s32.totalorder %s154, 0
    %s156 = scalar_select %p155, %s154, 0
    %p157 = scmp.lt.s32.totalorder %s156, 15
    %s158 = scalar_select %p157, %s156, 15
    %s159 = sshra.s32 %s158, 3
    %s160 = sand.u32 %s158, 7
    %s161 = sshra.s32 %s158, 3
    %s162 = sand.u32 %s158, 7
    %s163 = smul.u32 %s159, 2
    %s164 = smul.u32 %s163, 8
    %s165 = sadd.s32 %s164, %s162
    %s166 = scalar_lea.vmem [#allocation4], %s165
    %v167 = vld [vmem:[%s166] ss:$8 sm:$0x3]
    %s168 = sld [smem:[#allocation3 + $0x7]]
    %p169 = scmp.gt.s32.totalorder %s168, 0
    %s170 = scalar_select %p169, %s168, 0
    %p171 = scmp.lt.s32.totalorder %s170, 15
    %s172 = scalar_select %p171, %s170, 15
    %s173 = sshra.s32 %s172, 3
    %s174 = sand.u32 %s172, 7
    %s175 = sshra.s32 %s172, 3
    %s176 = sand.u32 %s172, 7
    %s177 = smul.u32 %s173, 2
    %s178 = smul.u32 %s177, 8
    %s179 = sadd.s32 %s178, %s176
    %s180 = scalar_lea.vmem [#allocation4], %s179
    %v181 = vld [vmem:[%s180] ss:$8 sm:$0x3]
    %v183 = vlaneseq
    %v184 = vshrl.u32 %v183, 7
    %v185 = vsub.s32 0, %v184
    %v186 = vrot.slane %v83, %v185
    %v187 = vlaneseq
    %v188 = vshrl.u32 %v187, 7
    %v189 = vsub.s32 1, %v188
    %v190 = vrot.slane %v83, %v189
    %v194 = vlaneseq
    %v195 = vshrl.u32 %v194, 7
    %v196 = vsub.s32 0, %v195
    %v197 = vrot.slane %v97, %v196
    %v198 = vlaneseq
    %v199 = vshrl.u32 %v198, 7
    %v200 = vsub.s32 1, %v199
    %v201 = vrot.slane %v97, %v200
    %v205 = vlaneseq
    %v206 = vshrl.u32 %v205, 7
    %v207 = vsub.s32 0, %v206
    %v208 = vrot.slane %v111, %v207
    %v209 = vlaneseq
    %v210 = vshrl.u32 %v209, 7
    %v211 = vsub.s32 1, %v210
    %v212 = vrot.slane %v111, %v211
    %v216 = vlaneseq
    %v217 = vshrl.u32 %v216, 7
    %v218 = vsub.s32 0, %v217
    %v219 = vrot.slane %v125, %v218
    %v220 = vlaneseq
    %v221 = vshrl.u32 %v220, 7
    %v222 = vsub.s32 1, %v221
    %v223 = vrot.slane %v125, %v222
    %v227 = vlaneseq
    %v228 = vshrl.u32 %v227, 7
    %v229 = vsub.s32 0, %v228
    %v230 = vrot.slane %v139, %v229
    %v231 = vlaneseq
    %v232 = vshrl.u32 %v231, 7
    %v233 = vsub.s32 1, %v232
    %v234 = vrot.slane %v139, %v233
    %v238 = vlaneseq
    %v239 = vshrl.u32 %v238, 7
    %v240 = vsub.s32 0, %v239
    %v241 = vrot.slane %v153, %v240
    %v242 = vlaneseq
    %v243 = vshrl.u32 %v242, 7
    %v244 = vsub.s32 1, %v243
    %v245 = vrot.slane %v153, %v244
    %v249 = vlaneseq
    %v250 = vshrl.u32 %v249, 7
    %v251 = vsub.s32 0, %v250
    %v252 = vrot.slane %v167, %v251
    %v253 = vlaneseq
    %v254 = vshrl.u32 %v253, 7
    %v255 = vsub.s32 1, %v254
    %v256 = vrot.slane %v167, %v255
    %v260 = vlaneseq
    %v261 = vshrl.u32 %v260, 7
    %v262 = vsub.s32 0, %v261
    %v263 = vrot.slane %v181, %v262
    %v264 = vlaneseq
    %v265 = vshrl.u32 %v264, 7
    %v266 = vsub.s32 1, %v265
    %v267 = vrot.slane %v181, %v266
    %vm270 = vcmask 1040384
    %v271 = vsel %vm270, %v186, %v197
    %v272 = vsel %vm270, %v190, %v201
    %vm273 = vcmask 1041408
    %v274 = vsel %vm273, %v271, %v208
    %v275 = vsel %vm273, %v272, %v212
    %vm276 = vcmask 1042432
    %v277 = vsel %vm276, %v274, %v219
    %v278 = vsel %vm276, %v275, %v223
    %vm279 = vcmask 1043456
    %v280 = vsel %vm279, %v277, %v230
    %v281 = vsel %vm279, %v278, %v234
    %vm282 = vcmask 1044480
    %v283 = vsel %vm282, %v280, %v241
    %v284 = vsel %vm282, %v281, %v245
    %vm285 = vcmask 1045504
    %v286 = vsel %vm285, %v283, %v252
    %v287 = vsel %vm285, %v284, %v256
    %vm288 = vcmask 1046528
    %v289 = vsel %vm288, %v286, %v263
    %v290 = vsel %vm288, %v287, %v267
    %v291 = vpack.c.bf16 %v289, %v289
    %v292 = vpack.c.bf16 %v290, %v290
    %v293 = vld [vmem:[#allocation7] sm:$0xff]
    %v294 = vld [vmem:[#allocation7 + $0x8] sm:$0xff]
    %v295 = vld [vmem:[#allocation7 + $0x10] sm:$0xff]
    %v296 = vld [vmem:[#allocation7 + $0x18] sm:$0xff]
    %v297 = vld [vmem:[#allocation7 + $0x20] sm:$0xff]
    %v298 = vld [vmem:[#allocation7 + $0x28] sm:$0xff]
    %v299 = vld [vmem:[#allocation7 + $0x30] sm:$0xff]
    %v300 = vld [vmem:[#allocation7 + $0x38] sm:$0xff]
    %v301 = vld [vmem:[#allocation7 + $0x40] sm:$0xff]
    %v302 = vld [vmem:[#allocation7 + $0x48] sm:$0xff]
    %v303 = vld [vmem:[#allocation7 + $0x50] sm:$0xff]
    %v304 = vld [vmem:[#allocation7 + $0x58] sm:$0xff]
    %v305 = vld [vmem:[#allocation7 + $0x60] sm:$0xff]
    %v306 = vld [vmem:[#allocation7 + $0x68] sm:$0xff]
    %v307 = vld [vmem:[#allocation7 + $0x70] sm:$0xff]
    %v308 = vld [vmem:[#allocation7 + $0x78] sm:$0xff]
    %v309 = vld [vmem:[#allocation7 + $0x80] sm:$0xff]
    %v310 = vld [vmem:[#allocation7 + $0x88] sm:$0xff]
    %v311 = vld [vmem:[#allocation7 + $0x90] sm:$0xff]
    %v312 = vld [vmem:[#allocation7 + $0x98] sm:$0xff]
    %v313 = vld [vmem:[#allocation7 + $0xa0] sm:$0xff]
    %v314 = vld [vmem:[#allocation7 + $0xa8] sm:$0xff]
    %v315 = vld [vmem:[#allocation7 + $0xb0] sm:$0xff]
    %v316 = vld [vmem:[#allocation7 + $0xb8] sm:$0xff]
    %v317 = vld [vmem:[#allocation7 + $0xc0] sm:$0xff]
    %v318 = vld [vmem:[#allocation7 + $0xc8] sm:$0xff]
    %v319 = vld [vmem:[#allocation7 + $0xd0] sm:$0xff]
    %v320 = vld [vmem:[#allocation7 + $0xd8] sm:$0xff]
    %v321 = vld [vmem:[#allocation7 + $0xe0] sm:$0xff]
    %v322 = vld [vmem:[#allocation7 + $0xe8] sm:$0xff]
    %v323 = vld [vmem:[#allocation7 + $0xf0] sm:$0xff]
    %v324 = vld [vmem:[#allocation7 + $0xf8] sm:$0xff]
    %v325 = vld [vmem:[#allocation7 + $0x100] sm:$0xff]
    %v326 = vld [vmem:[#allocation7 + $0x108] sm:$0xff]
    %v327 = vld [vmem:[#allocation7 + $0x110] sm:$0xff]
    %v328 = vld [vmem:[#allocation7 + $0x118] sm:$0xff]
    %v329 = vld [vmem:[#allocation7 + $0x120] sm:$0xff]
    %v330 = vld [vmem:[#allocation7 + $0x128] sm:$0xff]
    %v331 = vld [vmem:[#allocation7 + $0x130] sm:$0xff]
    %v332 = vld [vmem:[#allocation7 + $0x138] sm:$0xff]
    %v333 = vld [vmem:[#allocation7 + $0x140] sm:$0xff]
    %v334 = vld [vmem:[#allocation7 + $0x148] sm:$0xff]
    %v335 = vld [vmem:[#allocation7 + $0x150] sm:$0xff]
    %v336 = vld [vmem:[#allocation7 + $0x158] sm:$0xff]
    %v337 = vld [vmem:[#allocation7 + $0x160] sm:$0xff]
    %v338 = vld [vmem:[#allocation7 + $0x168] sm:$0xff]
    %v339 = vld [vmem:[#allocation7 + $0x170] sm:$0xff]
    %v340 = vld [vmem:[#allocation7 + $0x178] sm:$0xff]
    %v341 = vld [vmem:[#allocation7 + $0x180] sm:$0xff]
    %v342 = vld [vmem:[#allocation7 + $0x188] sm:$0xff]
    %v343 = vld [vmem:[#allocation7 + $0x190] sm:$0xff]
    %v344 = vld [vmem:[#allocation7 + $0x198] sm:$0xff]
    %v345 = vld [vmem:[#allocation7 + $0x1a0] sm:$0xff]
    %v346 = vld [vmem:[#allocation7 + $0x1a8] sm:$0xff]
    %v347 = vld [vmem:[#allocation7 + $0x1b0] sm:$0xff]
    %v348 = vld [vmem:[#allocation7 + $0x1b8] sm:$0xff]
    %v349 = vld [vmem:[#allocation7 + $0x1c0] sm:$0xff]
    %v350 = vld [vmem:[#allocation7 + $0x1c8] sm:$0xff]
    %v351 = vld [vmem:[#allocation7 + $0x1d0] sm:$0xff]
    %v352 = vld [vmem:[#allocation7 + $0x1d8] sm:$0xff]
    %v353 = vld [vmem:[#allocation7 + $0x1e0] sm:$0xff]
    %v354 = vld [vmem:[#allocation7 + $0x1e8] sm:$0xff]
    %v355 = vld [vmem:[#allocation7 + $0x1f0] sm:$0xff]
    %v356 = vld [vmem:[#allocation7 + $0x1f8] sm:$0xff]
    %v357 = vld [vmem:[#allocation7 + $0x200] sm:$0xff]
    %v358 = vld [vmem:[#allocation7 + $0x208] sm:$0xff]
    %v359 = vld [vmem:[#allocation7 + $0x210] sm:$0xff]
    %v360 = vld [vmem:[#allocation7 + $0x218] sm:$0xff]
    %v361 = vld [vmem:[#allocation7 + $0x220] sm:$0xff]
    %v362 = vld [vmem:[#allocation7 + $0x228] sm:$0xff]
    %v363 = vld [vmem:[#allocation7 + $0x230] sm:$0xff]
    %v364 = vld [vmem:[#allocation7 + $0x238] sm:$0xff]
    %v365 = vld [vmem:[#allocation7 + $0x240] sm:$0xff]
    %v366 = vld [vmem:[#allocation7 + $0x248] sm:$0xff]
    %v367 = vld [vmem:[#allocation7 + $0x250] sm:$0xff]
    %v368 = vld [vmem:[#allocation7 + $0x258] sm:$0xff]
    %v369 = vld [vmem:[#allocation7 + $0x260] sm:$0xff]
    %v370 = vld [vmem:[#allocation7 + $0x268] sm:$0xff]
    %v371 = vld [vmem:[#allocation7 + $0x270] sm:$0xff]
    %v372 = vld [vmem:[#allocation7 + $0x278] sm:$0xff]
    %v373 = vld [vmem:[#allocation7 + $0x280] sm:$0xff]
    %v374 = vld [vmem:[#allocation7 + $0x288] sm:$0xff]
    %v375 = vld [vmem:[#allocation7 + $0x290] sm:$0xff]
    %v376 = vld [vmem:[#allocation7 + $0x298] sm:$0xff]
    %v377 = vld [vmem:[#allocation7 + $0x2a0] sm:$0xff]
    %v378 = vld [vmem:[#allocation7 + $0x2a8] sm:$0xff]
    %v379 = vld [vmem:[#allocation7 + $0x2b0] sm:$0xff]
    %v380 = vld [vmem:[#allocation7 + $0x2b8] sm:$0xff]
    %v381 = vld [vmem:[#allocation7 + $0x2c0] sm:$0xff]
    %v382 = vld [vmem:[#allocation7 + $0x2c8] sm:$0xff]
    %v383 = vld [vmem:[#allocation7 + $0x2d0] sm:$0xff]
    %v384 = vld [vmem:[#allocation7 + $0x2d8] sm:$0xff]
    %v385 = vld [vmem:[#allocation7 + $0x2e0] sm:$0xff]
    %v386 = vld [vmem:[#allocation7 + $0x2e8] sm:$0xff]
    %v387 = vld [vmem:[#allocation7 + $0x2f0] sm:$0xff]
    %v388 = vld [vmem:[#allocation7 + $0x2f8] sm:$0xff]
    %v389 = vld [vmem:[%s5] sm:$0x3f]
    %v391 = vlaneseq
    %v392 = vshrl.u32 %v391, 7
    %v393 = vsub.s32 0, %v392
    %v394 = vrot.slane %v389, %v393
    %v395 = vlaneseq
    %v396 = vshrl.u32 %v395, 7
    %v397 = vsub.s32 1, %v396
    %v398 = vrot.slane %v389, %v397
    %v399 = vlaneseq
    %v400 = vshrl.u32 %v399, 7
    %v401 = vsub.s32 2, %v400
    %v402 = vrot.slane %v389, %v401
    %v403 = vlaneseq
    %v404 = vshrl.u32 %v403, 7
    %v405 = vsub.s32 3, %v404
    %v406 = vrot.slane %v389, %v405
    %v407 = vlaneseq
    %v408 = vshrl.u32 %v407, 7
    %v409 = vsub.s32 4, %v408
    %v410 = vrot.slane %v389, %v409
    %v411 = vlaneseq
    %v412 = vshrl.u32 %v411, 7
    %v413 = vsub.s32 5, %v412
    %v414 = vrot.slane %v389, %v413
    %v517 = vunpack.c.l.b16 %v293
    %v518 = vunpack.c.h.b16 %v293
    %v519 = vunpack.c.l.b16 %v294
    %v520 = vunpack.c.h.b16 %v294
    %v521 = vunpack.c.l.b16 %v295
    %v522 = vunpack.c.h.b16 %v295
    %v523 = vunpack.c.l.b16 %v296
    %v524 = vunpack.c.h.b16 %v296
    %v525 = vunpack.c.l.b16 %v297
    %v526 = vunpack.c.h.b16 %v297
    %v527 = vunpack.c.l.b16 %v298
    %v528 = vunpack.c.h.b16 %v298
    %v529 = vunpack.c.l.b16 %v299
    %v530 = vunpack.c.h.b16 %v299
    %v531 = vunpack.c.l.b16 %v300
    %v532 = vunpack.c.h.b16 %v300
    %v533 = vunpack.c.l.b16 %v301
    %v534 = vunpack.c.h.b16 %v301
    %v535 = vunpack.c.l.b16 %v302
    %v536 = vunpack.c.h.b16 %v302
    %v537 = vunpack.c.l.b16 %v303
    %v538 = vunpack.c.h.b16 %v303
    %v539 = vunpack.c.l.b16 %v304
    %v540 = vunpack.c.h.b16 %v304
    %v541 = vunpack.c.l.b16 %v305
    %v542 = vunpack.c.h.b16 %v305
    %v543 = vunpack.c.l.b16 %v306
    %v544 = vunpack.c.h.b16 %v306
    %v545 = vunpack.c.l.b16 %v307
    %v546 = vunpack.c.h.b16 %v307
    %v547 = vunpack.c.l.b16 %v308
    %v548 = vunpack.c.h.b16 %v308
    %v549 = vunpack.c.l.b16 %v309
    %v550 = vunpack.c.h.b16 %v309
    %v551 = vunpack.c.l.b16 %v310
    %v552 = vunpack.c.h.b16 %v310
    %v553 = vunpack.c.l.b16 %v311
    %v554 = vunpack.c.h.b16 %v311
    %v555 = vunpack.c.l.b16 %v312
    %v556 = vunpack.c.h.b16 %v312
    %v557 = vunpack.c.l.b16 %v313
    %v558 = vunpack.c.h.b16 %v313
    %v559 = vunpack.c.l.b16 %v314
    %v560 = vunpack.c.h.b16 %v314
    %v561 = vunpack.c.l.b16 %v315
    %v562 = vunpack.c.h.b16 %v315
    %v563 = vunpack.c.l.b16 %v316
    %v564 = vunpack.c.h.b16 %v316
    %v565 = vunpack.c.l.b16 %v317
    %v566 = vunpack.c.h.b16 %v317
    %v567 = vunpack.c.l.b16 %v318
    %v568 = vunpack.c.h.b16 %v318
    %v569 = vunpack.c.l.b16 %v319
    %v570 = vunpack.c.h.b16 %v319
    %v571 = vunpack.c.l.b16 %v320
    %v572 = vunpack.c.h.b16 %v320
    %v573 = vunpack.c.l.b16 %v321
    %v574 = vunpack.c.h.b16 %v321
    %v575 = vunpack.c.l.b16 %v322
    %v576 = vunpack.c.h.b16 %v322
    %v577 = vunpack.c.l.b16 %v323
    %v578 = vunpack.c.h.b16 %v323
    %v579 = vunpack.c.l.b16 %v324
    %v580 = vunpack.c.h.b16 %v324
    %v581 = vunpack.c.l.b16 %v325
    %v582 = vunpack.c.h.b16 %v325
    %v583 = vunpack.c.l.b16 %v326
    %v584 = vunpack.c.h.b16 %v326
    %v585 = vunpack.c.l.b16 %v327
    %v586 = vunpack.c.h.b16 %v327
    %v587 = vunpack.c.l.b16 %v328
    %v588 = vunpack.c.h.b16 %v328
    %v589 = vunpack.c.l.b16 %v329
    %v590 = vunpack.c.h.b16 %v329
    %v591 = vunpack.c.l.b16 %v330
    %v592 = vunpack.c.h.b16 %v330
    %v593 = vunpack.c.l.b16 %v331
    %v594 = vunpack.c.h.b16 %v331
    %v595 = vunpack.c.l.b16 %v332
    %v596 = vunpack.c.h.b16 %v332
    %v597 = vunpack.c.l.b16 %v333
    %v598 = vunpack.c.h.b16 %v333
    %v599 = vunpack.c.l.b16 %v334
    %v600 = vunpack.c.h.b16 %v334
    %v601 = vunpack.c.l.b16 %v335
    %v602 = vunpack.c.h.b16 %v335
    %v603 = vunpack.c.l.b16 %v336
    %v604 = vunpack.c.h.b16 %v336
    %v605 = vunpack.c.l.b16 %v337
    %v606 = vunpack.c.h.b16 %v337
    %v607 = vunpack.c.l.b16 %v338
    %v608 = vunpack.c.h.b16 %v338
    %v609 = vunpack.c.l.b16 %v339
    %v610 = vunpack.c.h.b16 %v339
    %v611 = vunpack.c.l.b16 %v340
    %v612 = vunpack.c.h.b16 %v340
    %v613 = vunpack.c.l.b16 %v341
    %v614 = vunpack.c.h.b16 %v341
    %v615 = vunpack.c.l.b16 %v342
    %v616 = vunpack.c.h.b16 %v342
    %v617 = vunpack.c.l.b16 %v343
    %v618 = vunpack.c.h.b16 %v343
    %v619 = vunpack.c.l.b16 %v344
    %v620 = vunpack.c.h.b16 %v344
    %v621 = vunpack.c.l.b16 %v345
    %v622 = vunpack.c.h.b16 %v345
    %v623 = vunpack.c.l.b16 %v346
    %v624 = vunpack.c.h.b16 %v346
    %v625 = vunpack.c.l.b16 %v347
    %v626 = vunpack.c.h.b16 %v347
    %v627 = vunpack.c.l.b16 %v348
    %v628 = vunpack.c.h.b16 %v348
    %v629 = vunpack.c.l.b16 %v349
    %v630 = vunpack.c.h.b16 %v349
    %v631 = vunpack.c.l.b16 %v350
    %v632 = vunpack.c.h.b16 %v350
    %v633 = vunpack.c.l.b16 %v351
    %v634 = vunpack.c.h.b16 %v351
    %v635 = vunpack.c.l.b16 %v352
    %v636 = vunpack.c.h.b16 %v352
    %v637 = vunpack.c.l.b16 %v353
    %v638 = vunpack.c.h.b16 %v353
    %v639 = vunpack.c.l.b16 %v354
    %v640 = vunpack.c.h.b16 %v354
    %v641 = vunpack.c.l.b16 %v355
    %v642 = vunpack.c.h.b16 %v355
    %v643 = vunpack.c.l.b16 %v356
    %v644 = vunpack.c.h.b16 %v356
    %v645 = vunpack.c.l.b16 %v357
    %v646 = vunpack.c.h.b16 %v357
    %v647 = vunpack.c.l.b16 %v358
    %v648 = vunpack.c.h.b16 %v358
    %v649 = vunpack.c.l.b16 %v359
    %v650 = vunpack.c.h.b16 %v359
    %v651 = vunpack.c.l.b16 %v360
    %v652 = vunpack.c.h.b16 %v360
    %v653 = vunpack.c.l.b16 %v361
    %v654 = vunpack.c.h.b16 %v361
    %v655 = vunpack.c.l.b16 %v362
    %v656 = vunpack.c.h.b16 %v362
    %v657 = vunpack.c.l.b16 %v363
    %v658 = vunpack.c.h.b16 %v363
    %v659 = vunpack.c.l.b16 %v364
    %v660 = vunpack.c.h.b16 %v364
    %v661 = vunpack.c.l.b16 %v365
    %v662 = vunpack.c.h.b16 %v365
    %v663 = vunpack.c.l.b16 %v366
    %v664 = vunpack.c.h.b16 %v366
    %v665 = vunpack.c.l.b16 %v367
    %v666 = vunpack.c.h.b16 %v367
    %v667 = vunpack.c.l.b16 %v368
    %v668 = vunpack.c.h.b16 %v368
    %v669 = vunpack.c.l.b16 %v369
    %v670 = vunpack.c.h.b16 %v369
    %v671 = vunpack.c.l.b16 %v370
    %v672 = vunpack.c.h.b16 %v370
    %v673 = vunpack.c.l.b16 %v371
    %v674 = vunpack.c.h.b16 %v371
    %v675 = vunpack.c.l.b16 %v372
    %v676 = vunpack.c.h.b16 %v372
    %v677 = vunpack.c.l.b16 %v373
    %v678 = vunpack.c.h.b16 %v373
    %v679 = vunpack.c.l.b16 %v374
    %v680 = vunpack.c.h.b16 %v374
    %v681 = vunpack.c.l.b16 %v375
    %v682 = vunpack.c.h.b16 %v375
    %v683 = vunpack.c.l.b16 %v376
    %v684 = vunpack.c.h.b16 %v376
    %v685 = vunpack.c.l.b16 %v377
    %v686 = vunpack.c.h.b16 %v377
    %v687 = vunpack.c.l.b16 %v378
    %v688 = vunpack.c.h.b16 %v378
    %v689 = vunpack.c.l.b16 %v379
    %v690 = vunpack.c.h.b16 %v379
    %v691 = vunpack.c.l.b16 %v380
    %v692 = vunpack.c.h.b16 %v380
    %v693 = vunpack.c.l.b16 %v381
    %v694 = vunpack.c.h.b16 %v381
    %v695 = vunpack.c.l.b16 %v382
    %v696 = vunpack.c.h.b16 %v382
    %v697 = vunpack.c.l.b16 %v383
    %v698 = vunpack.c.h.b16 %v383
    %v699 = vunpack.c.l.b16 %v384
    %v700 = vunpack.c.h.b16 %v384
    %v701 = vunpack.c.l.b16 %v385
    %v702 = vunpack.c.h.b16 %v385
    %v703 = vunpack.c.l.b16 %v386
    %v704 = vunpack.c.h.b16 %v386
    %v705 = vunpack.c.l.b16 %v387
    %v706 = vunpack.c.h.b16 %v387
    %v707 = vunpack.c.l.b16 %v388
    %v708 = vunpack.c.h.b16 %v388
    %v709 = vpack.c.b16 %v523, %v517
    %v710 = vpack.c.b16 %v524, %v518
    %v711 = vpack.c.b16 %v525, %v519
    %v712 = vpack.c.b16 %v526, %v520
    %v713 = vpack.c.b16 %v527, %v521
    %v714 = vpack.c.b16 %v528, %v522
    %v715 = vpack.c.b16 %v535, %v529
    %v716 = vpack.c.b16 %v536, %v530
    %v717 = vpack.c.b16 %v537, %v531
    %v718 = vpack.c.b16 %v538, %v532
    %v719 = vpack.c.b16 %v539, %v533
    %v720 = vpack.c.b16 %v540, %v534
    %v721 = vpack.c.b16 %v547, %v541
    %v722 = vpack.c.b16 %v548, %v542
    %v723 = vpack.c.b16 %v549, %v543
    %v724 = vpack.c.b16 %v550, %v544
    %v725 = vpack.c.b16 %v551, %v545
    %v726 = vpack.c.b16 %v552, %v546
    %v727 = vpack.c.b16 %v559, %v553
    %v728 = vpack.c.b16 %v560, %v554
    %v729 = vpack.c.b16 %v561, %v555
    %v730 = vpack.c.b16 %v562, %v556
    %v731 = vpack.c.b16 %v563, %v557
    %v732 = vpack.c.b16 %v564, %v558
    %v733 = vpack.c.b16 %v571, %v565
    %v734 = vpack.c.b16 %v572, %v566
    %v735 = vpack.c.b16 %v573, %v567
    %v736 = vpack.c.b16 %v574, %v568
    %v737 = vpack.c.b16 %v575, %v569
    %v738 = vpack.c.b16 %v576, %v570
    %v739 = vpack.c.b16 %v583, %v577
    %v740 = vpack.c.b16 %v584, %v578
    %v741 = vpack.c.b16 %v585, %v579
    %v742 = vpack.c.b16 %v586, %v580
    %v743 = vpack.c.b16 %v587, %v581
    %v744 = vpack.c.b16 %v588, %v582
    %v745 = vpack.c.b16 %v595, %v589
    %v746 = vpack.c.b16 %v596, %v590
    %v747 = vpack.c.b16 %v597, %v591
    %v748 = vpack.c.b16 %v598, %v592
    %v749 = vpack.c.b16 %v599, %v593
    %v750 = vpack.c.b16 %v600, %v594
    %v751 = vpack.c.b16 %v607, %v601
    %v752 = vpack.c.b16 %v608, %v602
    %v753 = vpack.c.b16 %v609, %v603
    %v754 = vpack.c.b16 %v610, %v604
    %v755 = vpack.c.b16 %v611, %v605
    %v756 = vpack.c.b16 %v612, %v606
    %v757 = vpack.c.b16 %v619, %v613
    %v758 = vpack.c.b16 %v620, %v614
    %v759 = vpack.c.b16 %v621, %v615
    %v760 = vpack.c.b16 %v622, %v616
    %v761 = vpack.c.b16 %v623, %v617
    %v762 = vpack.c.b16 %v624, %v618
    %v763 = vpack.c.b16 %v631, %v625
    %v764 = vpack.c.b16 %v632, %v626
    %v765 = vpack.c.b16 %v633, %v627
    %v766 = vpack.c.b16 %v634, %v628
    %v767 = vpack.c.b16 %v635, %v629
    %v768 = vpack.c.b16 %v636, %v630
    %v769 = vpack.c.b16 %v643, %v637
    %v770 = vpack.c.b16 %v644, %v638
    %v771 = vpack.c.b16 %v645, %v639
    %v772 = vpack.c.b16 %v646, %v640
    %v773 = vpack.c.b16 %v647, %v641
    %v774 = vpack.c.b16 %v648, %v642
    %v775 = vpack.c.b16 %v655, %v649
    %v776 = vpack.c.b16 %v656, %v650
    %v777 = vpack.c.b16 %v657, %v651
    %v778 = vpack.c.b16 %v658, %v652
    %v779 = vpack.c.b16 %v659, %v653
    %v780 = vpack.c.b16 %v660, %v654
    %v781 = vpack.c.b16 %v667, %v661
    %v782 = vpack.c.b16 %v668, %v662
    %v783 = vpack.c.b16 %v669, %v663
    %v784 = vpack.c.b16 %v670, %v664
    %v785 = vpack.c.b16 %v671, %v665
    %v786 = vpack.c.b16 %v672, %v666
    %v787 = vpack.c.b16 %v679, %v673
    %v788 = vpack.c.b16 %v680, %v674
    %v789 = vpack.c.b16 %v681, %v675
    %v790 = vpack.c.b16 %v682, %v676
    %v791 = vpack.c.b16 %v683, %v677
    %v792 = vpack.c.b16 %v684, %v678
    %v793 = vpack.c.b16 %v691, %v685
    %v794 = vpack.c.b16 %v692, %v686
    %v795 = vpack.c.b16 %v693, %v687
    %v796 = vpack.c.b16 %v694, %v688
    %v797 = vpack.c.b16 %v695, %v689
    %v798 = vpack.c.b16 %v696, %v690
    %v799 = vpack.c.b16 %v703, %v697
    %v800 = vpack.c.b16 %v704, %v698
    %v801 = vpack.c.b16 %v705, %v699
    %v802 = vpack.c.b16 %v706, %v700
    %v803 = vpack.c.b16 %v707, %v701
    %v804 = vpack.c.b16 %v708, %v702
    %901 = vmatprep.subr.bf16.mxu0 %v710
    %902 = vmatpush1.bf16.msra.mxu0 %v709
    %903 = vmatprep.subr.bf16.mxu0 %v716
    %904 = vmatpush1.bf16.msra.mxu0 %v715
    %905 = vmatprep.subr.bf16.mxu0 %v722
    %906 = vmatpush1.bf16.msra.mxu0 %v721
    %907 = vmatprep.subr.bf16.mxu0 %v728
    %908 = vmatpush1.bf16.msra.mxu0 %v727
    %909 = vmatprep.subr.bf16.mxu0 %v734
    %910 = vmatpush1.bf16.msra.mxu0 %v733
    %911 = vmatprep.subr.bf16.mxu0 %v740
    %912 = vmatpush1.bf16.msra.mxu0 %v739
    %913 = vmatprep.subr.bf16.mxu0 %v746
    %914 = vmatpush1.bf16.msra.mxu0 %v745
    %915 = vmatprep.subr.bf16.mxu0 %v752
    %916 = vmatpush1.bf16.msra.mxu0 %v751
    %917 = vmatprep.subr.bf16.mxu0 %v758
    %918 = vmatpush1.bf16.msra.mxu0 %v757
    %919 = vmatprep.subr.bf16.mxu0 %v764
    %920 = vmatpush1.bf16.msra.mxu0 %v763
    %921 = vmatprep.subr.bf16.mxu0 %v770
    %922 = vmatpush1.bf16.msra.mxu0 %v769
    %923 = vmatprep.subr.bf16.mxu0 %v776
    %924 = vmatpush1.bf16.msra.mxu0 %v775
    %925 = vmatprep.subr.bf16.mxu0 %v782
    %926 = vmatpush1.bf16.msra.mxu0 %v781
    %927 = vmatprep.subr.bf16.mxu0 %v788
    %928 = vmatpush1.bf16.msra.mxu0 %v787
    %929 = vmatprep.subr.bf16.mxu0 %v794
    %930 = vmatpush1.bf16.msra.mxu0 %v793
    %931 = vmatprep.subr.bf16.mxu0 %v800
    %932 = vmatpush1.bf16.msra.mxu0 %v799
    %933 = vmatprep.mubr.bf16.mxu0 %v292
    %934 = vmatmul.mubr.bf16.gmra.mrb[0].mxu0 %v291
    %v935 = vpop.f32.mrb[0].mxu0
    %v936 = vadd.f32 %v394, %v935
    %v937 = vpop.f32.mrb[0].mxu0
    %v938 = vadd.f32 %v398, %v937
    %v939 = vpop.f32.mrb[0].mxu0
    %v940 = vpop.f32.mrb[0].mxu0
    %941 = vdwg.mxu0
    %942 = vmatprep.subr.bf16.mxu0 %v712
    %943 = vmatpush1.bf16.msra.mxu0 %v711
    %944 = vmatprep.subr.bf16.mxu0 %v718
    %945 = vmatpush1.bf16.msra.mxu0 %v717
    %946 = vmatprep.subr.bf16.mxu0 %v724
    %947 = vmatpush1.bf16.msra.mxu0 %v723
    %948 = vmatprep.subr.bf16.mxu0 %v730
    %949 = vmatpush1.bf16.msra.mxu0 %v729
    %950 = vmatprep.subr.bf16.mxu0 %v736
    %951 = vmatpush1.bf16.msra.mxu0 %v735
    %952 = vmatprep.subr.bf16.mxu0 %v742
    %953 = vmatpush1.bf16.msra.mxu0 %v741
    %954 = vmatprep.subr.bf16.mxu0 %v748
    %955 = vmatpush1.bf16.msra.mxu0 %v747
    %956 = vmatprep.subr.bf16.mxu0 %v754
    %957 = vmatpush1.bf16.msra.mxu0 %v753
    %958 = vmatprep.subr.bf16.mxu0 %v760
    %959 = vmatpush1.bf16.msra.mxu0 %v759
    %960 = vmatprep.subr.bf16.mxu0 %v766
    %961 = vmatpush1.bf16.msra.mxu0 %v765
    %962 = vmatprep.subr.bf16.mxu0 %v772
    %963 = vmatpush1.bf16.msra.mxu0 %v771
    %964 = vmatprep.subr.bf16.mxu0 %v778
    %965 = vmatpush1.bf16.msra.mxu0 %v777
    %966 = vmatprep.subr.bf16.mxu0 %v784
    %967 = vmatpush1.bf16.msra.mxu0 %v783
    %968 = vmatprep.subr.bf16.mxu0 %v790
    %969 = vmatpush1.bf16.msra.mxu0 %v789
    %970 = vmatprep.subr.bf16.mxu0 %v796
    %971 = vmatpush1.bf16.msra.mxu0 %v795
    %972 = vmatprep.subr.bf16.mxu0 %v802
    %973 = vmatpush1.bf16.msra.mxu0 %v801
    %974 = vmatprep.mubr.bf16.mxu0 %v292
    %975 = vmatmul.mubr.bf16.gmra.mrb[0].mxu0 %v291
    %v976 = vpop.f32.mrb[0].mxu0
    %v977 = vadd.f32 %v402, %v976
    %v978 = vpop.f32.mrb[0].mxu0
    %v979 = vadd.f32 %v406, %v978
    %v980 = vpop.f32.mrb[0].mxu0
    %v981 = vpop.f32.mrb[0].mxu0
    %982 = vdwg.mxu0
    %983 = vmatprep.subr.bf16.mxu0 %v714
    %984 = vmatpush1.bf16.msra.mxu0 %v713
    %985 = vmatprep.subr.bf16.mxu0 %v720
    %986 = vmatpush1.bf16.msra.mxu0 %v719
    %987 = vmatprep.subr.bf16.mxu0 %v726
    %988 = vmatpush1.bf16.msra.mxu0 %v725
    %989 = vmatprep.subr.bf16.mxu0 %v732
    %990 = vmatpush1.bf16.msra.mxu0 %v731
    %991 = vmatprep.subr.bf16.mxu0 %v738
    %992 = vmatpush1.bf16.msra.mxu0 %v737
    %993 = vmatprep.subr.bf16.mxu0 %v744
    %994 = vmatpush1.bf16.msra.mxu0 %v743
    %995 = vmatprep.subr.bf16.mxu0 %v750
    %996 = vmatpush1.bf16.msra.mxu0 %v749
    %997 = vmatprep.subr.bf16.mxu0 %v756
    %998 = vmatpush1.bf16.msra.mxu0 %v755
    %999 = vmatprep.subr.bf16.mxu0 %v762
    %1000 = vmatpush1.bf16.msra.mxu0 %v761
    %1001 = vmatprep.subr.bf16.mxu0 %v768
    %1002 = vmatpush1.bf16.msra.mxu0 %v767
    %1003 = vmatprep.subr.bf16.mxu0 %v774
    %1004 = vmatpush1.bf16.msra.mxu0 %v773
    %1005 = vmatprep.subr.bf16.mxu0 %v780
    %1006 = vmatpush1.bf16.msra.mxu0 %v779
    %1007 = vmatprep.subr.bf16.mxu0 %v786
    %1008 = vmatpush1.bf16.msra.mxu0 %v785
    %1009 = vmatprep.subr.bf16.mxu0 %v792
    %1010 = vmatpush1.bf16.msra.mxu0 %v791
    %1011 = vmatprep.subr.bf16.mxu0 %v798
    %1012 = vmatpush1.bf16.msra.mxu0 %v797
    %1013 = vmatprep.subr.bf16.mxu0 %v804
    %1014 = vmatpush1.bf16.msra.mxu0 %v803
    %1015 = vmatprep.mubr.bf16.mxu0 %v292
    %1016 = vmatmul.mubr.bf16.gmra.mrb[0].mxu0 %v291
    %v1017 = vpop.f32.mrb[0].mxu0
    %v1018 = vadd.f32 %v410, %v1017
    %v1019 = vpop.f32.mrb[0].mxu0
    %v1020 = vadd.f32 %v414, %v1019
    %v1021 = vpop.f32.mrb[0].mxu0
    %v1022 = vpop.f32.mrb[0].mxu0
    %1023 = vdwg.mxu0
    %v1024 = vld [vmem:[#allocation9] sm:$0xff]
    %v1025 = vld [vmem:[#allocation9 + $0x8] sm:$0xff]
    %v1026 = vld [vmem:[#allocation9 + $0x10] sm:$0xff]
    %v1027 = vld [vmem:[#allocation9 + $0x18] sm:$0xff]
    %v1028 = vld [vmem:[#allocation9 + $0x20] sm:$0xff]
    %v1029 = vld [vmem:[#allocation9 + $0x28] sm:$0xff]
    %v1030 = vld [vmem:[#allocation9 + $0x30] sm:$0xff]
    %v1031 = vld [vmem:[#allocation9 + $0x38] sm:$0xff]
    %v1032 = vld [vmem:[#allocation9 + $0x40] sm:$0xff]
    %v1033 = vld [vmem:[#allocation9 + $0x48] sm:$0xff]
    %v1034 = vld [vmem:[#allocation9 + $0x50] sm:$0xff]
    %v1035 = vld [vmem:[#allocation9 + $0x58] sm:$0xff]
    %v1036 = vld [vmem:[#allocation9 + $0x60] sm:$0xff]
    %v1037 = vld [vmem:[#allocation9 + $0x68] sm:$0xff]
    %v1038 = vld [vmem:[#allocation9 + $0x70] sm:$0xff]
    %v1039 = vld [vmem:[#allocation9 + $0x78] sm:$0xff]
    %v1040 = vld [vmem:[#allocation9 + $0x80] sm:$0xff]
    %v1041 = vld [vmem:[#allocation9 + $0x88] sm:$0xff]
    %v1042 = vld [vmem:[#allocation9 + $0x90] sm:$0xff]
    %v1043 = vld [vmem:[#allocation9 + $0x98] sm:$0xff]
    %v1044 = vld [vmem:[#allocation9 + $0xa0] sm:$0xff]
    %v1045 = vld [vmem:[#allocation9 + $0xa8] sm:$0xff]
    %v1046 = vld [vmem:[#allocation9 + $0xb0] sm:$0xff]
    %v1047 = vld [vmem:[#allocation9 + $0xb8] sm:$0xff]
    %v1048 = vld [vmem:[#allocation9 + $0xc0] sm:$0xff]
    %v1049 = vld [vmem:[#allocation9 + $0xc8] sm:$0xff]
    %v1050 = vld [vmem:[#allocation9 + $0xd0] sm:$0xff]
    %v1051 = vld [vmem:[#allocation9 + $0xd8] sm:$0xff]
    %v1052 = vld [vmem:[#allocation9 + $0xe0] sm:$0xff]
    %v1053 = vld [vmem:[#allocation9 + $0xe8] sm:$0xff]
    %v1054 = vld [vmem:[#allocation9 + $0xf0] sm:$0xff]
    %v1055 = vld [vmem:[#allocation9 + $0xf8] sm:$0xff]
    %v1056 = vld [vmem:[#allocation9 + $0x100] sm:$0xff]
    %v1057 = vld [vmem:[#allocation9 + $0x108] sm:$0xff]
    %v1058 = vld [vmem:[#allocation9 + $0x110] sm:$0xff]
    %v1059 = vld [vmem:[#allocation9 + $0x118] sm:$0xff]
    %v1060 = vld [vmem:[#allocation9 + $0x120] sm:$0xff]
    %v1061 = vld [vmem:[#allocation9 + $0x128] sm:$0xff]
    %v1062 = vld [vmem:[#allocation9 + $0x130] sm:$0xff]
    %v1063 = vld [vmem:[#allocation9 + $0x138] sm:$0xff]
    %v1064 = vld [vmem:[#allocation9 + $0x140] sm:$0xff]
    %v1065 = vld [vmem:[#allocation9 + $0x148] sm:$0xff]
    %v1066 = vld [vmem:[#allocation9 + $0x150] sm:$0xff]
    %v1067 = vld [vmem:[#allocation9 + $0x158] sm:$0xff]
    %v1068 = vld [vmem:[#allocation9 + $0x160] sm:$0xff]
    %v1069 = vld [vmem:[#allocation9 + $0x168] sm:$0xff]
    %v1070 = vld [vmem:[#allocation9 + $0x170] sm:$0xff]
    %v1071 = vld [vmem:[#allocation9 + $0x178] sm:$0xff]
    %v1072 = vld [vmem:[#allocation9 + $0x180] sm:$0xff]
    %v1073 = vld [vmem:[#allocation9 + $0x188] sm:$0xff]
    %v1074 = vld [vmem:[#allocation9 + $0x190] sm:$0xff]
    %v1075 = vld [vmem:[#allocation9 + $0x198] sm:$0xff]
    %v1076 = vld [vmem:[#allocation9 + $0x1a0] sm:$0xff]
    %v1077 = vld [vmem:[#allocation9 + $0x1a8] sm:$0xff]
    %v1078 = vld [vmem:[#allocation9 + $0x1b0] sm:$0xff]
    %v1079 = vld [vmem:[#allocation9 + $0x1b8] sm:$0xff]
    %v1080 = vld [vmem:[#allocation9 + $0x1c0] sm:$0xff]
    %v1081 = vld [vmem:[#allocation9 + $0x1c8] sm:$0xff]
    %v1082 = vld [vmem:[#allocation9 + $0x1d0] sm:$0xff]
    %v1083 = vld [vmem:[#allocation9 + $0x1d8] sm:$0xff]
    %v1084 = vld [vmem:[#allocation9 + $0x1e0] sm:$0xff]
    %v1085 = vld [vmem:[#allocation9 + $0x1e8] sm:$0xff]
    %v1086 = vld [vmem:[#allocation9 + $0x1f0] sm:$0xff]
    %v1087 = vld [vmem:[#allocation9 + $0x1f8] sm:$0xff]
    %v1088 = vld [vmem:[#allocation9 + $0x200] sm:$0xff]
    %v1089 = vld [vmem:[#allocation9 + $0x208] sm:$0xff]
    %v1090 = vld [vmem:[#allocation9 + $0x210] sm:$0xff]
    %v1091 = vld [vmem:[#allocation9 + $0x218] sm:$0xff]
    %v1092 = vld [vmem:[#allocation9 + $0x220] sm:$0xff]
    %v1093 = vld [vmem:[#allocation9 + $0x228] sm:$0xff]
    %v1094 = vld [vmem:[#allocation9 + $0x230] sm:$0xff]
    %v1095 = vld [vmem:[#allocation9 + $0x238] sm:$0xff]
    %v1096 = vld [vmem:[#allocation9 + $0x240] sm:$0xff]
    %v1097 = vld [vmem:[#allocation9 + $0x248] sm:$0xff]
    %v1098 = vld [vmem:[#allocation9 + $0x250] sm:$0xff]
    %v1099 = vld [vmem:[#allocation9 + $0x258] sm:$0xff]
    %v1100 = vld [vmem:[#allocation9 + $0x260] sm:$0xff]
    %v1101 = vld [vmem:[#allocation9 + $0x268] sm:$0xff]
    %v1102 = vld [vmem:[#allocation9 + $0x270] sm:$0xff]
    %v1103 = vld [vmem:[#allocation9 + $0x278] sm:$0xff]
    %v1104 = vld [vmem:[#allocation9 + $0x280] sm:$0xff]
    %v1105 = vld [vmem:[#allocation9 + $0x288] sm:$0xff]
    %v1106 = vld [vmem:[#allocation9 + $0x290] sm:$0xff]
    %v1107 = vld [vmem:[#allocation9 + $0x298] sm:$0xff]
    %v1108 = vld [vmem:[#allocation9 + $0x2a0] sm:$0xff]
    %v1109 = vld [vmem:[#allocation9 + $0x2a8] sm:$0xff]
    %v1110 = vld [vmem:[#allocation9 + $0x2b0] sm:$0xff]
    %v1111 = vld [vmem:[#allocation9 + $0x2b8] sm:$0xff]
    %v1112 = vld [vmem:[#allocation9 + $0x2c0] sm:$0xff]
    %v1113 = vld [vmem:[#allocation9 + $0x2c8] sm:$0xff]
    %v1114 = vld [vmem:[#allocation9 + $0x2d0] sm:$0xff]
    %v1115 = vld [vmem:[#allocation9 + $0x2d8] sm:$0xff]
    %v1116 = vld [vmem:[#allocation9 + $0x2e0] sm:$0xff]
    %v1117 = vld [vmem:[#allocation9 + $0x2e8] sm:$0xff]
    %v1118 = vld [vmem:[#allocation9 + $0x2f0] sm:$0xff]
    %v1119 = vld [vmem:[#allocation9 + $0x2f8] sm:$0xff]
    %v1120 = vld [vmem:[%s6] sm:$0x3f]
    %v1121 = vld [vmem:[%s2] sm:$0x3]
    %v1123 = vlaneseq
    %v1124 = vshrl.u32 %v1123, 7
    %v1125 = vsub.s32 0, %v1124
    %v1126 = vrot.slane %v1121, %v1125
    %v1127 = vlaneseq
    %v1128 = vshrl.u32 %v1127, 7
    %v1129 = vsub.s32 1, %v1128
    %v1130 = vrot.slane %v1121, %v1129
    %v1133 = vpack.c.bf16 %v1126, %v1126
    %v1134 = vpack.c.bf16 %v1130, %v1130
    %v1231 = vunpack.c.l.b16 %v1024
    %v1232 = vunpack.c.h.b16 %v1024
    %v1233 = vunpack.c.l.b16 %v1025
    %v1234 = vunpack.c.h.b16 %v1025
    %v1235 = vunpack.c.l.b16 %v1026
    %v1236 = vunpack.c.h.b16 %v1026
    %v1237 = vunpack.c.l.b16 %v1027
    %v1238 = vunpack.c.h.b16 %v1027
    %v1239 = vunpack.c.l.b16 %v1028
    %v1240 = vunpack.c.h.b16 %v1028
    %v1241 = vunpack.c.l.b16 %v1029
    %v1242 = vunpack.c.h.b16 %v1029
    %v1243 = vunpack.c.l.b16 %v1030
    %v1244 = vunpack.c.h.b16 %v1030
    %v1245 = vunpack.c.l.b16 %v1031
    %v1246 = vunpack.c.h.b16 %v1031
    %v1247 = vunpack.c.l.b16 %v1032
    %v1248 = vunpack.c.h.b16 %v1032
    %v1249 = vunpack.c.l.b16 %v1033
    %v1250 = vunpack.c.h.b16 %v1033
    %v1251 = vunpack.c.l.b16 %v1034
    %v1252 = vunpack.c.h.b16 %v1034
    %v1253 = vunpack.c.l.b16 %v1035
    %v1254 = vunpack.c.h.b16 %v1035
    %v1255 = vunpack.c.l.b16 %v1036
    %v1256 = vunpack.c.h.b16 %v1036
    %v1257 = vunpack.c.l.b16 %v1037
    %v1258 = vunpack.c.h.b16 %v1037
    %v1259 = vunpack.c.l.b16 %v1038
    %v1260 = vunpack.c.h.b16 %v1038
    %v1261 = vunpack.c.l.b16 %v1039
    %v1262 = vunpack.c.h.b16 %v1039
    %v1263 = vunpack.c.l.b16 %v1040
    %v1264 = vunpack.c.h.b16 %v1040
    %v1265 = vunpack.c.l.b16 %v1041
    %v1266 = vunpack.c.h.b16 %v1041
    %v1267 = vunpack.c.l.b16 %v1042
    %v1268 = vunpack.c.h.b16 %v1042
    %v1269 = vunpack.c.l.b16 %v1043
    %v1270 = vunpack.c.h.b16 %v1043
    %v1271 = vunpack.c.l.b16 %v1044
    %v1272 = vunpack.c.h.b16 %v1044
    %v1273 = vunpack.c.l.b16 %v1045
    %v1274 = vunpack.c.h.b16 %v1045
    %v1275 = vunpack.c.l.b16 %v1046
    %v1276 = vunpack.c.h.b16 %v1046
    %v1277 = vunpack.c.l.b16 %v1047
    %v1278 = vunpack.c.h.b16 %v1047
    %v1279 = vunpack.c.l.b16 %v1048
    %v1280 = vunpack.c.h.b16 %v1048
    %v1281 = vunpack.c.l.b16 %v1049
    %v1282 = vunpack.c.h.b16 %v1049
    %v1283 = vunpack.c.l.b16 %v1050
    %v1284 = vunpack.c.h.b16 %v1050
    %v1285 = vunpack.c.l.b16 %v1051
    %v1286 = vunpack.c.h.b16 %v1051
    %v1287 = vunpack.c.l.b16 %v1052
    %v1288 = vunpack.c.h.b16 %v1052
    %v1289 = vunpack.c.l.b16 %v1053
    %v1290 = vunpack.c.h.b16 %v1053
    %v1291 = vunpack.c.l.b16 %v1054
    %v1292 = vunpack.c.h.b16 %v1054
    %v1293 = vunpack.c.l.b16 %v1055
    %v1294 = vunpack.c.h.b16 %v1055
    %v1295 = vunpack.c.l.b16 %v1056
    %v1296 = vunpack.c.h.b16 %v1056
    %v1297 = vunpack.c.l.b16 %v1057
    %v1298 = vunpack.c.h.b16 %v1057
    %v1299 = vunpack.c.l.b16 %v1058
    %v1300 = vunpack.c.h.b16 %v1058
    %v1301 = vunpack.c.l.b16 %v1059
    %v1302 = vunpack.c.h.b16 %v1059
    %v1303 = vunpack.c.l.b16 %v1060
    %v1304 = vunpack.c.h.b16 %v1060
    %v1305 = vunpack.c.l.b16 %v1061
    %v1306 = vunpack.c.h.b16 %v1061
    %v1307 = vunpack.c.l.b16 %v1062
    %v1308 = vunpack.c.h.b16 %v1062
    %v1309 = vunpack.c.l.b16 %v1063
    %v1310 = vunpack.c.h.b16 %v1063
    %v1311 = vunpack.c.l.b16 %v1064
    %v1312 = vunpack.c.h.b16 %v1064
    %v1313 = vunpack.c.l.b16 %v1065
    %v1314 = vunpack.c.h.b16 %v1065
    %v1315 = vunpack.c.l.b16 %v1066
    %v1316 = vunpack.c.h.b16 %v1066
    %v1317 = vunpack.c.l.b16 %v1067
    %v1318 = vunpack.c.h.b16 %v1067
    %v1319 = vunpack.c.l.b16 %v1068
    %v1320 = vunpack.c.h.b16 %v1068
    %v1321 = vunpack.c.l.b16 %v1069
    %v1322 = vunpack.c.h.b16 %v1069
    %v1323 = vunpack.c.l.b16 %v1070
    %v1324 = vunpack.c.h.b16 %v1070
    %v1325 = vunpack.c.l.b16 %v1071
    %v1326 = vunpack.c.h.b16 %v1071
    %v1327 = vunpack.c.l.b16 %v1072
    %v1328 = vunpack.c.h.b16 %v1072
    %v1329 = vunpack.c.l.b16 %v1073
    %v1330 = vunpack.c.h.b16 %v1073
    %v1331 = vunpack.c.l.b16 %v1074
    %v1332 = vunpack.c.h.b16 %v1074
    %v1333 = vunpack.c.l.b16 %v1075
    %v1334 = vunpack.c.h.b16 %v1075
    %v1335 = vunpack.c.l.b16 %v1076
    %v1336 = vunpack.c.h.b16 %v1076
    %v1337 = vunpack.c.l.b16 %v1077
    %v1338 = vunpack.c.h.b16 %v1077
    %v1339 = vunpack.c.l.b16 %v1078
    %v1340 = vunpack.c.h.b16 %v1078
    %v1341 = vunpack.c.l.b16 %v1079
    %v1342 = vunpack.c.h.b16 %v1079
    %v1343 = vunpack.c.l.b16 %v1080
    %v1344 = vunpack.c.h.b16 %v1080
    %v1345 = vunpack.c.l.b16 %v1081
    %v1346 = vunpack.c.h.b16 %v1081
    %v1347 = vunpack.c.l.b16 %v1082
    %v1348 = vunpack.c.h.b16 %v1082
    %v1349 = vunpack.c.l.b16 %v1083
    %v1350 = vunpack.c.h.b16 %v1083
    %v1351 = vunpack.c.l.b16 %v1084
    %v1352 = vunpack.c.h.b16 %v1084
    %v1353 = vunpack.c.l.b16 %v1085
    %v1354 = vunpack.c.h.b16 %v1085
    %v1355 = vunpack.c.l.b16 %v1086
    %v1356 = vunpack.c.h.b16 %v1086
    %v1357 = vunpack.c.l.b16 %v1087
    %v1358 = vunpack.c.h.b16 %v1087
    %v1359 = vunpack.c.l.b16 %v1088
    %v1360 = vunpack.c.h.b16 %v1088
    %v1361 = vunpack.c.l.b16 %v1089
    %v1362 = vunpack.c.h.b16 %v1089
    %v1363 = vunpack.c.l.b16 %v1090
    %v1364 = vunpack.c.h.b16 %v1090
    %v1365 = vunpack.c.l.b16 %v1091
    %v1366 = vunpack.c.h.b16 %v1091
    %v1367 = vunpack.c.l.b16 %v1092
    %v1368 = vunpack.c.h.b16 %v1092
    %v1369 = vunpack.c.l.b16 %v1093
    %v1370 = vunpack.c.h.b16 %v1093
    %v1371 = vunpack.c.l.b16 %v1094
    %v1372 = vunpack.c.h.b16 %v1094
    %v1373 = vunpack.c.l.b16 %v1095
    %v1374 = vunpack.c.h.b16 %v1095
    %v1375 = vunpack.c.l.b16 %v1096
    %v1376 = vunpack.c.h.b16 %v1096
    %v1377 = vunpack.c.l.b16 %v1097
    %v1378 = vunpack.c.h.b16 %v1097
    %v1379 = vunpack.c.l.b16 %v1098
    %v1380 = vunpack.c.h.b16 %v1098
    %v1381 = vunpack.c.l.b16 %v1099
    %v1382 = vunpack.c.h.b16 %v1099
    %v1383 = vunpack.c.l.b16 %v1100
    %v1384 = vunpack.c.h.b16 %v1100
    %v1385 = vunpack.c.l.b16 %v1101
    %v1386 = vunpack.c.h.b16 %v1101
    %v1387 = vunpack.c.l.b16 %v1102
    %v1388 = vunpack.c.h.b16 %v1102
    %v1389 = vunpack.c.l.b16 %v1103
    %v1390 = vunpack.c.h.b16 %v1103
    %v1391 = vunpack.c.l.b16 %v1104
    %v1392 = vunpack.c.h.b16 %v1104
    %v1393 = vunpack.c.l.b16 %v1105
    %v1394 = vunpack.c.h.b16 %v1105
    %v1395 = vunpack.c.l.b16 %v1106
    %v1396 = vunpack.c.h.b16 %v1106
    %v1397 = vunpack.c.l.b16 %v1107
    %v1398 = vunpack.c.h.b16 %v1107
    %v1399 = vunpack.c.l.b16 %v1108
    %v1400 = vunpack.c.h.b16 %v1108
    %v1401 = vunpack.c.l.b16 %v1109
    %v1402 = vunpack.c.h.b16 %v1109
    %v1403 = vunpack.c.l.b16 %v1110
    %v1404 = vunpack.c.h.b16 %v1110
    %v1405 = vunpack.c.l.b16 %v1111
    %v1406 = vunpack.c.h.b16 %v1111
    %v1407 = vunpack.c.l.b16 %v1112
    %v1408 = vunpack.c.h.b16 %v1112
    %v1409 = vunpack.c.l.b16 %v1113
    %v1410 = vunpack.c.h.b16 %v1113
    %v1411 = vunpack.c.l.b16 %v1114
    %v1412 = vunpack.c.h.b16 %v1114
    %v1413 = vunpack.c.l.b16 %v1115
    %v1414 = vunpack.c.h.b16 %v1115
    %v1415 = vunpack.c.l.b16 %v1116
    %v1416 = vunpack.c.h.b16 %v1116
    %v1417 = vunpack.c.l.b16 %v1117
    %v1418 = vunpack.c.h.b16 %v1117
    %v1419 = vunpack.c.l.b16 %v1118
    %v1420 = vunpack.c.h.b16 %v1118
    %v1421 = vunpack.c.l.b16 %v1119
    %v1422 = vunpack.c.h.b16 %v1119
    %v1423 = vpack.c.b16 %v1237, %v1231
    %v1424 = vpack.c.b16 %v1238, %v1232
    %v1425 = vpack.c.b16 %v1239, %v1233
    %v1426 = vpack.c.b16 %v1240, %v1234
    %v1427 = vpack.c.b16 %v1241, %v1235
    %v1428 = vpack.c.b16 %v1242, %v1236
    %v1429 = vpack.c.b16 %v1249, %v1243
    %v1430 = vpack.c.b16 %v1250, %v1244
    %v1431 = vpack.c.b16 %v1251, %v1245
    %v1432 = vpack.c.b16 %v1252, %v1246
    %v1433 = vpack.c.b16 %v1253, %v1247
    %v1434 = vpack.c.b16 %v1254, %v1248
    %v1435 = vpack.c.b16 %v1261, %v1255
    %v1436 = vpack.c.b16 %v1262, %v1256
    %v1437 = vpack.c.b16 %v1263, %v1257
    %v1438 = vpack.c.b16 %v1264, %v1258
    %v1439 = vpack.c.b16 %v1265, %v1259
    %v1440 = vpack.c.b16 %v1266, %v1260
    %v1441 = vpack.c.b16 %v1273, %v1267
    %v1442 = vpack.c.b16 %v1274, %v1268
    %v1443 = vpack.c.b16 %v1275, %v1269
    %v1444 = vpack.c.b16 %v1276, %v1270
    %v1445 = vpack.c.b16 %v1277, %v1271
    %v1446 = vpack.c.b16 %v1278, %v1272
    %v1447 = vpack.c.b16 %v1285, %v1279
    %v1448 = vpack.c.b16 %v1286, %v1280
    %v1449 = vpack.c.b16 %v1287, %v1281
    %v1450 = vpack.c.b16 %v1288, %v1282
    %v1451 = vpack.c.b16 %v1289, %v1283
    %v1452 = vpack.c.b16 %v1290, %v1284
    %v1453 = vpack.c.b16 %v1297, %v1291
    %v1454 = vpack.c.b16 %v1298, %v1292
    %v1455 = vpack.c.b16 %v1299, %v1293
    %v1456 = vpack.c.b16 %v1300, %v1294
    %v1457 = vpack.c.b16 %v1301, %v1295
    %v1458 = vpack.c.b16 %v1302, %v1296
    %v1459 = vpack.c.b16 %v1309, %v1303
    %v1460 = vpack.c.b16 %v1310, %v1304
    %v1461 = vpack.c.b16 %v1311, %v1305
    %v1462 = vpack.c.b16 %v1312, %v1306
    %v1463 = vpack.c.b16 %v1313, %v1307
    %v1464 = vpack.c.b16 %v1314, %v1308
    %v1465 = vpack.c.b16 %v1321, %v1315
    %v1466 = vpack.c.b16 %v1322, %v1316
    %v1467 = vpack.c.b16 %v1323, %v1317
    %v1468 = vpack.c.b16 %v1324, %v1318
    %v1469 = vpack.c.b16 %v1325, %v1319
    %v1470 = vpack.c.b16 %v1326, %v1320
    %v1471 = vpack.c.b16 %v1333, %v1327
    %v1472 = vpack.c.b16 %v1334, %v1328
    %v1473 = vpack.c.b16 %v1335, %v1329
    %v1474 = vpack.c.b16 %v1336, %v1330
    %v1475 = vpack.c.b16 %v1337, %v1331
    %v1476 = vpack.c.b16 %v1338, %v1332
    %v1477 = vpack.c.b16 %v1345, %v1339
    %v1478 = vpack.c.b16 %v1346, %v1340
    %v1479 = vpack.c.b16 %v1347, %v1341
    %v1480 = vpack.c.b16 %v1348, %v1342
    %v1481 = vpack.c.b16 %v1349, %v1343
    %v1482 = vpack.c.b16 %v1350, %v1344
    %v1483 = vpack.c.b16 %v1357, %v1351
    %v1484 = vpack.c.b16 %v1358, %v1352
    %v1485 = vpack.c.b16 %v1359, %v1353
    %v1486 = vpack.c.b16 %v1360, %v1354
    %v1487 = vpack.c.b16 %v1361, %v1355
    %v1488 = vpack.c.b16 %v1362, %v1356
    %v1489 = vpack.c.b16 %v1369, %v1363
    %v1490 = vpack.c.b16 %v1370, %v1364
    %v1491 = vpack.c.b16 %v1371, %v1365
    %v1492 = vpack.c.b16 %v1372, %v1366
    %v1493 = vpack.c.b16 %v1373, %v1367
    %v1494 = vpack.c.b16 %v1374, %v1368
    %v1495 = vpack.c.b16 %v1381, %v1375
    %v1496 = vpack.c.b16 %v1382, %v1376
    %v1497 = vpack.c.b16 %v1383, %v1377
    %v1498 = vpack.c.b16 %v1384, %v1378
    %v1499 = vpack.c.b16 %v1385, %v1379
    %v1500 = vpack.c.b16 %v1386, %v1380
    %v1501 = vpack.c.b16 %v1393, %v1387
    %v1502 = vpack.c.b16 %v1394, %v1388
    %v1503 = vpack.c.b16 %v1395, %v1389
    %v1504 = vpack.c.b16 %v1396, %v1390
    %v1505 = vpack.c.b16 %v1397, %v1391
    %v1506 = vpack.c.b16 %v1398, %v1392
    %v1507 = vpack.c.b16 %v1405, %v1399
    %v1508 = vpack.c.b16 %v1406, %v1400
    %v1509 = vpack.c.b16 %v1407, %v1401
    %v1510 = vpack.c.b16 %v1408, %v1402
    %v1511 = vpack.c.b16 %v1409, %v1403
    %v1512 = vpack.c.b16 %v1410, %v1404
    %v1513 = vpack.c.b16 %v1417, %v1411
    %v1514 = vpack.c.b16 %v1418, %v1412
    %v1515 = vpack.c.b16 %v1419, %v1413
    %v1516 = vpack.c.b16 %v1420, %v1414
    %v1517 = vpack.c.b16 %v1421, %v1415
    %v1518 = vpack.c.b16 %v1422, %v1416
    %v1616 = vlaneseq
    %v1617 = vshrl.u32 %v1616, 7
    %v1618 = vsub.s32 0, %v1617
    %v1619 = vrot.slane %v1120, %v1618
    %v1620 = vlaneseq
    %v1621 = vshrl.u32 %v1620, 7
    %v1622 = vsub.s32 1, %v1621
    %v1623 = vrot.slane %v1120, %v1622
    %v1624 = vlaneseq
    %v1625 = vshrl.u32 %v1624, 7
    %v1626 = vsub.s32 2, %v1625
    %v1627 = vrot.slane %v1120, %v1626
    %v1628 = vlaneseq
    %v1629 = vshrl.u32 %v1628, 7
    %v1630 = vsub.s32 3, %v1629
    %v1631 = vrot.slane %v1120, %v1630
    %v1632 = vlaneseq
    %v1633 = vshrl.u32 %v1632, 7
    %v1634 = vsub.s32 4, %v1633
    %v1635 = vrot.slane %v1120, %v1634
    %v1636 = vlaneseq
    %v1637 = vshrl.u32 %v1636, 7
    %v1638 = vsub.s32 5, %v1637
    %v1639 = vrot.slane %v1120, %v1638
    %1646 = vmatprep.subr.bf16.mxu0 %v1424
    %1647 = vmatpush1.bf16.msra.mxu0 %v1423
    %1648 = vmatprep.subr.bf16.mxu0 %v1430
    %1649 = vmatpush1.bf16.msra.mxu0 %v1429
    %1650 = vmatprep.subr.bf16.mxu0 %v1436
    %1651 = vmatpush1.bf16.msra.mxu0 %v1435
    %1652 = vmatprep.subr.bf16.mxu0 %v1442
    %1653 = vmatpush1.bf16.msra.mxu0 %v1441
    %1654 = vmatprep.subr.bf16.mxu0 %v1448
    %1655 = vmatpush1.bf16.msra.mxu0 %v1447
    %1656 = vmatprep.subr.bf16.mxu0 %v1454
    %1657 = vmatpush1.bf16.msra.mxu0 %v1453
    %1658 = vmatprep.subr.bf16.mxu0 %v1460
    %1659 = vmatpush1.bf16.msra.mxu0 %v1459
    %1660 = vmatprep.subr.bf16.mxu0 %v1466
    %1661 = vmatpush1.bf16.msra.mxu0 %v1465
    %1662 = vmatprep.subr.bf16.mxu0 %v1472
    %1663 = vmatpush1.bf16.msra.mxu0 %v1471
    %1664 = vmatprep.subr.bf16.mxu0 %v1478
    %1665 = vmatpush1.bf16.msra.mxu0 %v1477
    %1666 = vmatprep.subr.bf16.mxu0 %v1484
    %1667 = vmatpush1.bf16.msra.mxu0 %v1483
    %1668 = vmatprep.subr.bf16.mxu0 %v1490
    %1669 = vmatpush1.bf16.msra.mxu0 %v1489
    %1670 = vmatprep.subr.bf16.mxu0 %v1496
    %1671 = vmatpush1.bf16.msra.mxu0 %v1495
    %1672 = vmatprep.subr.bf16.mxu0 %v1502
    %1673 = vmatpush1.bf16.msra.mxu0 %v1501
    %1674 = vmatprep.subr.bf16.mxu0 %v1508
    %1675 = vmatpush1.bf16.msra.mxu0 %v1507
    %1676 = vmatprep.subr.bf16.mxu0 %v1514
    %1677 = vmatpush1.bf16.msra.mxu0 %v1513
    %1678 = vmatprep.mubr.bf16.mxu0 %v1134
    %1679 = vmatmul.mubr.bf16.gmra.mrb[0].mxu0 %v1133
    %v1680 = vpop.f32.mrb[0].mxu0
    %v1681 = vadd.f32 %v1619, %v1680
    %v1682 = vpop.f32.mrb[0].mxu0
    %v1683 = vadd.f32 %v1623, %v1682
    %v1684 = vpop.f32.mrb[0].mxu0
    %v1685 = vpop.f32.mrb[0].mxu0
    %1686 = vdwg.mxu0
    %1687 = vmatprep.subr.bf16.mxu0 %v1426
    %1688 = vmatpush1.bf16.msra.mxu0 %v1425
    %1689 = vmatprep.subr.bf16.mxu0 %v1432
    %1690 = vmatpush1.bf16.msra.mxu0 %v1431
    %1691 = vmatprep.subr.bf16.mxu0 %v1438
    %1692 = vmatpush1.bf16.msra.mxu0 %v1437
    %1693 = vmatprep.subr.bf16.mxu0 %v1444
    %1694 = vmatpush1.bf16.msra.mxu0 %v1443
    %1695 = vmatprep.subr.bf16.mxu0 %v1450
    %1696 = vmatpush1.bf16.msra.mxu0 %v1449
    %1697 = vmatprep.subr.bf16.mxu0 %v1456
    %1698 = vmatpush1.bf16.msra.mxu0 %v1455
    %1699 = vmatprep.subr.bf16.mxu0 %v1462
    %1700 = vmatpush1.bf16.msra.mxu0 %v1461
    %1701 = vmatprep.subr.bf16.mxu0 %v1468
    %1702 = vmatpush1.bf16.msra.mxu0 %v1467
    %1703 = vmatprep.subr.bf16.mxu0 %v1474
    %1704 = vmatpush1.bf16.msra.mxu0 %v1473
    %1705 = vmatprep.subr.bf16.mxu0 %v1480
    %1706 = vmatpush1.bf16.msra.mxu0 %v1479
    %1707 = vmatprep.subr.bf16.mxu0 %v1486
    %1708 = vmatpush1.bf16.msra.mxu0 %v1485
    %1709 = vmatprep.subr.bf16.mxu0 %v1492
    %1710 = vmatpush1.bf16.msra.mxu0 %v1491
    %1711 = vmatprep.subr.bf16.mxu0 %v1498
    %1712 = vmatpush1.bf16.msra.mxu0 %v1497
    %1713 = vmatprep.subr.bf16.mxu0 %v1504
    %1714 = vmatpush1.bf16.msra.mxu0 %v1503
    %1715 = vmatprep.subr.bf16.mxu0 %v1510
    %1716 = vmatpush1.bf16.msra.mxu0 %v1509
    %1717 = vmatprep.subr.bf16.mxu0 %v1516
    %1718 = vmatpush1.bf16.msra.mxu0 %v1515
    %1719 = vmatprep.mubr.bf16.mxu0 %v1134
    %1720 = vmatmul.mubr.bf16.gmra.mrb[0].mxu0 %v1133
    %v1721 = vpop.f32.mrb[0].mxu0
    %v1722 = vadd.f32 %v1627, %v1721
    %v1723 = vpop.f32.mrb[0].mxu0
    %v1724 = vadd.f32 %v1631, %v1723
    %v1725 = vpop.f32.mrb[0].mxu0
    %v1726 = vpop.f32.mrb[0].mxu0
    %1727 = vdwg.mxu0
    %1728 = vmatprep.subr.bf16.mxu0 %v1428
    %1729 = vmatpush1.bf16.msra.mxu0 %v1427
    %1730 = vmatprep.subr.bf16.mxu0 %v1434
    %1731 = vmatpush1.bf16.msra.mxu0 %v1433
    %1732 = vmatprep.subr.bf16.mxu0 %v1440
    %1733 = vmatpush1.bf16.msra.mxu0 %v1439
    %1734 = vmatprep.subr.bf16.mxu0 %v1446
    %1735 = vmatpush1.bf16.msra.mxu0 %v1445
    %1736 = vmatprep.subr.bf16.mxu0 %v1452
    %1737 = vmatpush1.bf16.msra.mxu0 %v1451
    %1738 = vmatprep.subr.bf16.mxu0 %v1458
    %1739 = vmatpush1.bf16.msra.mxu0 %v1457
    %1740 = vmatprep.subr.bf16.mxu0 %v1464
    %1741 = vmatpush1.bf16.msra.mxu0 %v1463
    %1742 = vmatprep.subr.bf16.mxu0 %v1470
    %1743 = vmatpush1.bf16.msra.mxu0 %v1469
    %1744 = vmatprep.subr.bf16.mxu0 %v1476
    %1745 = vmatpush1.bf16.msra.mxu0 %v1475
    %1746 = vmatprep.subr.bf16.mxu0 %v1482
    %1747 = vmatpush1.bf16.msra.mxu0 %v1481
    %1748 = vmatprep.subr.bf16.mxu0 %v1488
    %1749 = vmatpush1.bf16.msra.mxu0 %v1487
    %1750 = vmatprep.subr.bf16.mxu0 %v1494
    %1751 = vmatpush1.bf16.msra.mxu0 %v1493
    %1752 = vmatprep.subr.bf16.mxu0 %v1500
    %1753 = vmatpush1.bf16.msra.mxu0 %v1499
    %1754 = vmatprep.subr.bf16.mxu0 %v1506
    %1755 = vmatpush1.bf16.msra.mxu0 %v1505
    %1756 = vmatprep.subr.bf16.mxu0 %v1512
    %1757 = vmatpush1.bf16.msra.mxu0 %v1511
    %1758 = vmatprep.subr.bf16.mxu0 %v1518
    %1759 = vmatpush1.bf16.msra.mxu0 %v1517
    %1760 = vmatprep.mubr.bf16.mxu0 %v1134
    %1761 = vmatmul.mubr.bf16.gmra.mrb[0].mxu0 %v1133
    %v1762 = vpop.f32.mrb[0].mxu0
    %v1763 = vadd.f32 %v1635, %v1762
    %v1764 = vpop.f32.mrb[0].mxu0
    %v1765 = vadd.f32 %v1639, %v1764
    %v1766 = vpop.f32.mrb[0].mxu0
    %v1767 = vpop.f32.mrb[0].mxu0
    %1768 = vdwg.mxu0
    %v1769 = vadd.f32 %v936, %v1681
    %v1770 = vadd.f32 %v938, %v1683
    %v1771 = vxor.u32 %v1769, 2147483648
    %v1772 = vxor.u32 %v1770, 2147483648
    %v1773 = vmul.f32 %v1771, 1.442695
    %v1774 = vpow.pop %v1773
    %v1775 = vmul.f32 %v1772, 1.442695
    %v1776 = vpow.pop %v1775
    %v1777 = vadd.f32 %v1774, 1.0
    %v1778 = vadd.f32 %v1776, 1.0
    %v1779 = vrcp.pop %v1777
    %v1780 = vmul.f32 1.0, %v1779
    %v1781 = vrcp.pop %v1778
    %v1782 = vmul.f32 1.0, %v1781
    %v1783 = vadd.f32 %v977, %v1722
    %v1784 = vadd.f32 %v979, %v1724
    %v1785 = vxor.u32 %v1783, 2147483648
    %v1786 = vxor.u32 %v1784, 2147483648
    %v1787 = vmul.f32 %v1785, 1.442695
    %v1788 = vpow.pop %v1787
    %v1789 = vmul.f32 %v1786, 1.442695
    %v1790 = vpow.pop %v1789
    %v1791 = vadd.f32 %v1788, 1.0
    %v1792 = vadd.f32 %v1790, 1.0
    %v1793 = vrcp.pop %v1791
    %v1794 = vmul.f32 1.0, %v1793
    %v1795 = vrcp.pop %v1792
    %v1796 = vmul.f32 1.0, %v1795
    %v1797 = vmul.f32 %v1780, %v1763
    %v1798 = vmul.f32 %v1782, %v1765
    %v1799 = vadd.f32 %v1018, %v1797
    %v1800 = vadd.f32 %v1020, %v1798
    %v1801 = vtanh.pop %v1799
    %v1802 = vtanh.pop %v1800
    %v1803 = vsub.f32 1.0, %v1794
    %v1804 = vsub.f32 1.0, %v1796
    %v1805 = vmul.f32 %v1803, %v1801
    %v1806 = vmul.f32 %v1804, %v1802
    %v1807 = vmul.f32 %v1794, %v1126
    %v1808 = vmul.f32 %v1796, %v1130
    %v1809 = vadd.f32 %v1805, %v1807
    %v1810 = vadd.f32 %v1806, %v1808
    %v1811 = vpack.c.bf16 %v1809, %v1809
    %v1812 = vpack.c.bf16 %v1810, %v1810
    %1813 = vmatprep.subr.bf16.mxu0 %v1424
    %1814 = vmatpush1.bf16.msra.mxu0 %v1423
    %1815 = vmatprep.subr.bf16.mxu0 %v1430
    %1816 = vmatpush1.bf16.msra.mxu0 %v1429
    %1817 = vmatprep.subr.bf16.mxu0 %v1436
    %1818 = vmatpush1.bf16.msra.mxu0 %v1435
    %1819 = vmatprep.subr.bf16.mxu0 %v1442
    %1820 = vmatpush1.bf16.msra.mxu0 %v1441
    %1821 = vmatprep.subr.bf16.mxu0 %v1448
    %1822 = vmatpush1.bf16.msra.mxu0 %v1447
    %1823 = vmatprep.subr.bf16.mxu0 %v1454
    %1824 = vmatpush1.bf16.msra.mxu0 %v1453
    %1825 = vmatprep.subr.bf16.mxu0 %v1460
    %1826 = vmatpush1.bf16.msra.mxu0 %v1459
    %1827 = vmatprep.subr.bf16.mxu0 %v1466
    %1828 = vmatpush1.bf16.msra.mxu0 %v1465
    %1829 = vmatprep.subr.bf16.mxu0 %v1472
    %1830 = vmatpush1.bf16.msra.mxu0 %v1471
    %1831 = vmatprep.subr.bf16.mxu0 %v1478
    %1832 = vmatpush1.bf16.msra.mxu0 %v1477
    %1833 = vmatprep.subr.bf16.mxu0 %v1484
    %1834 = vmatpush1.bf16.msra.mxu0 %v1483
    %1835 = vmatprep.subr.bf16.mxu0 %v1490
    %1836 = vmatpush1.bf16.msra.mxu0 %v1489
    %1837 = vmatprep.subr.bf16.mxu0 %v1496
    %1838 = vmatpush1.bf16.msra.mxu0 %v1495
    %1839 = vmatprep.subr.bf16.mxu0 %v1502
    %1840 = vmatpush1.bf16.msra.mxu0 %v1501
    %1841 = vmatprep.subr.bf16.mxu0 %v1508
    %1842 = vmatpush1.bf16.msra.mxu0 %v1507
    %1843 = vmatprep.subr.bf16.mxu0 %v1514
    %1844 = vmatpush1.bf16.msra.mxu0 %v1513
    %1845 = vmatprep.mubr.bf16.mxu0 %v1812
    %1846 = vmatmul.mubr.bf16.gmra.mrb[0].mxu0 %v1811
    %v1847 = vpop.f32.mrb[0].mxu0
    %v1848 = vadd.f32 %v1619, %v1847
    %v1849 = vpop.f32.mrb[0].mxu0
    %v1850 = vadd.f32 %v1623, %v1849
    %v1851 = vpop.f32.mrb[0].mxu0
    %v1852 = vpop.f32.mrb[0].mxu0
    %1853 = vdwg.mxu0
    %1854 = vmatprep.subr.bf16.mxu0 %v1426
    %1855 = vmatpush1.bf16.msra.mxu0 %v1425
    %1856 = vmatprep.subr.bf16.mxu0 %v1432
    %1857 = vmatpush1.bf16.msra.mxu0 %v1431
    %1858 = vmatprep.subr.bf16.mxu0 %v1438
    %1859 = vmatpush1.bf16.msra.mxu0 %v1437
    %1860 = vmatprep.subr.bf16.mxu0 %v1444
    %1861 = vmatpush1.bf16.msra.mxu0 %v1443
    %1862 = vmatprep.subr.bf16.mxu0 %v1450
    %1863 = vmatpush1.bf16.msra.mxu0 %v1449
    %1864 = vmatprep.subr.bf16.mxu0 %v1456
    %1865 = vmatpush1.bf16.msra.mxu0 %v1455
    %1866 = vmatprep.subr.bf16.mxu0 %v1462
    %1867 = vmatpush1.bf16.msra.mxu0 %v1461
    %1868 = vmatprep.subr.bf16.mxu0 %v1468
    %1869 = vmatpush1.bf16.msra.mxu0 %v1467
    %1870 = vmatprep.subr.bf16.mxu0 %v1474
    %1871 = vmatpush1.bf16.msra.mxu0 %v1473
    %1872 = vmatprep.subr.bf16.mxu0 %v1480
    %1873 = vmatpush1.bf16.msra.mxu0 %v1479
    %1874 = vmatprep.subr.bf16.mxu0 %v1486
    %1875 = vmatpush1.bf16.msra.mxu0 %v1485
    %1876 = vmatprep.subr.bf16.mxu0 %v1492
    %1877 = vmatpush1.bf16.msra.mxu0 %v1491
    %1878 = vmatprep.subr.bf16.mxu0 %v1498
    %1879 = vmatpush1.bf16.msra.mxu0 %v1497
    %1880 = vmatprep.subr.bf16.mxu0 %v1504
    %1881 = vmatpush1.bf16.msra.mxu0 %v1503
    %1882 = vmatprep.subr.bf16.mxu0 %v1510
    %1883 = vmatpush1.bf16.msra.mxu0 %v1509
    %1884 = vmatprep.subr.bf16.mxu0 %v1516
    %1885 = vmatpush1.bf16.msra.mxu0 %v1515
    %1886 = vmatprep.mubr.bf16.mxu0 %v1812
    %1887 = vmatmul.mubr.bf16.gmra.mrb[0].mxu0 %v1811
    %v1888 = vpop.f32.mrb[0].mxu0
    %v1889 = vadd.f32 %v1627, %v1888
    %v1890 = vpop.f32.mrb[0].mxu0
    %v1891 = vadd.f32 %v1631, %v1890
    %v1892 = vpop.f32.mrb[0].mxu0
    %v1893 = vpop.f32.mrb[0].mxu0
    %1894 = vdwg.mxu0
    %1895 = vmatprep.subr.bf16.mxu0 %v1428
    %1896 = vmatpush1.bf16.msra.mxu0 %v1427
    %1897 = vmatprep.subr.bf16.mxu0 %v1434
    %1898 = vmatpush1.bf16.msra.mxu0 %v1433
    %1899 = vmatprep.subr.bf16.mxu0 %v1440
    %1900 = vmatpush1.bf16.msra.mxu0 %v1439
    %1901 = vmatprep.subr.bf16.mxu0 %v1446
    %1902 = vmatpush1.bf16.msra.mxu0 %v1445
    %1903 = vmatprep.subr.bf16.mxu0 %v1452
    %1904 = vmatpush1.bf16.msra.mxu0 %v1451
    %1905 = vmatprep.subr.bf16.mxu0 %v1458
    %1906 = vmatpush1.bf16.msra.mxu0 %v1457
    %1907 = vmatprep.subr.bf16.mxu0 %v1464
    %1908 = vmatpush1.bf16.msra.mxu0 %v1463
    %1909 = vmatprep.subr.bf16.mxu0 %v1470
    %1910 = vmatpush1.bf16.msra.mxu0 %v1469
    %1911 = vmatprep.subr.bf16.mxu0 %v1476
    %1912 = vmatpush1.bf16.msra.mxu0 %v1475
    %1913 = vmatprep.subr.bf16.mxu0 %v1482
    %1914 = vmatpush1.bf16.msra.mxu0 %v1481
    %1915 = vmatprep.subr.bf16.mxu0 %v1488
    %1916 = vmatpush1.bf16.msra.mxu0 %v1487
    %1917 = vmatprep.subr.bf16.mxu0 %v1494
    %1918 = vmatpush1.bf16.msra.mxu0 %v1493
    %1919 = vmatprep.subr.bf16.mxu0 %v1500
    %1920 = vmatpush1.bf16.msra.mxu0 %v1499
    %1921 = vmatprep.subr.bf16.mxu0 %v1506
    %1922 = vmatpush1.bf16.msra.mxu0 %v1505
    %1923 = vmatprep.subr.bf16.mxu0 %v1512
    %1924 = vmatpush1.bf16.msra.mxu0 %v1511
    %1925 = vmatprep.subr.bf16.mxu0 %v1518
    %1926 = vmatpush1.bf16.msra.mxu0 %v1517
    %1927 = vmatprep.mubr.bf16.mxu0 %v1812
    %1928 = vmatmul.mubr.bf16.gmra.mrb[0].mxu0 %v1811
    %v1929 = vpop.f32.mrb[0].mxu0
    %v1930 = vadd.f32 %v1635, %v1929
    %v1931 = vpop.f32.mrb[0].mxu0
    %v1932 = vadd.f32 %v1639, %v1931
    %v1933 = vpop.f32.mrb[0].mxu0
    %v1934 = vpop.f32.mrb[0].mxu0
    %1935 = vdwg.mxu0
    %v1938 = vrot.slane %v1848, 7
    %v1939 = vrot.slane %v1850, 7
    %v1942 = vadd.f32 %v936, %v1938
    %v1943 = vadd.f32 %v938, %v1939
    %v1944 = vxor.u32 %v1942, 2147483648
    %v1945 = vxor.u32 %v1943, 2147483648
    %v1946 = vmul.f32 %v1944, 1.442695
    %v1947 = vpow.pop %v1946
    %v1948 = vmul.f32 %v1945, 1.442695
    %v1949 = vpow.pop %v1948
    %v1950 = vadd.f32 %v1947, 1.0
    %v1951 = vadd.f32 %v1949, 1.0
    %v1952 = vrcp.pop %v1950
    %v1953 = vmul.f32 1.0, %v1952
    %v1954 = vrcp.pop %v1951
    %v1955 = vmul.f32 1.0, %v1954
    %v1958 = vrot.slane %v1889, 7
    %v1959 = vrot.slane %v1891, 7
    %v1962 = vadd.f32 %v977, %v1958
    %v1963 = vadd.f32 %v979, %v1959
    %v1964 = vxor.u32 %v1962, 2147483648
    %v1965 = vxor.u32 %v1963, 2147483648
    %v1966 = vmul.f32 %v1964, 1.442695
    %v1967 = vpow.pop %v1966
    %v1968 = vmul.f32 %v1965, 1.442695
    %v1969 = vpow.pop %v1968
    %v1970 = vadd.f32 %v1967, 1.0
    %v1971 = vadd.f32 %v1969, 1.0
    %v1972 = vrcp.pop %v1970
    %v1973 = vmul.f32 1.0, %v1972
    %v1974 = vrcp.pop %v1971
    %v1975 = vmul.f32 1.0, %v1974
    %v1978 = vrot.slane %v1930, 7
    %v1979 = vrot.slane %v1932, 7
    %v1982 = vmul.f32 %v1953, %v1978
    %v1983 = vmul.f32 %v1955, %v1979
    %v1984 = vadd.f32 %v1018, %v1982
    %v1985 = vadd.f32 %v1020, %v1983
    %v1986 = vtanh.pop %v1984
    %v1987 = vtanh.pop %v1985
    %v1988 = vsub.f32 1.0, %v1973
    %v1989 = vsub.f32 1.0, %v1975
    %v1990 = vmul.f32 %v1988, %v1986
    %v1991 = vmul.f32 %v1989, %v1987
    %v1994 = vrot.slane %v1809, 7
    %v1995 = vrot.slane %v1810, 7
    %v1998 = vmul.f32 %v1973, %v1994
    %v1999 = vmul.f32 %v1975, %v1995
    %v2000 = vadd.f32 %v1990, %v1998
    %v2001 = vadd.f32 %v1991, %v1999
    %v2002 = vpack.c.bf16 %v2000, %v2000
    %v2003 = vpack.c.bf16 %v2001, %v2001
    %v2005 = vshrl.u32 %v2002, 16
    %v2008 = vshrl.u32 %v2003, 16
    %2012 = vmatprep.subr.bf16.mxu0 %v1424
    %2013 = vmatpush1.bf16.msra.mxu0 %v1423
    %2014 = vmatprep.subr.bf16.mxu0 %v1430
    %2015 = vmatpush1.bf16.msra.mxu0 %v1429
    %2016 = vmatprep.subr.bf16.mxu0 %v1436
    %2017 = vmatpush1.bf16.msra.mxu0 %v1435
    %2018 = vmatprep.subr.bf16.mxu0 %v1442
    %2019 = vmatpush1.bf16.msra.mxu0 %v1441
    %2020 = vmatprep.subr.bf16.mxu0 %v1448
    %2021 = vmatpush1.bf16.msra.mxu0 %v1447
    %2022 = vmatprep.subr.bf16.mxu0 %v1454
    %2023 = vmatpush1.bf16.msra.mxu0 %v1453
    %2024 = vmatprep.subr.bf16.mxu0 %v1460
    %2025 = vmatpush1.bf16.msra.mxu0 %v1459
    %2026 = vmatprep.subr.bf16.mxu0 %v1466
    %2027 = vmatpush1.bf16.msra.mxu0 %v1465
    %2028 = vmatprep.subr.bf16.mxu0 %v1472
    %2029 = vmatpush1.bf16.msra.mxu0 %v1471
    %2030 = vmatprep.subr.bf16.mxu0 %v1478
    %2031 = vmatpush1.bf16.msra.mxu0 %v1477
    %2032 = vmatprep.subr.bf16.mxu0 %v1484
    %2033 = vmatpush1.bf16.msra.mxu0 %v1483
    %2034 = vmatprep.subr.bf16.mxu0 %v1490
    %2035 = vmatpush1.bf16.msra.mxu0 %v1489
    %2036 = vmatprep.subr.bf16.mxu0 %v1496
    %2037 = vmatpush1.bf16.msra.mxu0 %v1495
    %2038 = vmatprep.subr.bf16.mxu0 %v1502
    %2039 = vmatpush1.bf16.msra.mxu0 %v1501
    %2040 = vmatprep.subr.bf16.mxu0 %v1508
    %2041 = vmatpush1.bf16.msra.mxu0 %v1507
    %2042 = vmatprep.subr.bf16.mxu0 %v1514
    %2043 = vmatpush1.bf16.msra.mxu0 %v1513
    %2044 = vmatprep.mubr.bf16.mxu0 %v2008
    %2045 = vmatmul.mubr.bf16.gmra.mrb[0].mxu0 %v2005
    %v2046 = vpop.f32.mrb[0].mxu0
    %v2047 = vadd.f32 %v1619, %v2046
    %v2048 = vpop.f32.mrb[0].mxu0
    %v2049 = vadd.f32 %v1623, %v2048
    %v2050 = vpop.f32.mrb[0].mxu0
    %v2051 = vpop.f32.mrb[0].mxu0
    %2052 = vdwg.mxu0
    %2053 = vmatprep.subr.bf16.mxu0 %v1426
    %2054 = vmatpush1.bf16.msra.mxu0 %v1425
    %2055 = vmatprep.subr.bf16.mxu0 %v1432
    %2056 = vmatpush1.bf16.msra.mxu0 %v1431
    %2057 = vmatprep.subr.bf16.mxu0 %v1438
    %2058 = vmatpush1.bf16.msra.mxu0 %v1437
    %2059 = vmatprep.subr.bf16.mxu0 %v1444
    %2060 = vmatpush1.bf16.msra.mxu0 %v1443
    %2061 = vmatprep.subr.bf16.mxu0 %v1450
    %2062 = vmatpush1.bf16.msra.mxu0 %v1449
    %2063 = vmatprep.subr.bf16.mxu0 %v1456
    %2064 = vmatpush1.bf16.msra.mxu0 %v1455
    %2065 = vmatprep.subr.bf16.mxu0 %v1462
    %2066 = vmatpush1.bf16.msra.mxu0 %v1461
    %2067 = vmatprep.subr.bf16.mxu0 %v1468
    %2068 = vmatpush1.bf16.msra.mxu0 %v1467
    %2069 = vmatprep.subr.bf16.mxu0 %v1474
    %2070 = vmatpush1.bf16.msra.mxu0 %v1473
    %2071 = vmatprep.subr.bf16.mxu0 %v1480
    %2072 = vmatpush1.bf16.msra.mxu0 %v1479
    %2073 = vmatprep.subr.bf16.mxu0 %v1486
    %2074 = vmatpush1.bf16.msra.mxu0 %v1485
    %2075 = vmatprep.subr.bf16.mxu0 %v1492
    %2076 = vmatpush1.bf16.msra.mxu0 %v1491
    %2077 = vmatprep.subr.bf16.mxu0 %v1498
    %2078 = vmatpush1.bf16.msra.mxu0 %v1497
    %2079 = vmatprep.subr.bf16.mxu0 %v1504
    %2080 = vmatpush1.bf16.msra.mxu0 %v1503
    %2081 = vmatprep.subr.bf16.mxu0 %v1510
    %2082 = vmatpush1.bf16.msra.mxu0 %v1509
    %2083 = vmatprep.subr.bf16.mxu0 %v1516
    %2084 = vmatpush1.bf16.msra.mxu0 %v1515
    %2085 = vmatprep.mubr.bf16.mxu0 %v2008
    %2086 = vmatmul.mubr.bf16.gmra.mrb[0].mxu0 %v2005
    %v2087 = vpop.f32.mrb[0].mxu0
    %v2088 = vadd.f32 %v1627, %v2087
    %v2089 = vpop.f32.mrb[0].mxu0
    %v2090 = vadd.f32 %v1631, %v2089
    %v2091 = vpop.f32.mrb[0].mxu0
    %v2092 = vpop.f32.mrb[0].mxu0
    %2093 = vdwg.mxu0
    %2094 = vmatprep.subr.bf16.mxu0 %v1428
    %2095 = vmatpush1.bf16.msra.mxu0 %v1427
    %2096 = vmatprep.subr.bf16.mxu0 %v1434
    %2097 = vmatpush1.bf16.msra.mxu0 %v1433
    %2098 = vmatprep.subr.bf16.mxu0 %v1440
    %2099 = vmatpush1.bf16.msra.mxu0 %v1439
    %2100 = vmatprep.subr.bf16.mxu0 %v1446
    %2101 = vmatpush1.bf16.msra.mxu0 %v1445
    %2102 = vmatprep.subr.bf16.mxu0 %v1452
    %2103 = vmatpush1.bf16.msra.mxu0 %v1451
    %2104 = vmatprep.subr.bf16.mxu0 %v1458
    %2105 = vmatpush1.bf16.msra.mxu0 %v1457
    %2106 = vmatprep.subr.bf16.mxu0 %v1464
    %2107 = vmatpush1.bf16.msra.mxu0 %v1463
    %2108 = vmatprep.subr.bf16.mxu0 %v1470
    %2109 = vmatpush1.bf16.msra.mxu0 %v1469
    %2110 = vmatprep.subr.bf16.mxu0 %v1476
    %2111 = vmatpush1.bf16.msra.mxu0 %v1475
    %2112 = vmatprep.subr.bf16.mxu0 %v1482
    %2113 = vmatpush1.bf16.msra.mxu0 %v1481
    %2114 = vmatprep.subr.bf16.mxu0 %v1488
    %2115 = vmatpush1.bf16.msra.mxu0 %v1487
    %2116 = vmatprep.subr.bf16.mxu0 %v1494
    %2117 = vmatpush1.bf16.msra.mxu0 %v1493
    %2118 = vmatprep.subr.bf16.mxu0 %v1500
    %2119 = vmatpush1.bf16.msra.mxu0 %v1499
    %2120 = vmatprep.subr.bf16.mxu0 %v1506
    %2121 = vmatpush1.bf16.msra.mxu0 %v1505
    %2122 = vmatprep.subr.bf16.mxu0 %v1512
    %2123 = vmatpush1.bf16.msra.mxu0 %v1511
    %2124 = vmatprep.subr.bf16.mxu0 %v1518
    %2125 = vmatpush1.bf16.msra.mxu0 %v1517
    %2126 = vmatprep.mubr.bf16.mxu0 %v2008
    %2127 = vmatmul.mubr.bf16.gmra.mrb[0].mxu0 %v2005
    %v2128 = vpop.f32.mrb[0].mxu0
    %v2129 = vadd.f32 %v1635, %v2128
    %v2130 = vpop.f32.mrb[0].mxu0
    %v2131 = vadd.f32 %v1639, %v2130
    %v2132 = vpop.f32.mrb[0].mxu0
    %v2133 = vpop.f32.mrb[0].mxu0
    %2134 = vdwg.mxu0
    %v2137 = vrot.slane %v2047, 6
    %v2138 = vrot.slane %v2049, 6
    %v2141 = vadd.f32 %v936, %v2137
    %v2142 = vadd.f32 %v938, %v2138
    %v2143 = vxor.u32 %v2141, 2147483648
    %v2144 = vxor.u32 %v2142, 2147483648
    %v2145 = vmul.f32 %v2143, 1.442695
    %v2146 = vpow.pop %v2145
    %v2147 = vmul.f32 %v2144, 1.442695
    %v2148 = vpow.pop %v2147
    %v2149 = vadd.f32 %v2146, 1.0
    %v2150 = vadd.f32 %v2148, 1.0
    %v2151 = vrcp.pop %v2149
    %v2152 = vmul.f32 1.0, %v2151
    %v2153 = vrcp.pop %v2150
    %v2154 = vmul.f32 1.0, %v2153
    %v2157 = vrot.slane %v2088, 6
    %v2158 = vrot.slane %v2090, 6
    %v2161 = vadd.f32 %v977, %v2157
    %v2162 = vadd.f32 %v979, %v2158
    %v2163 = vxor.u32 %v2161, 2147483648
    %v2164 = vxor.u32 %v2162, 2147483648
    %v2165 = vmul.f32 %v2163, 1.442695
    %v2166 = vpow.pop %v2165
    %v2167 = vmul.f32 %v2164, 1.442695
    %v2168 = vpow.pop %v2167
    %v2169 = vadd.f32 %v2166, 1.0
    %v2170 = vadd.f32 %v2168, 1.0
    %v2171 = vrcp.pop %v2169
    %v2172 = vmul.f32 1.0, %v2171
    %v2173 = vrcp.pop %v2170
    %v2174 = vmul.f32 1.0, %v2173
    %v2177 = vrot.slane %v2129, 6
    %v2178 = vrot.slane %v2131, 6
    %v2181 = vmul.f32 %v2152, %v2177
    %v2182 = vmul.f32 %v2154, %v2178
    %v2183 = vadd.f32 %v1018, %v2181
    %v2184 = vadd.f32 %v1020, %v2182
    %v2185 = vtanh.pop %v2183
    %v2186 = vtanh.pop %v2184
    %v2187 = vsub.f32 1.0, %v2172
    %v2188 = vsub.f32 1.0, %v2174
    %v2189 = vmul.f32 %v2187, %v2185
    %v2190 = vmul.f32 %v2188, %v2186
    %v2193 = vrot.slane %v2000, 7
    %v2194 = vrot.slane %v2001, 7
    %v2197 = vmul.f32 %v2172, %v2193
    %v2198 = vmul.f32 %v2174, %v2194
    %v2199 = vadd.f32 %v2189, %v2197
    %v2200 = vadd.f32 %v2190, %v2198
    %v2201 = vpack.c.bf16 %v2199, %v2199
    %v2202 = vpack.c.bf16 %v2200, %v2200
    %v2205 = vrot.slane %v2201, 1
    %v2206 = vrot.slane %v2202, 1
    %2209 = vmatprep.subr.bf16.mxu0 %v1424
    %2210 = vmatpush1.bf16.msra.mxu0 %v1423
    %2211 = vmatprep.subr.bf16.mxu0 %v1430
    %2212 = vmatpush1.bf16.msra.mxu0 %v1429
    %2213 = vmatprep.subr.bf16.mxu0 %v1436
    %2214 = vmatpush1.bf16.msra.mxu0 %v1435
    %2215 = vmatprep.subr.bf16.mxu0 %v1442
    %2216 = vmatpush1.bf16.msra.mxu0 %v1441
    %2217 = vmatprep.subr.bf16.mxu0 %v1448
    %2218 = vmatpush1.bf16.msra.mxu0 %v1447
    %2219 = vmatprep.subr.bf16.mxu0 %v1454
    %2220 = vmatpush1.bf16.msra.mxu0 %v1453
    %2221 = vmatprep.subr.bf16.mxu0 %v1460
    %2222 = vmatpush1.bf16.msra.mxu0 %v1459
    %2223 = vmatprep.subr.bf16.mxu0 %v1466
    %2224 = vmatpush1.bf16.msra.mxu0 %v1465
    %2225 = vmatprep.subr.bf16.mxu0 %v1472
    %2226 = vmatpush1.bf16.msra.mxu0 %v1471
    %2227 = vmatprep.subr.bf16.mxu0 %v1478
    %2228 = vmatpush1.bf16.msra.mxu0 %v1477
    %2229 = vmatprep.subr.bf16.mxu0 %v1484
    %2230 = vmatpush1.bf16.msra.mxu0 %v1483
    %2231 = vmatprep.subr.bf16.mxu0 %v1490
    %2232 = vmatpush1.bf16.msra.mxu0 %v1489
    %2233 = vmatprep.subr.bf16.mxu0 %v1496
    %2234 = vmatpush1.bf16.msra.mxu0 %v1495
    %2235 = vmatprep.subr.bf16.mxu0 %v1502
    %2236 = vmatpush1.bf16.msra.mxu0 %v1501
    %2237 = vmatprep.subr.bf16.mxu0 %v1508
    %2238 = vmatpush1.bf16.msra.mxu0 %v1507
    %2239 = vmatprep.subr.bf16.mxu0 %v1514
    %2240 = vmatpush1.bf16.msra.mxu0 %v1513
    %2241 = vmatprep.mubr.bf16.mxu0 %v2206
    %2242 = vmatmul.mubr.bf16.gmra.mrb[0].mxu0 %v2205
    %v2243 = vpop.f32.mrb[0].mxu0
    %v2244 = vadd.f32 %v1619, %v2243
    %v2245 = vpop.f32.mrb[0].mxu0
    %v2246 = vadd.f32 %v1623, %v2245
    %v2247 = vpop.f32.mrb[0].mxu0
    %v2248 = vpop.f32.mrb[0].mxu0
    %2249 = vdwg.mxu0
    %2250 = vmatprep.subr.bf16.mxu0 %v1426
    %2251 = vmatpush1.bf16.msra.mxu0 %v1425
    %2252 = vmatprep.subr.bf16.mxu0 %v1432
    %2253 = vmatpush1.bf16.msra.mxu0 %v1431
    %2254 = vmatprep.subr.bf16.mxu0 %v1438
    %2255 = vmatpush1.bf16.msra.mxu0 %v1437
    %2256 = vmatprep.subr.bf16.mxu0 %v1444
    %2257 = vmatpush1.bf16.msra.mxu0 %v1443
    %2258 = vmatprep.subr.bf16.mxu0 %v1450
    %2259 = vmatpush1.bf16.msra.mxu0 %v1449
    %2260 = vmatprep.subr.bf16.mxu0 %v1456
    %2261 = vmatpush1.bf16.msra.mxu0 %v1455
    %2262 = vmatprep.subr.bf16.mxu0 %v1462
    %2263 = vmatpush1.bf16.msra.mxu0 %v1461
    %2264 = vmatprep.subr.bf16.mxu0 %v1468
    %2265 = vmatpush1.bf16.msra.mxu0 %v1467
    %2266 = vmatprep.subr.bf16.mxu0 %v1474
    %2267 = vmatpush1.bf16.msra.mxu0 %v1473
    %2268 = vmatprep.subr.bf16.mxu0 %v1480
    %2269 = vmatpush1.bf16.msra.mxu0 %v1479
    %2270 = vmatprep.subr.bf16.mxu0 %v1486
    %2271 = vmatpush1.bf16.msra.mxu0 %v1485
    %2272 = vmatprep.subr.bf16.mxu0 %v1492
    %2273 = vmatpush1.bf16.msra.mxu0 %v1491
    %2274 = vmatprep.subr.bf16.mxu0 %v1498
    %2275 = vmatpush1.bf16.msra.mxu0 %v1497
    %2276 = vmatprep.subr.bf16.mxu0 %v1504
    %2277 = vmatpush1.bf16.msra.mxu0 %v1503
    %2278 = vmatprep.subr.bf16.mxu0 %v1510
    %2279 = vmatpush1.bf16.msra.mxu0 %v1509
    %2280 = vmatprep.subr.bf16.mxu0 %v1516
    %2281 = vmatpush1.bf16.msra.mxu0 %v1515
    %2282 = vmatprep.mubr.bf16.mxu0 %v2206
    %2283 = vmatmul.mubr.bf16.gmra.mrb[0].mxu0 %v2205
    %v2284 = vpop.f32.mrb[0].mxu0
    %v2285 = vadd.f32 %v1627, %v2284
    %v2286 = vpop.f32.mrb[0].mxu0
    %v2287 = vadd.f32 %v1631, %v2286
    %v2288 = vpop.f32.mrb[0].mxu0
    %v2289 = vpop.f32.mrb[0].mxu0
    %2290 = vdwg.mxu0
    %2291 = vmatprep.subr.bf16.mxu0 %v1428
    %2292 = vmatpush1.bf16.msra.mxu0 %v1427
    %2293 = vmatprep.subr.bf16.mxu0 %v1434
    %2294 = vmatpush1.bf16.msra.mxu0 %v1433
    %2295 = vmatprep.subr.bf16.mxu0 %v1440
    %2296 = vmatpush1.bf16.msra.mxu0 %v1439
    %2297 = vmatprep.subr.bf16.mxu0 %v1446
    %2298 = vmatpush1.bf16.msra.mxu0 %v1445
    %2299 = vmatprep.subr.bf16.mxu0 %v1452
    %2300 = vmatpush1.bf16.msra.mxu0 %v1451
    %2301 = vmatprep.subr.bf16.mxu0 %v1458
    %2302 = vmatpush1.bf16.msra.mxu0 %v1457
    %2303 = vmatprep.subr.bf16.mxu0 %v1464
    %2304 = vmatpush1.bf16.msra.mxu0 %v1463
    %2305 = vmatprep.subr.bf16.mxu0 %v1470
    %2306 = vmatpush1.bf16.msra.mxu0 %v1469
    %2307 = vmatprep.subr.bf16.mxu0 %v1476
    %2308 = vmatpush1.bf16.msra.mxu0 %v1475
    %2309 = vmatprep.subr.bf16.mxu0 %v1482
    %2310 = vmatpush1.bf16.msra.mxu0 %v1481
    %2311 = vmatprep.subr.bf16.mxu0 %v1488
    %2312 = vmatpush1.bf16.msra.mxu0 %v1487
    %2313 = vmatprep.subr.bf16.mxu0 %v1494
    %2314 = vmatpush1.bf16.msra.mxu0 %v1493
    %2315 = vmatprep.subr.bf16.mxu0 %v1500
    %2316 = vmatpush1.bf16.msra.mxu0 %v1499
    %2317 = vmatprep.subr.bf16.mxu0 %v1506
    %2318 = vmatpush1.bf16.msra.mxu0 %v1505
    %2319 = vmatprep.subr.bf16.mxu0 %v1512
    %2320 = vmatpush1.bf16.msra.mxu0 %v1511
    %2321 = vmatprep.subr.bf16.mxu0 %v1518
    %2322 = vmatpush1.bf16.msra.mxu0 %v1517
    %2323 = vmatprep.mubr.bf16.mxu0 %v2206
    %2324 = vmatmul.mubr.bf16.gmra.mrb[0].mxu0 %v2205
    %v2325 = vpop.f32.mrb[0].mxu0
    %v2326 = vadd.f32 %v1635, %v2325
    %v2327 = vpop.f32.mrb[0].mxu0
    %v2328 = vadd.f32 %v1639, %v2327
    %v2329 = vpop.f32.mrb[0].mxu0
    %v2330 = vpop.f32.mrb[0].mxu0
    %2331 = vdwg.mxu0
    %v2334 = vrot.slane %v2244, 5
    %v2335 = vrot.slane %v2246, 5
    %v2338 = vadd.f32 %v936, %v2334
    %v2339 = vadd.f32 %v938, %v2335
    %v2340 = vxor.u32 %v2338, 2147483648
    %v2341 = vxor.u32 %v2339, 2147483648
    %v2342 = vmul.f32 %v2340, 1.442695
    %v2343 = vpow.pop %v2342
    %v2344 = vmul.f32 %v2341, 1.442695
    %v2345 = vpow.pop %v2344
    %v2346 = vadd.f32 %v2343, 1.0
    %v2347 = vadd.f32 %v2345, 1.0
    %v2348 = vrcp.pop %v2346
    %v2349 = vmul.f32 1.0, %v2348
    %v2350 = vrcp.pop %v2347
    %v2351 = vmul.f32 1.0, %v2350
    %v2354 = vrot.slane %v2285, 5
    %v2355 = vrot.slane %v2287, 5
    %v2358 = vadd.f32 %v977, %v2354
    %v2359 = vadd.f32 %v979, %v2355
    %v2360 = vxor.u32 %v2358, 2147483648
    %v2361 = vxor.u32 %v2359, 2147483648
    %v2362 = vmul.f32 %v2360, 1.442695
    %v2363 = vpow.pop %v2362
    %v2364 = vmul.f32 %v2361, 1.442695
    %v2365 = vpow.pop %v2364
    %v2366 = vadd.f32 %v2363, 1.0
    %v2367 = vadd.f32 %v2365, 1.0
    %v2368 = vrcp.pop %v2366
    %v2369 = vmul.f32 1.0, %v2368
    %v2370 = vrcp.pop %v2367
    %v2371 = vmul.f32 1.0, %v2370
    %v2374 = vrot.slane %v2326, 5
    %v2375 = vrot.slane %v2328, 5
    %v2378 = vmul.f32 %v2349, %v2374
    %v2379 = vmul.f32 %v2351, %v2375
    %v2380 = vadd.f32 %v1018, %v2378
    %v2381 = vadd.f32 %v1020, %v2379
    %v2382 = vtanh.pop %v2380
    %v2383 = vtanh.pop %v2381
    %v2384 = vsub.f32 1.0, %v2369
    %v2385 = vsub.f32 1.0, %v2371
    %v2386 = vmul.f32 %v2384, %v2382
    %v2387 = vmul.f32 %v2385, %v2383
    %v2390 = vrot.slane %v2199, 7
    %v2391 = vrot.slane %v2200, 7
    %v2394 = vmul.f32 %v2369, %v2390
    %v2395 = vmul.f32 %v2371, %v2391
    %v2396 = vadd.f32 %v2386, %v2394
    %v2397 = vadd.f32 %v2387, %v2395
    %v2398 = vpack.c.bf16 %v2396, %v2396
    %v2399 = vpack.c.bf16 %v2397, %v2397
    %v2401 = vshrl.u32 %v2398, 16
    %v2403 = vrot.slane %v2401, 1
    %v2405 = vshrl.u32 %v2399, 16
    %v2407 = vrot.slane %v2405, 1
    %2410 = vmatprep.subr.bf16.mxu0 %v1424
    %2411 = vmatpush1.bf16.msra.mxu0 %v1423
    %2412 = vmatprep.subr.bf16.mxu0 %v1430
    %2413 = vmatpush1.bf16.msra.mxu0 %v1429
    %2414 = vmatprep.subr.bf16.mxu0 %v1436
    %2415 = vmatpush1.bf16.msra.mxu0 %v1435
    %2416 = vmatprep.subr.bf16.mxu0 %v1442
    %2417 = vmatpush1.bf16.msra.mxu0 %v1441
    %2418 = vmatprep.subr.bf16.mxu0 %v1448
    %2419 = vmatpush1.bf16.msra.mxu0 %v1447
    %2420 = vmatprep.subr.bf16.mxu0 %v1454
    %2421 = vmatpush1.bf16.msra.mxu0 %v1453
    %2422 = vmatprep.subr.bf16.mxu0 %v1460
    %2423 = vmatpush1.bf16.msra.mxu0 %v1459
    %2424 = vmatprep.subr.bf16.mxu0 %v1466
    %2425 = vmatpush1.bf16.msra.mxu0 %v1465
    %2426 = vmatprep.subr.bf16.mxu0 %v1472
    %2427 = vmatpush1.bf16.msra.mxu0 %v1471
    %2428 = vmatprep.subr.bf16.mxu0 %v1478
    %2429 = vmatpush1.bf16.msra.mxu0 %v1477
    %2430 = vmatprep.subr.bf16.mxu0 %v1484
    %2431 = vmatpush1.bf16.msra.mxu0 %v1483
    %2432 = vmatprep.subr.bf16.mxu0 %v1490
    %2433 = vmatpush1.bf16.msra.mxu0 %v1489
    %2434 = vmatprep.subr.bf16.mxu0 %v1496
    %2435 = vmatpush1.bf16.msra.mxu0 %v1495
    %2436 = vmatprep.subr.bf16.mxu0 %v1502
    %2437 = vmatpush1.bf16.msra.mxu0 %v1501
    %2438 = vmatprep.subr.bf16.mxu0 %v1508
    %2439 = vmatpush1.bf16.msra.mxu0 %v1507
    %2440 = vmatprep.subr.bf16.mxu0 %v1514
    %2441 = vmatpush1.bf16.msra.mxu0 %v1513
    %2442 = vmatprep.mubr.bf16.mxu0 %v2407
    %2443 = vmatmul.mubr.bf16.gmra.mrb[0].mxu0 %v2403
    %v2444 = vpop.f32.mrb[0].mxu0
    %v2445 = vadd.f32 %v1619, %v2444
    %v2446 = vpop.f32.mrb[0].mxu0
    %v2447 = vadd.f32 %v1623, %v2446
    %v2448 = vpop.f32.mrb[0].mxu0
    %v2449 = vpop.f32.mrb[0].mxu0
    %2450 = vdwg.mxu0
    %2451 = vmatprep.subr.bf16.mxu0 %v1426
    %2452 = vmatpush1.bf16.msra.mxu0 %v1425
    %2453 = vmatprep.subr.bf16.mxu0 %v1432
    %2454 = vmatpush1.bf16.msra.mxu0 %v1431
    %2455 = vmatprep.subr.bf16.mxu0 %v1438
    %2456 = vmatpush1.bf16.msra.mxu0 %v1437
    %2457 = vmatprep.subr.bf16.mxu0 %v1444
    %2458 = vmatpush1.bf16.msra.mxu0 %v1443
    %2459 = vmatprep.subr.bf16.mxu0 %v1450
    %2460 = vmatpush1.bf16.msra.mxu0 %v1449
    %2461 = vmatprep.subr.bf16.mxu0 %v1456
    %2462 = vmatpush1.bf16.msra.mxu0 %v1455
    %2463 = vmatprep.subr.bf16.mxu0 %v1462
    %2464 = vmatpush1.bf16.msra.mxu0 %v1461
    %2465 = vmatprep.subr.bf16.mxu0 %v1468
    %2466 = vmatpush1.bf16.msra.mxu0 %v1467
    %2467 = vmatprep.subr.bf16.mxu0 %v1474
    %2468 = vmatpush1.bf16.msra.mxu0 %v1473
    %2469 = vmatprep.subr.bf16.mxu0 %v1480
    %2470 = vmatpush1.bf16.msra.mxu0 %v1479
    %2471 = vmatprep.subr.bf16.mxu0 %v1486
    %2472 = vmatpush1.bf16.msra.mxu0 %v1485
    %2473 = vmatprep.subr.bf16.mxu0 %v1492
    %2474 = vmatpush1.bf16.msra.mxu0 %v1491
    %2475 = vmatprep.subr.bf16.mxu0 %v1498
    %2476 = vmatpush1.bf16.msra.mxu0 %v1497
    %2477 = vmatprep.subr.bf16.mxu0 %v1504
    %2478 = vmatpush1.bf16.msra.mxu0 %v1503
    %2479 = vmatprep.subr.bf16.mxu0 %v1510
    %2480 = vmatpush1.bf16.msra.mxu0 %v1509
    %2481 = vmatprep.subr.bf16.mxu0 %v1516
    %2482 = vmatpush1.bf16.msra.mxu0 %v1515
    %2483 = vmatprep.mubr.bf16.mxu0 %v2407
    %2484 = vmatmul.mubr.bf16.gmra.mrb[0].mxu0 %v2403
    %v2485 = vpop.f32.mrb[0].mxu0
    %v2486 = vadd.f32 %v1627, %v2485
    %v2487 = vpop.f32.mrb[0].mxu0
    %v2488 = vadd.f32 %v1631, %v2487
    %v2489 = vpop.f32.mrb[0].mxu0
    %v2490 = vpop.f32.mrb[0].mxu0
    %2491 = vdwg.mxu0
    %2492 = vmatprep.subr.bf16.mxu0 %v1428
    %2493 = vmatpush1.bf16.msra.mxu0 %v1427
    %2494 = vmatprep.subr.bf16.mxu0 %v1434
    %2495 = vmatpush1.bf16.msra.mxu0 %v1433
    %2496 = vmatprep.subr.bf16.mxu0 %v1440
    %2497 = vmatpush1.bf16.msra.mxu0 %v1439
    %2498 = vmatprep.subr.bf16.mxu0 %v1446
    %2499 = vmatpush1.bf16.msra.mxu0 %v1445
    %2500 = vmatprep.subr.bf16.mxu0 %v1452
    %2501 = vmatpush1.bf16.msra.mxu0 %v1451
    %2502 = vmatprep.subr.bf16.mxu0 %v1458
    %2503 = vmatpush1.bf16.msra.mxu0 %v1457
    %2504 = vmatprep.subr.bf16.mxu0 %v1464
    %2505 = vmatpush1.bf16.msra.mxu0 %v1463
    %2506 = vmatprep.subr.bf16.mxu0 %v1470
    %2507 = vmatpush1.bf16.msra.mxu0 %v1469
    %2508 = vmatprep.subr.bf16.mxu0 %v1476
    %2509 = vmatpush1.bf16.msra.mxu0 %v1475
    %2510 = vmatprep.subr.bf16.mxu0 %v1482
    %2511 = vmatpush1.bf16.msra.mxu0 %v1481
    %2512 = vmatprep.subr.bf16.mxu0 %v1488
    %2513 = vmatpush1.bf16.msra.mxu0 %v1487
    %2514 = vmatprep.subr.bf16.mxu0 %v1494
    %2515 = vmatpush1.bf16.msra.mxu0 %v1493
    %2516 = vmatprep.subr.bf16.mxu0 %v1500
    %2517 = vmatpush1.bf16.msra.mxu0 %v1499
    %2518 = vmatprep.subr.bf16.mxu0 %v1506
    %2519 = vmatpush1.bf16.msra.mxu0 %v1505
    %2520 = vmatprep.subr.bf16.mxu0 %v1512
    %2521 = vmatpush1.bf16.msra.mxu0 %v1511
    %2522 = vmatprep.subr.bf16.mxu0 %v1518
    %2523 = vmatpush1.bf16.msra.mxu0 %v1517
    %2524 = vmatprep.mubr.bf16.mxu0 %v2407
    %2525 = vmatmul.mubr.bf16.gmra.mrb[0].mxu0 %v2403
    %v2526 = vpop.f32.mrb[0].mxu0
    %v2527 = vadd.f32 %v1635, %v2526
    %v2528 = vpop.f32.mrb[0].mxu0
    %v2529 = vadd.f32 %v1639, %v2528
    %v2530 = vpop.f32.mrb[0].mxu0
    %v2531 = vpop.f32.mrb[0].mxu0
    %2532 = vdwg.mxu0
    %v2535 = vrot.slane %v2445, 4
    %v2536 = vrot.slane %v2447, 4
    %v2539 = vadd.f32 %v936, %v2535
    %v2540 = vadd.f32 %v938, %v2536
    %v2541 = vxor.u32 %v2539, 2147483648
    %v2542 = vxor.u32 %v2540, 2147483648
    %v2543 = vmul.f32 %v2541, 1.442695
    %v2544 = vpow.pop %v2543
    %v2545 = vmul.f32 %v2542, 1.442695
    %v2546 = vpow.pop %v2545
    %v2547 = vadd.f32 %v2544, 1.0
    %v2548 = vadd.f32 %v2546, 1.0
    %v2549 = vrcp.pop %v2547
    %v2550 = vmul.f32 1.0, %v2549
    %v2551 = vrcp.pop %v2548
    %v2552 = vmul.f32 1.0, %v2551
    %v2555 = vrot.slane %v2486, 4
    %v2556 = vrot.slane %v2488, 4
    %v2559 = vadd.f32 %v977, %v2555
    %v2560 = vadd.f32 %v979, %v2556
    %v2561 = vxor.u32 %v2559, 2147483648
    %v2562 = vxor.u32 %v2560, 2147483648
    %v2563 = vmul.f32 %v2561, 1.442695
    %v2564 = vpow.pop %v2563
    %v2565 = vmul.f32 %v2562, 1.442695
    %v2566 = vpow.pop %v2565
    %v2567 = vadd.f32 %v2564, 1.0
    %v2568 = vadd.f32 %v2566, 1.0
    %v2569 = vrcp.pop %v2567
    %v2570 = vmul.f32 1.0, %v2569
    %v2571 = vrcp.pop %v2568
    %v2572 = vmul.f32 1.0, %v2571
    %v2575 = vrot.slane %v2527, 4
    %v2576 = vrot.slane %v2529, 4
    %v2579 = vmul.f32 %v2550, %v2575
    %v2580 = vmul.f32 %v2552, %v2576
    %v2581 = vadd.f32 %v1018, %v2579
    %v2582 = vadd.f32 %v1020, %v2580
    %v2583 = vtanh.pop %v2581
    %v2584 = vtanh.pop %v2582
    %v2585 = vsub.f32 1.0, %v2570
    %v2586 = vsub.f32 1.0, %v2572
    %v2587 = vmul.f32 %v2585, %v2583
    %v2588 = vmul.f32 %v2586, %v2584
    %v2591 = vrot.slane %v2396, 7
    %v2592 = vrot.slane %v2397, 7
    %v2595 = vmul.f32 %v2570, %v2591
    %v2596 = vmul.f32 %v2572, %v2592
    %v2597 = vadd.f32 %v2587, %v2595
    %v2598 = vadd.f32 %v2588, %v2596
    %v2599 = vpack.c.bf16 %v2597, %v2597
    %v2600 = vpack.c.bf16 %v2598, %v2598
    %v2603 = vrot.slane %v2599, 2
    %v2604 = vrot.slane %v2600, 2
    %2607 = vmatprep.subr.bf16.mxu0 %v1424
    %2608 = vmatpush1.bf16.msra.mxu0 %v1423
    %2609 = vmatprep.subr.bf16.mxu0 %v1430
    %2610 = vmatpush1.bf16.msra.mxu0 %v1429
    %2611 = vmatprep.subr.bf16.mxu0 %v1436
    %2612 = vmatpush1.bf16.msra.mxu0 %v1435
    %2613 = vmatprep.subr.bf16.mxu0 %v1442
    %2614 = vmatpush1.bf16.msra.mxu0 %v1441
    %2615 = vmatprep.subr.bf16.mxu0 %v1448
    %2616 = vmatpush1.bf16.msra.mxu0 %v1447
    %2617 = vmatprep.subr.bf16.mxu0 %v1454
    %2618 = vmatpush1.bf16.msra.mxu0 %v1453
    %2619 = vmatprep.subr.bf16.mxu0 %v1460
    %2620 = vmatpush1.bf16.msra.mxu0 %v1459
    %2621 = vmatprep.subr.bf16.mxu0 %v1466
    %2622 = vmatpush1.bf16.msra.mxu0 %v1465
    %2623 = vmatprep.subr.bf16.mxu0 %v1472
    %2624 = vmatpush1.bf16.msra.mxu0 %v1471
    %2625 = vmatprep.subr.bf16.mxu0 %v1478
    %2626 = vmatpush1.bf16.msra.mxu0 %v1477
    %2627 = vmatprep.subr.bf16.mxu0 %v1484
    %2628 = vmatpush1.bf16.msra.mxu0 %v1483
    %2629 = vmatprep.subr.bf16.mxu0 %v1490
    %2630 = vmatpush1.bf16.msra.mxu0 %v1489
    %2631 = vmatprep.subr.bf16.mxu0 %v1496
    %2632 = vmatpush1.bf16.msra.mxu0 %v1495
    %2633 = vmatprep.subr.bf16.mxu0 %v1502
    %2634 = vmatpush1.bf16.msra.mxu0 %v1501
    %2635 = vmatprep.subr.bf16.mxu0 %v1508
    %2636 = vmatpush1.bf16.msra.mxu0 %v1507
    %2637 = vmatprep.subr.bf16.mxu0 %v1514
    %2638 = vmatpush1.bf16.msra.mxu0 %v1513
    %2639 = vmatprep.mubr.bf16.mxu0 %v2604
    %2640 = vmatmul.mubr.bf16.gmra.mrb[0].mxu0 %v2603
    %v2641 = vpop.f32.mrb[0].mxu0
    %v2642 = vadd.f32 %v1619, %v2641
    %v2643 = vpop.f32.mrb[0].mxu0
    %v2644 = vadd.f32 %v1623, %v2643
    %v2645 = vpop.f32.mrb[0].mxu0
    %v2646 = vpop.f32.mrb[0].mxu0
    %2647 = vdwg.mxu0
    %2648 = vmatprep.subr.bf16.mxu0 %v1426
    %2649 = vmatpush1.bf16.msra.mxu0 %v1425
    %2650 = vmatprep.subr.bf16.mxu0 %v1432
    %2651 = vmatpush1.bf16.msra.mxu0 %v1431
    %2652 = vmatprep.subr.bf16.mxu0 %v1438
    %2653 = vmatpush1.bf16.msra.mxu0 %v1437
    %2654 = vmatprep.subr.bf16.mxu0 %v1444
    %2655 = vmatpush1.bf16.msra.mxu0 %v1443
    %2656 = vmatprep.subr.bf16.mxu0 %v1450
    %2657 = vmatpush1.bf16.msra.mxu0 %v1449
    %2658 = vmatprep.subr.bf16.mxu0 %v1456
    %2659 = vmatpush1.bf16.msra.mxu0 %v1455
    %2660 = vmatprep.subr.bf16.mxu0 %v1462
    %2661 = vmatpush1.bf16.msra.mxu0 %v1461
    %2662 = vmatprep.subr.bf16.mxu0 %v1468
    %2663 = vmatpush1.bf16.msra.mxu0 %v1467
    %2664 = vmatprep.subr.bf16.mxu0 %v1474
    %2665 = vmatpush1.bf16.msra.mxu0 %v1473
    %2666 = vmatprep.subr.bf16.mxu0 %v1480
    %2667 = vmatpush1.bf16.msra.mxu0 %v1479
    %2668 = vmatprep.subr.bf16.mxu0 %v1486
    %2669 = vmatpush1.bf16.msra.mxu0 %v1485
    %2670 = vmatprep.subr.bf16.mxu0 %v1492
    %2671 = vmatpush1.bf16.msra.mxu0 %v1491
    %2672 = vmatprep.subr.bf16.mxu0 %v1498
    %2673 = vmatpush1.bf16.msra.mxu0 %v1497
    %2674 = vmatprep.subr.bf16.mxu0 %v1504
    %2675 = vmatpush1.bf16.msra.mxu0 %v1503
    %2676 = vmatprep.subr.bf16.mxu0 %v1510
    %2677 = vmatpush1.bf16.msra.mxu0 %v1509
    %2678 = vmatprep.subr.bf16.mxu0 %v1516
    %2679 = vmatpush1.bf16.msra.mxu0 %v1515
    %2680 = vmatprep.mubr.bf16.mxu0 %v2604
    %2681 = vmatmul.mubr.bf16.gmra.mrb[0].mxu0 %v2603
    %v2682 = vpop.f32.mrb[0].mxu0
    %v2683 = vadd.f32 %v1627, %v2682
    %v2684 = vpop.f32.mrb[0].mxu0
    %v2685 = vadd.f32 %v1631, %v2684
    %v2686 = vpop.f32.mrb[0].mxu0
    %v2687 = vpop.f32.mrb[0].mxu0
    %2688 = vdwg.mxu0
    %2689 = vmatprep.subr.bf16.mxu0 %v1428
    %2690 = vmatpush1.bf16.msra.mxu0 %v1427
    %2691 = vmatprep.subr.bf16.mxu0 %v1434
    %2692 = vmatpush1.bf16.msra.mxu0 %v1433
    %2693 = vmatprep.subr.bf16.mxu0 %v1440
    %2694 = vmatpush1.bf16.msra.mxu0 %v1439
    %2695 = vmatprep.subr.bf16.mxu0 %v1446
    %2696 = vmatpush1.bf16.msra.mxu0 %v1445
    %2697 = vmatprep.subr.bf16.mxu0 %v1452
    %2698 = vmatpush1.bf16.msra.mxu0 %v1451
    %2699 = vmatprep.subr.bf16.mxu0 %v1458
    %2700 = vmatpush1.bf16.msra.mxu0 %v1457
    %2701 = vmatprep.subr.bf16.mxu0 %v1464
    %2702 = vmatpush1.bf16.msra.mxu0 %v1463
    %2703 = vmatprep.subr.bf16.mxu0 %v1470
    %2704 = vmatpush1.bf16.msra.mxu0 %v1469
    %2705 = vmatprep.subr.bf16.mxu0 %v1476
    %2706 = vmatpush1.bf16.msra.mxu0 %v1475
    %2707 = vmatprep.subr.bf16.mxu0 %v1482
    %2708 = vmatpush1.bf16.msra.mxu0 %v1481
    %2709 = vmatprep.subr.bf16.mxu0 %v1488
    %2710 = vmatpush1.bf16.msra.mxu0 %v1487
    %2711 = vmatprep.subr.bf16.mxu0 %v1494
    %2712 = vmatpush1.bf16.msra.mxu0 %v1493
    %2713 = vmatprep.subr.bf16.mxu0 %v1500
    %2714 = vmatpush1.bf16.msra.mxu0 %v1499
    %2715 = vmatprep.subr.bf16.mxu0 %v1506
    %2716 = vmatpush1.bf16.msra.mxu0 %v1505
    %2717 = vmatprep.subr.bf16.mxu0 %v1512
    %2718 = vmatpush1.bf16.msra.mxu0 %v1511
    %2719 = vmatprep.subr.bf16.mxu0 %v1518
    %2720 = vmatpush1.bf16.msra.mxu0 %v1517
    %2721 = vmatprep.mubr.bf16.mxu0 %v2604
    %2722 = vmatmul.mubr.bf16.gmra.mrb[0].mxu0 %v2603
    %v2723 = vpop.f32.mrb[0].mxu0
    %v2724 = vadd.f32 %v1635, %v2723
    %v2725 = vpop.f32.mrb[0].mxu0
    %v2726 = vadd.f32 %v1639, %v2725
    %v2727 = vpop.f32.mrb[0].mxu0
    %v2728 = vpop.f32.mrb[0].mxu0
    %2729 = vdwg.mxu0
    %v2732 = vrot.slane %v2642, 3
    %v2733 = vrot.slane %v2644, 3
    %v2736 = vadd.f32 %v936, %v2732
    %v2737 = vadd.f32 %v938, %v2733
    %v2738 = vxor.u32 %v2736, 2147483648
    %v2739 = vxor.u32 %v2737, 2147483648
    %v2740 = vmul.f32 %v2738, 1.442695
    %v2741 = vpow.pop %v2740
    %v2742 = vmul.f32 %v2739, 1.442695
    %v2743 = vpow.pop %v2742
    %v2744 = vadd.f32 %v2741, 1.0
    %v2745 = vadd.f32 %v2743, 1.0
    %v2746 = vrcp.pop %v2744
    %v2747 = vmul.f32 1.0, %v2746
    %v2748 = vrcp.pop %v2745
    %v2749 = vmul.f32 1.0, %v2748
    %v2752 = vrot.slane %v2683, 3
    %v2753 = vrot.slane %v2685, 3
    %v2756 = vadd.f32 %v977, %v2752
    %v2757 = vadd.f32 %v979, %v2753
    %v2758 = vxor.u32 %v2756, 2147483648
    %v2759 = vxor.u32 %v2757, 2147483648
    %v2760 = vmul.f32 %v2758, 1.442695
    %v2761 = vpow.pop %v2760
    %v2762 = vmul.f32 %v2759, 1.442695
    %v2763 = vpow.pop %v2762
    %v2764 = vadd.f32 %v2761, 1.0
    %v2765 = vadd.f32 %v2763, 1.0
    %v2766 = vrcp.pop %v2764
    %v2767 = vmul.f32 1.0, %v2766
    %v2768 = vrcp.pop %v2765
    %v2769 = vmul.f32 1.0, %v2768
    %v2772 = vrot.slane %v2724, 3
    %v2773 = vrot.slane %v2726, 3
    %v2776 = vmul.f32 %v2747, %v2772
    %v2777 = vmul.f32 %v2749, %v2773
    %v2778 = vadd.f32 %v1018, %v2776
    %v2779 = vadd.f32 %v1020, %v2777
    %v2780 = vtanh.pop %v2778
    %v2781 = vtanh.pop %v2779
    %v2782 = vsub.f32 1.0, %v2767
    %v2783 = vsub.f32 1.0, %v2769
    %v2784 = vmul.f32 %v2782, %v2780
    %v2785 = vmul.f32 %v2783, %v2781
    %v2788 = vrot.slane %v2597, 7
    %v2789 = vrot.slane %v2598, 7
    %v2792 = vmul.f32 %v2767, %v2788
    %v2793 = vmul.f32 %v2769, %v2789
    %v2794 = vadd.f32 %v2784, %v2792
    %v2795 = vadd.f32 %v2785, %v2793
    %v2796 = vpack.c.bf16 %v2794, %v2794
    %v2797 = vpack.c.bf16 %v2795, %v2795
    %v2799 = vshrl.u32 %v2796, 16
    %v2801 = vrot.slane %v2799, 2
    %v2803 = vshrl.u32 %v2797, 16
    %v2805 = vrot.slane %v2803, 2
    %2808 = vmatprep.subr.bf16.mxu0 %v1424
    %2809 = vmatpush1.bf16.msra.mxu0 %v1423
    %2810 = vmatprep.subr.bf16.mxu0 %v1430
    %2811 = vmatpush1.bf16.msra.mxu0 %v1429
    %2812 = vmatprep.subr.bf16.mxu0 %v1436
    %2813 = vmatpush1.bf16.msra.mxu0 %v1435
    %2814 = vmatprep.subr.bf16.mxu0 %v1442
    %2815 = vmatpush1.bf16.msra.mxu0 %v1441
    %2816 = vmatprep.subr.bf16.mxu0 %v1448
    %2817 = vmatpush1.bf16.msra.mxu0 %v1447
    %2818 = vmatprep.subr.bf16.mxu0 %v1454
    %2819 = vmatpush1.bf16.msra.mxu0 %v1453
    %2820 = vmatprep.subr.bf16.mxu0 %v1460
    %2821 = vmatpush1.bf16.msra.mxu0 %v1459
    %2822 = vmatprep.subr.bf16.mxu0 %v1466
    %2823 = vmatpush1.bf16.msra.mxu0 %v1465
    %2824 = vmatprep.subr.bf16.mxu0 %v1472
    %2825 = vmatpush1.bf16.msra.mxu0 %v1471
    %2826 = vmatprep.subr.bf16.mxu0 %v1478
    %2827 = vmatpush1.bf16.msra.mxu0 %v1477
    %2828 = vmatprep.subr.bf16.mxu0 %v1484
    %2829 = vmatpush1.bf16.msra.mxu0 %v1483
    %2830 = vmatprep.subr.bf16.mxu0 %v1490
    %2831 = vmatpush1.bf16.msra.mxu0 %v1489
    %2832 = vmatprep.subr.bf16.mxu0 %v1496
    %2833 = vmatpush1.bf16.msra.mxu0 %v1495
    %2834 = vmatprep.subr.bf16.mxu0 %v1502
    %2835 = vmatpush1.bf16.msra.mxu0 %v1501
    %2836 = vmatprep.subr.bf16.mxu0 %v1508
    %2837 = vmatpush1.bf16.msra.mxu0 %v1507
    %2838 = vmatprep.subr.bf16.mxu0 %v1514
    %2839 = vmatpush1.bf16.msra.mxu0 %v1513
    %2840 = vmatprep.mubr.bf16.mxu0 %v2805
    %2841 = vmatmul.mubr.bf16.gmra.mrb[0].mxu0 %v2801
    %v2842 = vpop.f32.mrb[0].mxu0
    %v2843 = vadd.f32 %v1619, %v2842
    %v2844 = vpop.f32.mrb[0].mxu0
    %v2845 = vadd.f32 %v1623, %v2844
    %v2846 = vpop.f32.mrb[0].mxu0
    %v2847 = vpop.f32.mrb[0].mxu0
    %2848 = vdwg.mxu0
    %2849 = vmatprep.subr.bf16.mxu0 %v1426
    %2850 = vmatpush1.bf16.msra.mxu0 %v1425
    %2851 = vmatprep.subr.bf16.mxu0 %v1432
    %2852 = vmatpush1.bf16.msra.mxu0 %v1431
    %2853 = vmatprep.subr.bf16.mxu0 %v1438
    %2854 = vmatpush1.bf16.msra.mxu0 %v1437
    %2855 = vmatprep.subr.bf16.mxu0 %v1444
    %2856 = vmatpush1.bf16.msra.mxu0 %v1443
    %2857 = vmatprep.subr.bf16.mxu0 %v1450
    %2858 = vmatpush1.bf16.msra.mxu0 %v1449
    %2859 = vmatprep.subr.bf16.mxu0 %v1456
    %2860 = vmatpush1.bf16.msra.mxu0 %v1455
    %2861 = vmatprep.subr.bf16.mxu0 %v1462
    %2862 = vmatpush1.bf16.msra.mxu0 %v1461
    %2863 = vmatprep.subr.bf16.mxu0 %v1468
    %2864 = vmatpush1.bf16.msra.mxu0 %v1467
    %2865 = vmatprep.subr.bf16.mxu0 %v1474
    %2866 = vmatpush1.bf16.msra.mxu0 %v1473
    %2867 = vmatprep.subr.bf16.mxu0 %v1480
    %2868 = vmatpush1.bf16.msra.mxu0 %v1479
    %2869 = vmatprep.subr.bf16.mxu0 %v1486
    %2870 = vmatpush1.bf16.msra.mxu0 %v1485
    %2871 = vmatprep.subr.bf16.mxu0 %v1492
    %2872 = vmatpush1.bf16.msra.mxu0 %v1491
    %2873 = vmatprep.subr.bf16.mxu0 %v1498
    %2874 = vmatpush1.bf16.msra.mxu0 %v1497
    %2875 = vmatprep.subr.bf16.mxu0 %v1504
    %2876 = vmatpush1.bf16.msra.mxu0 %v1503
    %2877 = vmatprep.subr.bf16.mxu0 %v1510
    %2878 = vmatpush1.bf16.msra.mxu0 %v1509
    %2879 = vmatprep.subr.bf16.mxu0 %v1516
    %2880 = vmatpush1.bf16.msra.mxu0 %v1515
    %2881 = vmatprep.mubr.bf16.mxu0 %v2805
    %2882 = vmatmul.mubr.bf16.gmra.mrb[0].mxu0 %v2801
    %v2883 = vpop.f32.mrb[0].mxu0
    %v2884 = vadd.f32 %v1627, %v2883
    %v2885 = vpop.f32.mrb[0].mxu0
    %v2886 = vadd.f32 %v1631, %v2885
    %v2887 = vpop.f32.mrb[0].mxu0
    %v2888 = vpop.f32.mrb[0].mxu0
    %2889 = vdwg.mxu0
    %2890 = vmatprep.subr.bf16.mxu0 %v1428
    %2891 = vmatpush1.bf16.msra.mxu0 %v1427
    %2892 = vmatprep.subr.bf16.mxu0 %v1434
    %2893 = vmatpush1.bf16.msra.mxu0 %v1433
    %2894 = vmatprep.subr.bf16.mxu0 %v1440
    %2895 = vmatpush1.bf16.msra.mxu0 %v1439
    %2896 = vmatprep.subr.bf16.mxu0 %v1446
    %2897 = vmatpush1.bf16.msra.mxu0 %v1445
    %2898 = vmatprep.subr.bf16.mxu0 %v1452
    %2899 = vmatpush1.bf16.msra.mxu0 %v1451
    %2900 = vmatprep.subr.bf16.mxu0 %v1458
    %2901 = vmatpush1.bf16.msra.mxu0 %v1457
    %2902 = vmatprep.subr.bf16.mxu0 %v1464
    %2903 = vmatpush1.bf16.msra.mxu0 %v1463
    %2904 = vmatprep.subr.bf16.mxu0 %v1470
    %2905 = vmatpush1.bf16.msra.mxu0 %v1469
    %2906 = vmatprep.subr.bf16.mxu0 %v1476
    %2907 = vmatpush1.bf16.msra.mxu0 %v1475
    %2908 = vmatprep.subr.bf16.mxu0 %v1482
    %2909 = vmatpush1.bf16.msra.mxu0 %v1481
    %2910 = vmatprep.subr.bf16.mxu0 %v1488
    %2911 = vmatpush1.bf16.msra.mxu0 %v1487
    %2912 = vmatprep.subr.bf16.mxu0 %v1494
    %2913 = vmatpush1.bf16.msra.mxu0 %v1493
    %2914 = vmatprep.subr.bf16.mxu0 %v1500
    %2915 = vmatpush1.bf16.msra.mxu0 %v1499
    %2916 = vmatprep.subr.bf16.mxu0 %v1506
    %2917 = vmatpush1.bf16.msra.mxu0 %v1505
    %2918 = vmatprep.subr.bf16.mxu0 %v1512
    %2919 = vmatpush1.bf16.msra.mxu0 %v1511
    %2920 = vmatprep.subr.bf16.mxu0 %v1518
    %2921 = vmatpush1.bf16.msra.mxu0 %v1517
    %2922 = vmatprep.mubr.bf16.mxu0 %v2805
    %2923 = vmatmul.mubr.bf16.gmra.mrb[0].mxu0 %v2801
    %v2924 = vpop.f32.mrb[0].mxu0
    %v2925 = vadd.f32 %v1635, %v2924
    %v2926 = vpop.f32.mrb[0].mxu0
    %v2927 = vadd.f32 %v1639, %v2926
    %v2928 = vpop.f32.mrb[0].mxu0
    %v2929 = vpop.f32.mrb[0].mxu0
    %2930 = vdwg.mxu0
    %v2933 = vrot.slane %v2843, 2
    %v2934 = vrot.slane %v2845, 2
    %v2937 = vadd.f32 %v936, %v2933
    %v2938 = vadd.f32 %v938, %v2934
    %v2939 = vxor.u32 %v2937, 2147483648
    %v2940 = vxor.u32 %v2938, 2147483648
    %v2941 = vmul.f32 %v2939, 1.442695
    %v2942 = vpow.pop %v2941
    %v2943 = vmul.f32 %v2940, 1.442695
    %v2944 = vpow.pop %v2943
    %v2945 = vadd.f32 %v2942, 1.0
    %v2946 = vadd.f32 %v2944, 1.0
    %v2947 = vrcp.pop %v2945
    %v2948 = vmul.f32 1.0, %v2947
    %v2949 = vrcp.pop %v2946
    %v2950 = vmul.f32 1.0, %v2949
    %v2953 = vrot.slane %v2884, 2
    %v2954 = vrot.slane %v2886, 2
    %v2957 = vadd.f32 %v977, %v2953
    %v2958 = vadd.f32 %v979, %v2954
    %v2959 = vxor.u32 %v2957, 2147483648
    %v2960 = vxor.u32 %v2958, 2147483648
    %v2961 = vmul.f32 %v2959, 1.442695
    %v2962 = vpow.pop %v2961
    %v2963 = vmul.f32 %v2960, 1.442695
    %v2964 = vpow.pop %v2963
    %v2965 = vadd.f32 %v2962, 1.0
    %v2966 = vadd.f32 %v2964, 1.0
    %v2967 = vrcp.pop %v2965
    %v2968 = vmul.f32 1.0, %v2967
    %v2969 = vrcp.pop %v2966
    %v2970 = vmul.f32 1.0, %v2969
    %v2973 = vrot.slane %v2925, 2
    %v2974 = vrot.slane %v2927, 2
    %v2977 = vmul.f32 %v2948, %v2973
    %v2978 = vmul.f32 %v2950, %v2974
    %v2979 = vadd.f32 %v1018, %v2977
    %v2980 = vadd.f32 %v1020, %v2978
    %v2981 = vtanh.pop %v2979
    %v2982 = vtanh.pop %v2980
    %v2983 = vsub.f32 1.0, %v2968
    %v2984 = vsub.f32 1.0, %v2970
    %v2985 = vmul.f32 %v2983, %v2981
    %v2986 = vmul.f32 %v2984, %v2982
    %v2989 = vrot.slane %v2794, 7
    %v2990 = vrot.slane %v2795, 7
    %v2993 = vmul.f32 %v2968, %v2989
    %v2994 = vmul.f32 %v2970, %v2990
    %v2995 = vadd.f32 %v2985, %v2993
    %v2996 = vadd.f32 %v2986, %v2994
    %v2997 = vpack.c.bf16 %v2995, %v2995
    %v2998 = vpack.c.bf16 %v2996, %v2996
    %v3001 = vrot.slane %v2997, 3
    %v3002 = vrot.slane %v2998, 3
    %3005 = vmatprep.subr.bf16.mxu0 %v1424
    %3006 = vmatpush1.bf16.msra.mxu0 %v1423
    %3007 = vmatprep.subr.bf16.mxu0 %v1430
    %3008 = vmatpush1.bf16.msra.mxu0 %v1429
    %3009 = vmatprep.subr.bf16.mxu0 %v1436
    %3010 = vmatpush1.bf16.msra.mxu0 %v1435
    %3011 = vmatprep.subr.bf16.mxu0 %v1442
    %3012 = vmatpush1.bf16.msra.mxu0 %v1441
    %3013 = vmatprep.subr.bf16.mxu0 %v1448
    %3014 = vmatpush1.bf16.msra.mxu0 %v1447
    %3015 = vmatprep.subr.bf16.mxu0 %v1454
    %3016 = vmatpush1.bf16.msra.mxu0 %v1453
    %3017 = vmatprep.subr.bf16.mxu0 %v1460
    %3018 = vmatpush1.bf16.msra.mxu0 %v1459
    %3019 = vmatprep.subr.bf16.mxu0 %v1466
    %3020 = vmatpush1.bf16.msra.mxu0 %v1465
    %3021 = vmatprep.subr.bf16.mxu0 %v1472
    %3022 = vmatpush1.bf16.msra.mxu0 %v1471
    %3023 = vmatprep.subr.bf16.mxu0 %v1478
    %3024 = vmatpush1.bf16.msra.mxu0 %v1477
    %3025 = vmatprep.subr.bf16.mxu0 %v1484
    %3026 = vmatpush1.bf16.msra.mxu0 %v1483
    %3027 = vmatprep.subr.bf16.mxu0 %v1490
    %3028 = vmatpush1.bf16.msra.mxu0 %v1489
    %3029 = vmatprep.subr.bf16.mxu0 %v1496
    %3030 = vmatpush1.bf16.msra.mxu0 %v1495
    %3031 = vmatprep.subr.bf16.mxu0 %v1502
    %3032 = vmatpush1.bf16.msra.mxu0 %v1501
    %3033 = vmatprep.subr.bf16.mxu0 %v1508
    %3034 = vmatpush1.bf16.msra.mxu0 %v1507
    %3035 = vmatprep.subr.bf16.mxu0 %v1514
    %3036 = vmatpush1.bf16.msra.mxu0 %v1513
    %3037 = vmatprep.mubr.bf16.mxu0 %v3002
    %3038 = vmatmul.mubr.bf16.gmra.mrb[0].mxu0 %v3001
    %v3039 = vpop.f32.mrb[0].mxu0
    %v3040 = vadd.f32 %v1619, %v3039
    %v3041 = vpop.f32.mrb[0].mxu0
    %v3042 = vadd.f32 %v1623, %v3041
    %v3043 = vpop.f32.mrb[0].mxu0
    %v3044 = vpop.f32.mrb[0].mxu0
    %3045 = vdwg.mxu0
    %3046 = vmatprep.subr.bf16.mxu0 %v1426
    %3047 = vmatpush1.bf16.msra.mxu0 %v1425
    %3048 = vmatprep.subr.bf16.mxu0 %v1432
    %3049 = vmatpush1.bf16.msra.mxu0 %v1431
    %3050 = vmatprep.subr.bf16.mxu0 %v1438
    %3051 = vmatpush1.bf16.msra.mxu0 %v1437
    %3052 = vmatprep.subr.bf16.mxu0 %v1444
    %3053 = vmatpush1.bf16.msra.mxu0 %v1443
    %3054 = vmatprep.subr.bf16.mxu0 %v1450
    %3055 = vmatpush1.bf16.msra.mxu0 %v1449
    %3056 = vmatprep.subr.bf16.mxu0 %v1456
    %3057 = vmatpush1.bf16.msra.mxu0 %v1455
    %3058 = vmatprep.subr.bf16.mxu0 %v1462
    %3059 = vmatpush1.bf16.msra.mxu0 %v1461
    %3060 = vmatprep.subr.bf16.mxu0 %v1468
    %3061 = vmatpush1.bf16.msra.mxu0 %v1467
    %3062 = vmatprep.subr.bf16.mxu0 %v1474
    %3063 = vmatpush1.bf16.msra.mxu0 %v1473
    %3064 = vmatprep.subr.bf16.mxu0 %v1480
    %3065 = vmatpush1.bf16.msra.mxu0 %v1479
    %3066 = vmatprep.subr.bf16.mxu0 %v1486
    %3067 = vmatpush1.bf16.msra.mxu0 %v1485
    %3068 = vmatprep.subr.bf16.mxu0 %v1492
    %3069 = vmatpush1.bf16.msra.mxu0 %v1491
    %3070 = vmatprep.subr.bf16.mxu0 %v1498
    %3071 = vmatpush1.bf16.msra.mxu0 %v1497
    %3072 = vmatprep.subr.bf16.mxu0 %v1504
    %3073 = vmatpush1.bf16.msra.mxu0 %v1503
    %3074 = vmatprep.subr.bf16.mxu0 %v1510
    %3075 = vmatpush1.bf16.msra.mxu0 %v1509
    %3076 = vmatprep.subr.bf16.mxu0 %v1516
    %3077 = vmatpush1.bf16.msra.mxu0 %v1515
    %3078 = vmatprep.mubr.bf16.mxu0 %v3002
    %3079 = vmatmul.mubr.bf16.gmra.mrb[0].mxu0 %v3001
    %v3080 = vpop.f32.mrb[0].mxu0
    %v3081 = vadd.f32 %v1627, %v3080
    %v3082 = vpop.f32.mrb[0].mxu0
    %v3083 = vadd.f32 %v1631, %v3082
    %v3084 = vpop.f32.mrb[0].mxu0
    %v3085 = vpop.f32.mrb[0].mxu0
    %3086 = vdwg.mxu0
    %3087 = vmatprep.subr.bf16.mxu0 %v1428
    %3088 = vmatpush1.bf16.msra.mxu0 %v1427
    %3089 = vmatprep.subr.bf16.mxu0 %v1434
    %3090 = vmatpush1.bf16.msra.mxu0 %v1433
    %3091 = vmatprep.subr.bf16.mxu0 %v1440
    %3092 = vmatpush1.bf16.msra.mxu0 %v1439
    %3093 = vmatprep.subr.bf16.mxu0 %v1446
    %3094 = vmatpush1.bf16.msra.mxu0 %v1445
    %3095 = vmatprep.subr.bf16.mxu0 %v1452
    %3096 = vmatpush1.bf16.msra.mxu0 %v1451
    %3097 = vmatprep.subr.bf16.mxu0 %v1458
    %3098 = vmatpush1.bf16.msra.mxu0 %v1457
    %3099 = vmatprep.subr.bf16.mxu0 %v1464
    %3100 = vmatpush1.bf16.msra.mxu0 %v1463
    %3101 = vmatprep.subr.bf16.mxu0 %v1470
    %3102 = vmatpush1.bf16.msra.mxu0 %v1469
    %3103 = vmatprep.subr.bf16.mxu0 %v1476
    %3104 = vmatpush1.bf16.msra.mxu0 %v1475
    %3105 = vmatprep.subr.bf16.mxu0 %v1482
    %3106 = vmatpush1.bf16.msra.mxu0 %v1481
    %3107 = vmatprep.subr.bf16.mxu0 %v1488
    %3108 = vmatpush1.bf16.msra.mxu0 %v1487
    %3109 = vmatprep.subr.bf16.mxu0 %v1494
    %3110 = vmatpush1.bf16.msra.mxu0 %v1493
    %3111 = vmatprep.subr.bf16.mxu0 %v1500
    %3112 = vmatpush1.bf16.msra.mxu0 %v1499
    %3113 = vmatprep.subr.bf16.mxu0 %v1506
    %3114 = vmatpush1.bf16.msra.mxu0 %v1505
    %3115 = vmatprep.subr.bf16.mxu0 %v1512
    %3116 = vmatpush1.bf16.msra.mxu0 %v1511
    %3117 = vmatprep.subr.bf16.mxu0 %v1518
    %3118 = vmatpush1.bf16.msra.mxu0 %v1517
    %3119 = vmatprep.mubr.bf16.mxu0 %v3002
    %3120 = vmatmul.mubr.bf16.gmra.mrb[0].mxu0 %v3001
    %v3121 = vpop.f32.mrb[0].mxu0
    %v3122 = vadd.f32 %v1635, %v3121
    %v3123 = vpop.f32.mrb[0].mxu0
    %v3124 = vadd.f32 %v1639, %v3123
    %v3125 = vpop.f32.mrb[0].mxu0
    %v3126 = vpop.f32.mrb[0].mxu0
    %3127 = vdwg.mxu0
    %v3130 = vrot.slane %v3040, 1
    %v3131 = vrot.slane %v3042, 1
    %v3134 = vadd.f32 %v936, %v3130
    %v3135 = vadd.f32 %v938, %v3131
    %v3136 = vxor.u32 %v3134, 2147483648
    %v3137 = vxor.u32 %v3135, 2147483648
    %v3138 = vmul.f32 %v3136, 1.442695
    %v3139 = vpow.pop %v3138
    %v3140 = vmul.f32 %v3137, 1.442695
    %v3141 = vpow.pop %v3140
    %v3142 = vadd.f32 %v3139, 1.0
    %v3143 = vadd.f32 %v3141, 1.0
    %v3144 = vrcp.pop %v3142
    %v3145 = vmul.f32 1.0, %v3144
    %v3146 = vrcp.pop %v3143
    %v3147 = vmul.f32 1.0, %v3146
    %v3150 = vrot.slane %v3081, 1
    %v3151 = vrot.slane %v3083, 1
    %v3154 = vadd.f32 %v977, %v3150
    %v3155 = vadd.f32 %v979, %v3151
    %v3156 = vxor.u32 %v3154, 2147483648
    %v3157 = vxor.u32 %v3155, 2147483648
    %v3158 = vmul.f32 %v3156, 1.442695
    %v3159 = vpow.pop %v3158
    %v3160 = vmul.f32 %v3157, 1.442695
    %v3161 = vpow.pop %v3160
    %v3162 = vadd.f32 %v3159, 1.0
    %v3163 = vadd.f32 %v3161, 1.0
    %v3164 = vrcp.pop %v3162
    %v3165 = vmul.f32 1.0, %v3164
    %v3166 = vrcp.pop %v3163
    %v3167 = vmul.f32 1.0, %v3166
    %v3170 = vrot.slane %v3122, 1
    %v3171 = vrot.slane %v3124, 1
    %v3174 = vmul.f32 %v3145, %v3170
    %v3175 = vmul.f32 %v3147, %v3171
    %v3176 = vadd.f32 %v1018, %v3174
    %v3177 = vadd.f32 %v1020, %v3175
    %v3178 = vtanh.pop %v3176
    %v3179 = vtanh.pop %v3177
    %v3180 = vsub.f32 1.0, %v3165
    %v3181 = vsub.f32 1.0, %v3167
    %v3182 = vmul.f32 %v3180, %v3178
    %v3183 = vmul.f32 %v3181, %v3179
    %v3186 = vrot.slane %v2995, 7
    %v3187 = vrot.slane %v2996, 7
    %v3190 = vmul.f32 %v3165, %v3186
    %v3191 = vmul.f32 %v3167, %v3187
    %v3192 = vadd.f32 %v3182, %v3190
    %v3193 = vadd.f32 %v3183, %v3191
    %v3194 = vsel %vm270, %v1809, %v2000
    %v3195 = vsel %vm270, %v1810, %v2001
    %v3196 = vsel %vm273, %v3194, %v2199
    %v3197 = vsel %vm273, %v3195, %v2200
    %v3198 = vsel %vm276, %v3196, %v2396
    %v3199 = vsel %vm276, %v3197, %v2397
    %v3200 = vsel %vm279, %v3198, %v2597
    %v3201 = vsel %vm279, %v3199, %v2598
    %v3202 = vsel %vm282, %v3200, %v2794
    %v3203 = vsel %vm282, %v3201, %v2795
    %v3204 = vsel %vm285, %v3202, %v2995
    %v3205 = vsel %vm285, %v3203, %v2996
    %v3206 = vsel %vm288, %v3204, %v3192
    %v3207 = vsel %vm288, %v3205, %v3193
    %3208 = vst [vmem:[#allocation10] sm:$0xff] %v3206
    %3209 = vst [vmem:[#allocation10 + $0x8] sm:$0xff] %v3207
    // Predicated region
    $region38: #{tpu_custom_call.1} parent=1 // pred_check
      _
    $region39: #{tpu_custom_call.1} parent=1 // pred_check_branch
      %3211 = sbr.rel (0) target = $region41
    $region40: #{tpu_custom_call.1} parent=1 // pred_region
      %s3213 = ssub.s32 256, 256
      %3214 = vsyncadd [#allocation6], %s3213
      %s3216 = sshll.u32 [#allocation10], 4
      %s3217 = int_to_ptr.vmem [resolvable:$true] %s3216
      %3219 = dma.vmem_to_hbm [thread:$0]  %s3217, 256, %s7, [#allocation6]
    $region41: #{tpu_custom_call.1} parent=1 // pred_fallthru
      _
    // Predicated region
    $region42: #{tpu_custom_call.1} parent=1 // pred_check
      _
    $region43: #{tpu_custom_call.1} parent=1 // pred_check_branch
      %3221 = sbr.rel (0) target = $region45
    $region44: #{tpu_custom_call.1} parent=1 // pred_region
      %3222 = dma.done [#allocation6], 256
    $region45: #{tpu_custom_call.1} parent=1 // pred_fallthru
      _
    %3223 = vsyncpa [#allocation5], 1
    %3224 = vsyncpa [#allocation8], 1
    %3225 = vsyncpa [#allocation6], 1

</llo_original>
